<compile_context>
chip_gen: v7x
topology: tpu7x:2x2x1
jax: 0.10.0
libtpu: 0.0.40
codegen_flags: <defaults>
</compile_context>

<pallas_src>
import math

import jax
import jax.numpy as jnp
import numpy as np
from jax.experimental import pallas as pl
from jax.experimental.pallas import tpu as pltpu


def make_block_kernel(d_model: int, n_head: int, block_batch: int, seq_len: int,
                      compute_dtype, mlp_chunk: int, eps: float = 1e-5):
    assert d_model % n_head == 0
    head_dim = d_model // n_head
    D = d_model
    BT = block_batch
    L = seq_len
    T = BT * L
    d_ff = 4 * D
    assert d_ff % mlp_chunk == 0
    n_mlp_chunks = d_ff // mlp_chunk

    def kernel(x_ref,
               ln1_g_ref, ln1_b_ref,
               w_qkv_ref, b_qkv_ref,
               w_out_ref, b_out_ref,
               ln2_g_ref, ln2_b_ref,
               w_fc_ref, b_fc_ref,
               w_proj_ref, b_proj_ref,
               o_ref,
               attn_acc_ref):
        # MXU compute dtype == weight storage dtype (bf16 in production).
        cdt = compute_dtype

        x = x_ref[...].astype(jnp.float32)               # (BT, L, D) f32

        def layernorm(v, g_ref, b_ref):
            g = g_ref[0].astype(jnp.float32)
            b = b_ref[0].astype(jnp.float32)
            mu = jnp.mean(v, axis=-1, keepdims=True)
            var = jnp.mean((v - mu) ** 2, axis=-1, keepdims=True)
            return (v - mu) * jax.lax.rsqrt(var + eps) * g + b

        # ---------------- attention branch --------------------------------
        h = layernorm(x, ln1_g_ref, ln1_b_ref)            # (BT, L, D) f32
        h2d = h.reshape(T, D).astype(cdt)
        qkv = jnp.dot(h2d, w_qkv_ref[...],
                      preferred_element_type=jnp.float32)
        qkv = qkv + b_qkv_ref[0].astype(jnp.float32)      # (T, 3D) f32

        # 1/sqrt(head_dim) is already folded into w_qkv/b_qkv (prepare_params).
        q = qkv[:, 0 * D:1 * D].reshape(BT, L, D).astype(cdt)
        k = qkv[:, 1 * D:2 * D].reshape(BT, L, D).astype(cdt)
        v = qkv[:, 2 * D:3 * D].reshape(BT, L, D).astype(cdt)

        # Per-head batched contractions.  Normalization happens after the PV
        # matmul (Dh lanes instead of L lanes); each head's output is cast to
        # the compute dtype before the scratch store (halves store traffic).
        for hh in range(n_head):
            lo = hh * head_dim
            hi = lo + head_dim
            qh = q[:, :, lo:hi]                           # (BT, L, Dh)
            kh = k[:, :, lo:hi]
            vh = v[:, :, lo:hi]
            s = jnp.einsum("bqd,bkd->bqk", qh, kh,
                           preferred_element_type=jnp.float32)   # (BT, L, L)
            s = s - jnp.max(s, axis=-1, keepdims=True)
            p = jnp.exp(s)                                 # unnormalized probs
            denom = jnp.sum(p, axis=-1, keepdims=True)     # (BT, L, 1)
            o = jnp.einsum("bqk,bkd->bqd", p.astype(cdt), vh,
                           preferred_element_type=jnp.float32)   # (BT, L, Dh)
            o = o * pl.reciprocal(denom, approx=True)      # post-PV normalize
            attn_acc_ref[:, :, lo:hi] = o.astype(attn_acc_ref.dtype)

        attn = jnp.dot(attn_acc_ref[...].reshape(T, D), w_out_ref[...],
                       preferred_element_type=jnp.float32)
        attn = attn + b_out_ref[0].astype(jnp.float32)
        x2d = x.reshape(T, D) + attn                       # residual (f32)

        # ---------------- MLP branch (tiled over the 4D axis) -------------
        h2 = layernorm(x2d, ln2_g_ref, ln2_b_ref).astype(cdt)
        b_fc = b_fc_ref[0].astype(jnp.float32)
        proj = jnp.zeros((T, D), jnp.float32)
        for c in range(n_mlp_chunks):
            clo = c * mlp_chunk
            chi = clo + mlp_chunk
            fc = jnp.dot(h2, w_fc_ref[:, clo:chi],
                         preferred_element_type=jnp.float32)
            fc = fc + b_fc[clo:chi]
            fc = fc * jax.nn.sigmoid(1.702 * fc)           # QuickGELU (f32)
            proj = proj + jnp.dot(fc.astype(cdt), w_proj_ref[clo:chi, :],
                                  preferred_element_type=jnp.float32)
        proj = proj + b_proj_ref[0].astype(jnp.float32)
        x2d = x2d + proj

        o_ref[...] = x2d.reshape(BT, L, D).astype(o_ref.dtype)

    return kernel


def _pick_vmem_limit() -> int:
    """3/4 of physical VMEM, capped at 100 MiB (v7x ~48 MiB; v5e/v6e ~96 MiB)."""
    try:
        phys = int(pltpu.get_tpu_info().vmem_capacity_bytes)
    except Exception:
        phys = 128 * 1024 * 1024
    return int(min(phys * 3 // 4, 100 * 1024 * 1024))


def _pick_block_batch(n_batch: int, seq_len: int, block_batch, target_rows: int) -> int:
    """Largest divisor of the batch giving ~target_rows rows per step, while
    keeping >=2 grid steps when possible (so v7x's two TCs both get work)."""
    if block_batch is None:
        block_batch = max(1, target_rows // max(seq_len, 1))
    bt = max(1, min(block_batch, n_batch))
    while n_batch % bt:
        bt -= 1
    if n_batch // bt < 2 and n_batch >= 2:
        bt = n_batch // 2
        while n_batch % bt:
            bt -= 1
    return bt


def _pick_mlp_chunk(d_ff: int, cap: int = 2048) -> int:
    """Largest 128-aligned divisor of d_ff that is <= cap (bounds the live fc)."""
    if d_ff <= cap:
        return d_ff
    c = (cap // 128) * 128
    while c >= 128:
        if d_ff % c == 0:
            return c
        c -= 128
    return d_ff


def prepare_params(params, n_head: int):
    """One-time parameter preparation (call once, NOT per forward step):
    folds the 1/sqrt(head_dim) attention scale into the q columns of the
    fused QKV projection weight and bias."""
    D = params["w_qkv"].shape[0]
    scale = 1.0 / math.sqrt(D // n_head)
    out = dict(params)
    out["w_qkv"] = params["w_qkv"].at[:, :D].multiply(scale)
    out["b_qkv"] = params["b_qkv"].at[:, :D].multiply(scale)
    return out


def residual_attention_block_nld(x_nld, params, n_head: int, *,
                                 block_batch=None, target_rows: int = 512):
    """x_nld: (batch, seq, d_model).  `params` must come from prepare_params.
    Preferred production entry point: no activation transposes."""
    N, L, D = x_nld.shape
    bt = _pick_block_batch(N, L, block_batch, target_rows)
    cdt = params["w_qkv"].dtype
    mlp_chunk = _pick_mlp_chunk(params["w_fc"].shape[1])

    kernel = make_block_kernel(D, n_head, bt, L, cdt, mlp_chunk)

    # Weights / biases / LN params: whole-array VMEM residency, single copy
    # (their block never changes across the grid, so no double-buffering).
    def resident():
        return pl.BlockSpec(memory_space=pltpu.MemorySpace.VMEM)

    return pl.pallas_call(
        kernel,
        out_shape=jax.ShapeDtypeStruct((N, L, D), x_nld.dtype),
        grid=(N // bt,),
        in_specs=[
            pl.BlockSpec((bt, L, D), lambda b: (b, 0, 0)),   # x (pipelined)
            resident(), resident(),                          # ln1 gamma / beta
            resident(), resident(),                          # qkv W / b
            resident(), resident(),                          # out-proj W / b
            resident(), resident(),                          # ln2 gamma / beta
            resident(), resident(),                          # c_fc W / b
            resident(), resident(),                          # c_proj W / b
        ],
        out_specs=pl.BlockSpec((bt, L, D), lambda b: (b, 0, 0)),
        scratch_shapes=[pltpu.VMEM((bt, L, D), cdt)],        # attn out (cdt)
        compiler_params=pltpu.CompilerParams(
            # Batch axis is parallel -> v7x's two TensorCores split it.
            dimension_semantics=("parallel",),
            vmem_limit_bytes=_pick_vmem_limit(),
        ),
    )(x_nld,
      params["ln1_g"], params["ln1_b"],
      params["w_qkv"], params["b_qkv"],
      params["w_out"], params["b_out"],
      params["ln2_g"], params["ln2_b"],
      params["w_fc"], params["b_fc"],
      params["w_proj"], params["b_proj"])


def residual_attention_block(x_lnd, params, n_head: int, **kw):
    """(seq, batch, d_model) adapter matching the PyTorch nn.MultiheadAttention
    layout.  For a full transformer stack, keep activations (batch, seq, d)
    and call residual_attention_block_nld directly — that removes the two
    HBM transpose round trips this adapter pays per block."""
    out = residual_attention_block_nld(jnp.transpose(x_lnd, (1, 0, 2)),
                                       params, n_head, **kw)
    return jnp.transpose(out, (1, 0, 2))


def init_params(key, d_model: int):
    """Deterministic synthetic parameters matching the PyTorch module shapes.

    Weight matrices are stored transposed (input-dim first) so the kernel's
    matmuls are plain row-major (T, D) @ (D, N).  For production, pass these
    as bfloat16 (the kernel runs the MXU in the weight dtype) and keep
    d_model a multiple of 128 for lane-dense stores."""
    ks = jax.random.split(key, 6)
    std = 0.02
    return {
        "ln1_g": jnp.ones((1, d_model), jnp.float32),
        "ln1_b": jnp.zeros((1, d_model), jnp.float32),
        "ln2_g": jnp.ones((1, d_model), jnp.float32),
        "ln2_b": jnp.zeros((1, d_model), jnp.float32),
        # in_proj_weight is (3D, D) in torch; stored transposed (D, 3D).
        "w_qkv": std * jax.random.normal(ks[0], (d_model, 3 * d_model), jnp.float32),
        "b_qkv": std * jax.random.normal(ks[1], (1, 3 * d_model), jnp.float32),
        "w_out": std * jax.random.normal(ks[2], (d_model, d_model), jnp.float32),
        "b_out": jnp.zeros((1, d_model), jnp.float32),
        "w_fc": std * jax.random.normal(ks[3], (d_model, 4 * d_model), jnp.float32),
        "b_fc": std * jax.random.normal(ks[4], (1, 4 * d_model), jnp.float32),
        "w_proj": std * jax.random.normal(ks[5], (4 * d_model, d_model), jnp.float32),
        "b_proj": jnp.zeros((1, d_model), jnp.float32),
    }


def reference_block(x_lnd, params, n_head: int):
    """Pure-JAX f32 reference mirroring the PyTorch forward (raw params)."""
    L, N, D = x_lnd.shape
    Dh = D // n_head

    def ln(v, g, b):
        v = v.astype(jnp.float32)
        mu = v.mean(-1, keepdims=True)
        var = ((v - mu) ** 2).mean(-1, keepdims=True)
        return (v - mu) / jnp.sqrt(var + 1e-5) * g[0].astype(jnp.float32) \
            + b[0].astype(jnp.float32)

    p32 = {k: v.astype(jnp.float32) for k, v in params.items()}
    x = x_lnd.astype(jnp.float32)
    h = ln(x, p32["ln1_g"], p32["ln1_b"])
    qkv = h @ p32["w_qkv"] + p32["b_qkv"][0]             # (L, N, 3D)
    q, k, v = jnp.split(qkv, 3, axis=-1)
    q = q * (1.0 / math.sqrt(Dh))

    def heads(t):  # (L, N, D) -> (N, H, L, Dh)
        return t.reshape(L, N, n_head, Dh).transpose(1, 2, 0, 3)

    qh, kh, vh = heads(q), heads(k), heads(v)
    s = jnp.einsum("nhqd,nhkd->nhqk", qh, kh)
    p = jax.nn.softmax(s, axis=-1)
    o = jnp.einsum("nhqk,nhkd->nhqd", p, vh)
    o = o.transpose(2, 0, 1, 3).reshape(L, N, D)
    attn = o @ p32["w_out"] + p32["b_out"][0]
    x = x + attn

    h2 = ln(x, p32["ln2_g"], p32["ln2_b"])
    fc = h2 @ p32["w_fc"] + p32["b_fc"][0]
    fc = fc * jax.nn.sigmoid(1.702 * fc)
    x = x + fc @ p32["w_proj"] + p32["b_proj"][0]
    return x.astype(x_lnd.dtype)


if __name__ == "__main__":
    # Small but lane-dense shapes: D is a multiple of 128 so stores are
    # unmasked full-lane vst.
    SEQ, BATCH, D_MODEL, N_HEAD = 8, 4, 128, 4

    key = jax.random.PRNGKey(0)
    k_x, k_p = jax.random.split(key)
    x = jax.random.normal(k_x, (SEQ, BATCH, D_MODEL), jnp.float32)
    params = init_params(k_p, D_MODEL)

    ref = reference_block(x, params, N_HEAD)

    # One-time parameter prep (folds the attention scale into w_qkv/b_qkv).
    prepped = prepare_params(params, N_HEAD)

    # f32-weight path (tolerance absorbs approx-reciprocal softmax).
    out = jax.block_until_ready(residual_attention_block(x, prepped, N_HEAD))
    np.testing.assert_allclose(np.asarray(out), np.asarray(ref),
                               rtol=5e-3, atol=5e-3)

    # bf16-weight path (production config: native bf16 MXU, half the DMA).
    prepped_bf16 = jax.tree_util.tree_map(
        lambda a: a.astype(jnp.bfloat16), prepped)
    out_bf16 = jax.block_until_ready(
        residual_attention_block(x, prepped_bf16, N_HEAD))
    np.testing.assert_allclose(np.asarray(out_bf16), np.asarray(ref),
                               rtol=5e-2, atol=5e-2)

    print("KERNEL_OK")
</pallas_src>

<mosaic_0001>
module attributes {stable_mosaic.version = 11 : i64} {
  func.func @kernel(%arg0: i32, %arg1: memref<2x8x128xf32, #tpu.memory_space<vmem>>, %arg2: memref<1x128xf32, #tpu.memory_space<vmem>>, %arg3: memref<1x128xf32, #tpu.memory_space<vmem>>, %arg4: memref<128x384xf32, #tpu.memory_space<vmem>>, %arg5: memref<1x384xf32, #tpu.memory_space<vmem>>, %arg6: memref<128x128xf32, #tpu.memory_space<vmem>>, %arg7: memref<1x128xf32, #tpu.memory_space<vmem>>, %arg8: memref<1x128xf32, #tpu.memory_space<vmem>>, %arg9: memref<1x128xf32, #tpu.memory_space<vmem>>, %arg10: memref<128x512xf32, #tpu.memory_space<vmem>>, %arg11: memref<1x512xf32, #tpu.memory_space<vmem>>, %arg12: memref<512x128xf32, #tpu.memory_space<vmem>>, %arg13: memref<1x128xf32, #tpu.memory_space<vmem>>, %arg14: memref<2x8x128xf32, #tpu.memory_space<vmem>>, %arg15: memref<2x8x128xf32, #tpu.memory_space<vmem>>) attributes {dimension_semantics = [#tpu.dimension_semantics<parallel>], iteration_bounds = array<i64: 2>, scalar_prefetch = 0 : i64, scratch_operands = 1 : i64, tpu.core_type = #tpu.core_type<tc>, window_params = [{transform_indices = @transform_0, window_bounds = array<i64: 2, 8, 128>}, {pipeline_mode = #tpu.pipeline_mode<synchronous>, transform_indices = @transform_1, window_bounds = array<i64: 1, 128>}, {pipeline_mode = #tpu.pipeline_mode<synchronous>, transform_indices = @transform_2, window_bounds = array<i64: 1, 128>}, {pipeline_mode = #tpu.pipeline_mode<synchronous>, transform_indices = @transform_3, window_bounds = array<i64: 128, 384>}, {pipeline_mode = #tpu.pipeline_mode<synchronous>, transform_indices = @transform_4, window_bounds = array<i64: 1, 384>}, {pipeline_mode = #tpu.pipeline_mode<synchronous>, transform_indices = @transform_5, window_bounds = array<i64: 128, 128>}, {pipeline_mode = #tpu.pipeline_mode<synchronous>, transform_indices = @transform_6, window_bounds = array<i64: 1, 128>}, {pipeline_mode = #tpu.pipeline_mode<synchronous>, transform_indices = @transform_7, window_bounds = array<i64: 1, 128>}, {pipeline_mode = #tpu.pipeline_mode<synchronous>, transform_indices = @transform_8, window_bounds = array<i64: 1, 128>}, {pipeline_mode = #tpu.pipeline_mode<synchronous>, transform_indices = @transform_9, window_bounds = array<i64: 128, 512>}, {pipeline_mode = #tpu.pipeline_mode<synchronous>, transform_indices = @transform_10, window_bounds = array<i64: 1, 512>}, {pipeline_mode = #tpu.pipeline_mode<synchronous>, transform_indices = @transform_11, window_bounds = array<i64: 512, 128>}, {pipeline_mode = #tpu.pipeline_mode<synchronous>, transform_indices = @transform_12, window_bounds = array<i64: 1, 128>}, {transform_indices = @transform_13, window_bounds = array<i64: 2, 8, 128>}]} {
    %c0 = arith.constant 0 : index
    %c0_0 = arith.constant 0 : index
    %c0_1 = arith.constant 0 : index
    %0 = vector.load %arg1[%c0, %c0_0, %c0_1] : memref<2x8x128xf32, #tpu.memory_space<vmem>>, vector<2x8x128xf32>
    %c0_2 = arith.constant 0 : index
    %c0_3 = arith.constant 0 : index
    %1 = vector.load %arg2[%c0_2, %c0_3] : memref<1x128xf32, #tpu.memory_space<vmem>>, vector<1x128xf32>
    %2 = vector.shape_cast %1 : vector<1x128xf32> to vector<128xf32>
    %c0_4 = arith.constant 0 : index
    %c0_5 = arith.constant 0 : index
    %3 = vector.load %arg3[%c0_4, %c0_5] : memref<1x128xf32, #tpu.memory_space<vmem>>, vector<1x128xf32>
    %4 = vector.shape_cast %3 : vector<1x128xf32> to vector<128xf32>
    %cst = arith.constant dense<0.000000e+00> : vector<2x8xf32>
    %5 = vector.multi_reduction <add>, %0, %cst [2] : vector<2x8x128xf32> to vector<2x8xf32>
    %6 = vector.shape_cast %5 : vector<2x8xf32> to vector<2x8x1xf32>
    %cst_6 = arith.constant 1.280000e+02 : f32
    %7 = vector.broadcast %cst_6 : f32 to vector<2x8x1xf32>
    %8 = arith.divf %6, %7 : vector<2x8x1xf32>
    %9 = vector.broadcast %8 : vector<2x8x1xf32> to vector<2x8x128xf32>
    %10 = arith.subf %0, %9 : vector<2x8x128xf32>
    %11 = arith.mulf %10, %10 : vector<2x8x128xf32>
    %cst_7 = arith.constant dense<0.000000e+00> : vector<2x8xf32>
    %12 = vector.multi_reduction <add>, %11, %cst_7 [2] : vector<2x8x128xf32> to vector<2x8xf32>
    %13 = vector.shape_cast %12 : vector<2x8xf32> to vector<2x8x1xf32>
    %cst_8 = arith.constant 1.280000e+02 : f32
    %14 = vector.broadcast %cst_8 : f32 to vector<2x8x1xf32>
    %15 = arith.divf %13, %14 : vector<2x8x1xf32>
    %16 = vector.broadcast %8 : vector<2x8x1xf32> to vector<2x8x128xf32>
    %17 = arith.subf %0, %16 : vector<2x8x128xf32>
    %cst_9 = arith.constant 9.99999974E-6 : f32
    %18 = vector.broadcast %cst_9 : f32 to vector<2x8x1xf32>
    %19 = arith.addf %15, %18 : vector<2x8x1xf32>
    %20 = math.rsqrt %19 : vector<2x8x1xf32>
    %21 = vector.broadcast %20 : vector<2x8x1xf32> to vector<2x8x128xf32>
    %22 = arith.mulf %17, %21 : vector<2x8x128xf32>
    %23 = vector.shape_cast %2 : vector<128xf32> to vector<1x1x128xf32>
    %24 = vector.broadcast %23 : vector<1x1x128xf32> to vector<2x8x128xf32>
    %25 = arith.mulf %22, %24 : vector<2x8x128xf32>
    %26 = vector.shape_cast %4 : vector<128xf32> to vector<1x1x128xf32>
    %27 = vector.broadcast %26 : vector<1x1x128xf32> to vector<2x8x128xf32>
    %28 = arith.addf %25, %27 : vector<2x8x128xf32>
    %29 = vector.shape_cast %28 : vector<2x8x128xf32> to vector<16x128xf32>
    %c0_10 = arith.constant 0 : index
    %c0_11 = arith.constant 0 : index
    %30 = vector.load %arg4[%c0_10, %c0_11] : memref<128x384xf32, #tpu.memory_space<vmem>>, vector<128x384xf32>
    %cst_12 = arith.constant dense<0.000000e+00> : vector<16x384xf32>
    %31 = tpu.matmul %29, %30, %cst_12 {dimension_numbers = #tpu.dot_dimension_numbers<[1], [0], [0], [1], [0, 0, 1, 1], [], []>} : vector<16x128xf32>, vector<128x384xf32>, vector<16x384xf32> -> vector<16x384xf32>
    %c0_13 = arith.constant 0 : index
    %c0_14 = arith.constant 0 : index
    %32 = vector.load %arg5[%c0_13, %c0_14] : memref<1x384xf32, #tpu.memory_space<vmem>>, vector<1x384xf32>
    %33 = vector.shape_cast %32 : vector<1x384xf32> to vector<384xf32>
    %34 = vector.shape_cast %33 : vector<384xf32> to vector<1x384xf32>
    %35 = vector.broadcast %34 : vector<1x384xf32> to vector<16x384xf32>
    %36 = arith.addf %31, %35 : vector<16x384xf32>
    %37 = vector.extract_strided_slice %36 {offsets = [0, 0], sizes = [16, 128], strides = [1, 1]} : vector<16x384xf32> to vector<16x128xf32>
    %38 = vector.shape_cast %37 : vector<16x128xf32> to vector<2x8x128xf32>
    %39 = vector.extract_strided_slice %36 {offsets = [0, 128], sizes = [16, 128], strides = [1, 1]} : vector<16x384xf32> to vector<16x128xf32>
    %40 = vector.shape_cast %39 : vector<16x128xf32> to vector<2x8x128xf32>
    %41 = vector.extract_strided_slice %36 {offsets = [0, 256], sizes = [16, 128], strides = [1, 1]} : vector<16x384xf32> to vector<16x128xf32>
    %42 = vector.shape_cast %41 : vector<16x128xf32> to vector<2x8x128xf32>
    %43 = vector.extract_strided_slice %38 {offsets = [0, 0, 0], sizes = [2, 8, 32], strides = [1, 1, 1]} : vector<2x8x128xf32> to vector<2x8x32xf32>
    %44 = vector.extract_strided_slice %40 {offsets = [0, 0, 0], sizes = [2, 8, 32], strides = [1, 1, 1]} : vector<2x8x128xf32> to vector<2x8x32xf32>
    %45 = vector.extract_strided_slice %42 {offsets = [0, 0, 0], sizes = [2, 8, 32], strides = [1, 1, 1]} : vector<2x8x128xf32> to vector<2x8x32xf32>
    "tpu.trace_start"() <{level = 10 : i32, message = "bqd,bkd->bqk"}> : () -> ()
    %cst_15 = arith.constant dense<0.000000e+00> : vector<2x8x8xf32>
    %46 = tpu.matmul %43, %44, %cst_15 {dimension_numbers = #tpu.dot_dimension_numbers<[2], [2], [1], [1], [0, 0, 0, 1, 1, 1], [0], [0]>} : vector<2x8x32xf32>, vector<2x8x32xf32>, vector<2x8x8xf32> -> vector<2x8x8xf32>
    "tpu.trace_stop"() : () -> ()
    %cst_16 = arith.constant dense<0xFF800000> : vector<2x8xf32>
    %47 = vector.multi_reduction <maximumf>, %46, %cst_16 [2] : vector<2x8x8xf32> to vector<2x8xf32>
    %48 = vector.shape_cast %47 : vector<2x8xf32> to vector<2x8x1xf32>
    %49 = vector.broadcast %48 : vector<2x8x1xf32> to vector<2x8x8xf32>
    %50 = arith.subf %46, %49 : vector<2x8x8xf32>
    %51 = math.exp %50 : vector<2x8x8xf32>
    %cst_17 = arith.constant dense<0.000000e+00> : vector<2x8xf32>
    %52 = vector.multi_reduction <add>, %51, %cst_17 [2] : vector<2x8x8xf32> to vector<2x8xf32>
    %53 = vector.shape_cast %52 : vector<2x8xf32> to vector<2x8x1xf32>
    "tpu.trace_start"() <{level = 10 : i32, message = "bqk,bkd->bqd"}> : () -> ()
    %cst_18 = arith.constant dense<0.000000e+00> : vector<2x8x32xf32>
    %54 = tpu.matmul %51, %45, %cst_18 {dimension_numbers = #tpu.dot_dimension_numbers<[2], [1], [1], [2], [0, 0, 0, 1, 1, 2], [0], [0]>} : vector<2x8x8xf32>, vector<2x8x32xf32>, vector<2x8x32xf32> -> vector<2x8x32xf32>
    "tpu.trace_stop"() : () -> ()
    %55 = tpu.reciprocal %53 {approx = true} : vector<2x8x1xf32> -> vector<2x8x1xf32>
    %56 = vector.broadcast %55 : vector<2x8x1xf32> to vector<2x8x32xf32>
    %57 = arith.mulf %54, %56 : vector<2x8x32xf32>
    %c0_19 = arith.constant 0 : index
    %c0_20 = arith.constant 0 : index
    %c0_21 = arith.constant 0 : index
    %58 = vector.load %arg15[%c0_19, %c0_20, %c0_21] : memref<2x8x128xf32, #tpu.memory_space<vmem>>, vector<2x8x32xf32>
    tpu.vector_store %arg15[%c0_19, %c0_20, %c0_21], %57 {strides = array<i32>} : memref<2x8x128xf32, #tpu.memory_space<vmem>>, vector<2x8x32xf32>,
    %59 = vector.extract_strided_slice %38 {offsets = [0, 0, 32], sizes = [2, 8, 32], strides = [1, 1, 1]} : vector<2x8x128xf32> to vector<2x8x32xf32>
    %60 = vector.extract_strided_slice %40 {offsets = [0, 0, 32], sizes = [2, 8, 32], strides = [1, 1, 1]} : vector<2x8x128xf32> to vector<2x8x32xf32>
    %61 = vector.extract_strided_slice %42 {offsets = [0, 0, 32], sizes = [2, 8, 32], strides = [1, 1, 1]} : vector<2x8x128xf32> to vector<2x8x32xf32>
    "tpu.trace_start"() <{level = 10 : i32, message = "bqd,bkd->bqk"}> : () -> ()
    %cst_22 = arith.constant dense<0.000000e+00> : vector<2x8x8xf32>
    %62 = tpu.matmul %59, %60, %cst_22 {dimension_numbers = #tpu.dot_dimension_numbers<[2], [2], [1], [1], [0, 0, 0, 1, 1, 1], [0], [0]>} : vector<2x8x32xf32>, vector<2x8x32xf32>, vector<2x8x8xf32> -> vector<2x8x8xf32>
    "tpu.trace_stop"() : () -> ()
    %cst_23 = arith.constant dense<0xFF800000> : vector<2x8xf32>
    %63 = vector.multi_reduction <maximumf>, %62, %cst_23 [2] : vector<2x8x8xf32> to vector<2x8xf32>
    %64 = vector.shape_cast %63 : vector<2x8xf32> to vector<2x8x1xf32>
    %65 = vector.broadcast %64 : vector<2x8x1xf32> to vector<2x8x8xf32>
    %66 = arith.subf %62, %65 : vector<2x8x8xf32>
    %67 = math.exp %66 : vector<2x8x8xf32>
    %cst_24 = arith.constant dense<0.000000e+00> : vector<2x8xf32>
    %68 = vector.multi_reduction <add>, %67, %cst_24 [2] : vector<2x8x8xf32> to vector<2x8xf32>
    %69 = vector.shape_cast %68 : vector<2x8xf32> to vector<2x8x1xf32>
    "tpu.trace_start"() <{level = 10 : i32, message = "bqk,bkd->bqd"}> : () -> ()
    %cst_25 = arith.constant dense<0.000000e+00> : vector<2x8x32xf32>
    %70 = tpu.matmul %67, %61, %cst_25 {dimension_numbers = #tpu.dot_dimension_numbers<[2], [1], [1], [2], [0, 0, 0, 1, 1, 2], [0], [0]>} : vector<2x8x8xf32>, vector<2x8x32xf32>, vector<2x8x32xf32> -> vector<2x8x32xf32>
    "tpu.trace_stop"() : () -> ()
    %71 = tpu.reciprocal %69 {approx = true} : vector<2x8x1xf32> -> vector<2x8x1xf32>
    %72 = vector.broadcast %71 : vector<2x8x1xf32> to vector<2x8x32xf32>
    %73 = arith.mulf %70, %72 : vector<2x8x32xf32>
    %c0_26 = arith.constant 0 : index
    %c0_27 = arith.constant 0 : index
    %c32 = arith.constant 32 : index
    %74 = vector.load %arg15[%c0_26, %c0_27, %c32] : memref<2x8x128xf32, #tpu.memory_space<vmem>>, vector<2x8x32xf32>
    tpu.vector_store %arg15[%c0_26, %c0_27, %c32], %73 {strides = array<i32>} : memref<2x8x128xf32, #tpu.memory_space<vmem>>, vector<2x8x32xf32>,
    %75 = vector.extract_strided_slice %38 {offsets = [0, 0, 64], sizes = [2, 8, 32], strides = [1, 1, 1]} : vector<2x8x128xf32> to vector<2x8x32xf32>
    %76 = vector.extract_strided_slice %40 {offsets = [0, 0, 64], sizes = [2, 8, 32], strides = [1, 1, 1]} : vector<2x8x128xf32> to vector<2x8x32xf32>
    %77 = vector.extract_strided_slice %42 {offsets = [0, 0, 64], sizes = [2, 8, 32], strides = [1, 1, 1]} : vector<2x8x128xf32> to vector<2x8x32xf32>
    "tpu.trace_start"() <{level = 10 : i32, message = "bqd,bkd->bqk"}> : () -> ()
    %cst_28 = arith.constant dense<0.000000e+00> : vector<2x8x8xf32>
    %78 = tpu.matmul %75, %76, %cst_28 {dimension_numbers = #tpu.dot_dimension_numbers<[2], [2], [1], [1], [0, 0, 0, 1, 1, 1], [0], [0]>} : vector<2x8x32xf32>, vector<2x8x32xf32>, vector<2x8x8xf32> -> vector<2x8x8xf32>
    "tpu.trace_stop"() : () -> ()
    %cst_29 = arith.constant dense<0xFF800000> : vector<2x8xf32>
    %79 = vector.multi_reduction <maximumf>, %78, %cst_29 [2] : vector<2x8x8xf32> to vector<2x8xf32>
    %80 = vector.shape_cast %79 : vector<2x8xf32> to vector<2x8x1xf32>
    %81 = vector.broadcast %80 : vector<2x8x1xf32> to vector<2x8x8xf32>
    %82 = arith.subf %78, %81 : vector<2x8x8xf32>
    %83 = math.exp %82 : vector<2x8x8xf32>
    %cst_30 = arith.constant dense<0.000000e+00> : vector<2x8xf32>
    %84 = vector.multi_reduction <add>, %83, %cst_30 [2] : vector<2x8x8xf32> to vector<2x8xf32>
    %85 = vector.shape_cast %84 : vector<2x8xf32> to vector<2x8x1xf32>
    "tpu.trace_start"() <{level = 10 : i32, message = "bqk,bkd->bqd"}> : () -> ()
    %cst_31 = arith.constant dense<0.000000e+00> : vector<2x8x32xf32>
    %86 = tpu.matmul %83, %77, %cst_31 {dimension_numbers = #tpu.dot_dimension_numbers<[2], [1], [1], [2], [0, 0, 0, 1, 1, 2], [0], [0]>} : vector<2x8x8xf32>, vector<2x8x32xf32>, vector<2x8x32xf32> -> vector<2x8x32xf32>
    "tpu.trace_stop"() : () -> ()
    %87 = tpu.reciprocal %85 {approx = true} : vector<2x8x1xf32> -> vector<2x8x1xf32>
    %88 = vector.broadcast %87 : vector<2x8x1xf32> to vector<2x8x32xf32>
    %89 = arith.mulf %86, %88 : vector<2x8x32xf32>
    %c0_32 = arith.constant 0 : index
    %c0_33 = arith.constant 0 : index
    %c64 = arith.constant 64 : index
    %90 = vector.load %arg15[%c0_32, %c0_33, %c64] : memref<2x8x128xf32, #tpu.memory_space<vmem>>, vector<2x8x32xf32>
    tpu.vector_store %arg15[%c0_32, %c0_33, %c64], %89 {strides = array<i32>} : memref<2x8x128xf32, #tpu.memory_space<vmem>>, vector<2x8x32xf32>,
    %91 = vector.extract_strided_slice %38 {offsets = [0, 0, 96], sizes = [2, 8, 32], strides = [1, 1, 1]} : vector<2x8x128xf32> to vector<2x8x32xf32>
    %92 = vector.extract_strided_slice %40 {offsets = [0, 0, 96], sizes = [2, 8, 32], strides = [1, 1, 1]} : vector<2x8x128xf32> to vector<2x8x32xf32>
    %93 = vector.extract_strided_slice %42 {offsets = [0, 0, 96], sizes = [2, 8, 32], strides = [1, 1, 1]} : vector<2x8x128xf32> to vector<2x8x32xf32>
    "tpu.trace_start"() <{level = 10 : i32, message = "bqd,bkd->bqk"}> : () -> ()
    %cst_34 = arith.constant dense<0.000000e+00> : vector<2x8x8xf32>
    %94 = tpu.matmul %91, %92, %cst_34 {dimension_numbers = #tpu.dot_dimension_numbers<[2], [2], [1], [1], [0, 0, 0, 1, 1, 1], [0], [0]>} : vector<2x8x32xf32>, vector<2x8x32xf32>, vector<2x8x8xf32> -> vector<2x8x8xf32>
    "tpu.trace_stop"() : () -> ()
    %cst_35 = arith.constant dense<0xFF800000> : vector<2x8xf32>
    %95 = vector.multi_reduction <maximumf>, %94, %cst_35 [2] : vector<2x8x8xf32> to vector<2x8xf32>
    %96 = vector.shape_cast %95 : vector<2x8xf32> to vector<2x8x1xf32>
    %97 = vector.broadcast %96 : vector<2x8x1xf32> to vector<2x8x8xf32>
    %98 = arith.subf %94, %97 : vector<2x8x8xf32>
    %99 = math.exp %98 : vector<2x8x8xf32>
    %cst_36 = arith.constant dense<0.000000e+00> : vector<2x8xf32>
    %100 = vector.multi_reduction <add>, %99, %cst_36 [2] : vector<2x8x8xf32> to vector<2x8xf32>
    %101 = vector.shape_cast %100 : vector<2x8xf32> to vector<2x8x1xf32>
    "tpu.trace_start"() <{level = 10 : i32, message = "bqk,bkd->bqd"}> : () -> ()
    %cst_37 = arith.constant dense<0.000000e+00> : vector<2x8x32xf32>
    %102 = tpu.matmul %99, %93, %cst_37 {dimension_numbers = #tpu.dot_dimension_numbers<[2], [1], [1], [2], [0, 0, 0, 1, 1, 2], [0], [0]>} : vector<2x8x8xf32>, vector<2x8x32xf32>, vector<2x8x32xf32> -> vector<2x8x32xf32>
    "tpu.trace_stop"() : () -> ()
    %103 = tpu.reciprocal %101 {approx = true} : vector<2x8x1xf32> -> vector<2x8x1xf32>
    %104 = vector.broadcast %103 : vector<2x8x1xf32> to vector<2x8x32xf32>
    %105 = arith.mulf %102, %104 : vector<2x8x32xf32>
    %c0_38 = arith.constant 0 : index
    %c0_39 = arith.constant 0 : index
    %c96 = arith.constant 96 : index
    %106 = vector.load %arg15[%c0_38, %c0_39, %c96] : memref<2x8x128xf32, #tpu.memory_space<vmem>>, vector<2x8x32xf32>
    tpu.vector_store %arg15[%c0_38, %c0_39, %c96], %105 {strides = array<i32>} : memref<2x8x128xf32, #tpu.memory_space<vmem>>, vector<2x8x32xf32>,
    %c0_40 = arith.constant 0 : index
    %c0_41 = arith.constant 0 : index
    %c0_42 = arith.constant 0 : index
    %107 = vector.load %arg15[%c0_40, %c0_41, %c0_42] : memref<2x8x128xf32, #tpu.memory_space<vmem>>, vector<2x8x128xf32>
    %108 = vector.shape_cast %107 : vector<2x8x128xf32> to vector<16x128xf32>
    %c0_43 = arith.constant 0 : index
    %c0_44 = arith.constant 0 : index
    %109 = vector.load %arg6[%c0_43, %c0_44] : memref<128x128xf32, #tpu.memory_space<vmem>>, vector<128x128xf32>
    %cst_45 = arith.constant dense<0.000000e+00> : vector<16x128xf32>
    %110 = tpu.matmul %108, %109, %cst_45 {dimension_numbers = #tpu.dot_dimension_numbers<[1], [0], [0], [1], [0, 0, 1, 1], [], []>} : vector<16x128xf32>, vector<128x128xf32>, vector<16x128xf32> -> vector<16x128xf32>
    %c0_46 = arith.constant 0 : index
    %c0_47 = arith.constant 0 : index
    %111 = vector.load %arg7[%c0_46, %c0_47] : memref<1x128xf32, #tpu.memory_space<vmem>>, vector<1x128xf32>
    %112 = vector.shape_cast %111 : vector<1x128xf32> to vector<128xf32>
    %113 = vector.shape_cast %112 : vector<128xf32> to vector<1x128xf32>
    %114 = vector.broadcast %113 : vector<1x128xf32> to vector<16x128xf32>
    %115 = arith.addf %110, %114 : vector<16x128xf32>
    %116 = vector.shape_cast %0 : vector<2x8x128xf32> to vector<16x128xf32>
    %117 = arith.addf %116, %115 : vector<16x128xf32>
    %c0_48 = arith.constant 0 : index
    %c0_49 = arith.constant 0 : index
    %118 = vector.load %arg8[%c0_48, %c0_49] : memref<1x128xf32, #tpu.memory_space<vmem>>, vector<1x128xf32>
    %119 = vector.shape_cast %118 : vector<1x128xf32> to vector<128xf32>
    %c0_50 = arith.constant 0 : index
    %c0_51 = arith.constant 0 : index
    %120 = vector.load %arg9[%c0_50, %c0_51] : memref<1x128xf32, #tpu.memory_space<vmem>>, vector<1x128xf32>
    %121 = vector.shape_cast %120 : vector<1x128xf32> to vector<128xf32>
    %cst_52 = arith.constant dense<0.000000e+00> : vector<16xf32>
    %122 = vector.multi_reduction <add>, %117, %cst_52 [1] : vector<16x128xf32> to vector<16xf32>
    %123 = vector.shape_cast %122 : vector<16xf32> to vector<16x1xf32>
    %cst_53 = arith.constant 1.280000e+02 : f32
    %124 = vector.broadcast %cst_53 : f32 to vector<16x1xf32>
    %125 = arith.divf %123, %124 : vector<16x1xf32>
    %126 = vector.broadcast %125 : vector<16x1xf32> to vector<16x128xf32>
    %127 = arith.subf %117, %126 : vector<16x128xf32>
    %128 = arith.mulf %127, %127 : vector<16x128xf32>
    %cst_54 = arith.constant dense<0.000000e+00> : vector<16xf32>
    %129 = vector.multi_reduction <add>, %128, %cst_54 [1] : vector<16x128xf32> to vector<16xf32>
    %130 = vector.shape_cast %129 : vector<16xf32> to vector<16x1xf32>
    %cst_55 = arith.constant 1.280000e+02 : f32
    %131 = vector.broadcast %cst_55 : f32 to vector<16x1xf32>
    %132 = arith.divf %130, %131 : vector<16x1xf32>
    %133 = vector.broadcast %125 : vector<16x1xf32> to vector<16x128xf32>
    %134 = arith.subf %117, %133 : vector<16x128xf32>
    %cst_56 = arith.constant 9.99999974E-6 : f32
    %135 = vector.broadcast %cst_56 : f32 to vector<16x1xf32>
    %136 = arith.addf %132, %135 : vector<16x1xf32>
    %137 = math.rsqrt %136 : vector<16x1xf32>
    %138 = vector.broadcast %137 : vector<16x1xf32> to vector<16x128xf32>
    %139 = arith.mulf %134, %138 : vector<16x128xf32>
    %140 = vector.shape_cast %119 : vector<128xf32> to vector<1x128xf32>
    %141 = vector.broadcast %140 : vector<1x128xf32> to vector<16x128xf32>
    %142 = arith.mulf %139, %141 : vector<16x128xf32>
    %143 = vector.shape_cast %121 : vector<128xf32> to vector<1x128xf32>
    %144 = vector.broadcast %143 : vector<1x128xf32> to vector<16x128xf32>
    %145 = arith.addf %142, %144 : vector<16x128xf32>
    %c0_57 = arith.constant 0 : index
    %c0_58 = arith.constant 0 : index
    %146 = vector.load %arg11[%c0_57, %c0_58] : memref<1x512xf32, #tpu.memory_space<vmem>>, vector<1x512xf32>
    %147 = vector.shape_cast %146 : vector<1x512xf32> to vector<512xf32>
    %cst_59 = arith.constant 0.000000e+00 : f32
    %148 = vector.broadcast %cst_59 : f32 to vector<16x128xf32>
    %c0_60 = arith.constant 0 : index
    %c0_61 = arith.constant 0 : index
    %149 = vector.load %arg10[%c0_60, %c0_61] : memref<128x512xf32, #tpu.memory_space<vmem>>, vector<128x512xf32>
    %cst_62 = arith.constant dense<0.000000e+00> : vector<16x512xf32>
    %150 = tpu.matmul %145, %149, %cst_62 {dimension_numbers = #tpu.dot_dimension_numbers<[1], [0], [0], [1], [0, 0, 1, 1], [], []>} : vector<16x128xf32>, vector<128x512xf32>, vector<16x512xf32> -> vector<16x512xf32>
    %151 = vector.shape_cast %147 : vector<512xf32> to vector<1x512xf32>
    %152 = vector.broadcast %151 : vector<1x512xf32> to vector<16x512xf32>
    %153 = arith.addf %150, %152 : vector<16x512xf32>
    %cst_63 = arith.constant 1.702000e+00 : f32
    %154 = vector.broadcast %cst_63 : f32 to vector<16x512xf32>
    %155 = arith.mulf %154, %153 : vector<16x512xf32>
    %156 = arith.negf %155 : vector<16x512xf32>
    %157 = math.exp %156 : vector<16x512xf32>
    %cst_64 = arith.constant 1.000000e+00 : f32
    %158 = vector.broadcast %cst_64 : f32 to vector<16x512xf32>
    %159 = arith.addf %158, %157 : vector<16x512xf32>
    %160 = arith.divf %158, %159 : vector<16x512xf32>
    %161 = arith.mulf %153, %160 : vector<16x512xf32>
    %c0_65 = arith.constant 0 : index
    %c0_66 = arith.constant 0 : index
    %162 = vector.load %arg12[%c0_65, %c0_66] : memref<512x128xf32, #tpu.memory_space<vmem>>, vector<512x128xf32>
    %cst_67 = arith.constant dense<0.000000e+00> : vector<16x128xf32>
    %163 = tpu.matmul %161, %162, %cst_67 {dimension_numbers = #tpu.dot_dimension_numbers<[1], [0], [0], [1], [0, 0, 1, 1], [], []>} : vector<16x512xf32>, vector<512x128xf32>, vector<16x128xf32> -> vector<16x128xf32>
    %164 = arith.addf %148, %163 : vector<16x128xf32>
    %c0_68 = arith.constant 0 : index
    %c0_69 = arith.constant 0 : index
    %165 = vector.load %arg13[%c0_68, %c0_69] : memref<1x128xf32, #tpu.memory_space<vmem>>, vector<1x128xf32>
    %166 = vector.shape_cast %165 : vector<1x128xf32> to vector<128xf32>
    %167 = vector.shape_cast %166 : vector<128xf32> to vector<1x128xf32>
    %168 = vector.broadcast %167 : vector<1x128xf32> to vector<16x128xf32>
    %169 = arith.addf %164, %168 : vector<16x128xf32>
    %170 = arith.addf %117, %169 : vector<16x128xf32>
    %171 = vector.shape_cast %170 : vector<16x128xf32> to vector<2x8x128xf32>
    %c0_70 = arith.constant 0 : index
    %c0_71 = arith.constant 0 : index
    %c0_72 = arith.constant 0 : index
    %172 = vector.load %arg14[%c0_70, %c0_71, %c0_72] : memref<2x8x128xf32, #tpu.memory_space<vmem>>, vector<2x8x128xf32>
    tpu.vector_store %arg14[%c0_70, %c0_71, %c0_72], %171 {strides = array<i32>} : memref<2x8x128xf32, #tpu.memory_space<vmem>>, vector<2x8x128xf32>,
    return
  }
  func.func @transform_0(%arg0: i32) -> (i32, i32, i32) {
    %c0_i32 = arith.constant 0 : i32
    %c0_i32_0 = arith.constant 0 : i32
    %c0_i32_1 = arith.constant 0 : i32
    return %arg0, %c0_i32, %c0_i32_0 : i32, i32, i32
  }
  func.func @transform_1(%arg0: i32) -> (i32, i32) {
    %c0_i32 = arith.constant 0 : i32
    %c0_i32_0 = arith.constant 0 : i32
    %c0_i32_1 = arith.constant 0 : i32
    return %c0_i32, %c0_i32_0 : i32, i32
  }
  func.func @transform_2(%arg0: i32) -> (i32, i32) {
    %c0_i32 = arith.constant 0 : i32
    %c0_i32_0 = arith.constant 0 : i32
    %c0_i32_1 = arith.constant 0 : i32
    return %c0_i32, %c0_i32_0 : i32, i32
  }
  func.func @transform_3(%arg0: i32) -> (i32, i32) {
    %c0_i32 = arith.constant 0 : i32
    %c0_i32_0 = arith.constant 0 : i32
    %c0_i32_1 = arith.constant 0 : i32
    return %c0_i32, %c0_i32_0 : i32, i32
  }
  func.func @transform_4(%arg0: i32) -> (i32, i32) {
    %c0_i32 = arith.constant 0 : i32
    %c0_i32_0 = arith.constant 0 : i32
    %c0_i32_1 = arith.constant 0 : i32
    return %c0_i32, %c0_i32_0 : i32, i32
  }
  func.func @transform_5(%arg0: i32) -> (i32, i32) {
    %c0_i32 = arith.constant 0 : i32
    %c0_i32_0 = arith.constant 0 : i32
    %c0_i32_1 = arith.constant 0 : i32
    return %c0_i32, %c0_i32_0 : i32, i32
  }
  func.func @transform_6(%arg0: i32) -> (i32, i32) {
    %c0_i32 = arith.constant 0 : i32
    %c0_i32_0 = arith.constant 0 : i32
    %c0_i32_1 = arith.constant 0 : i32
    return %c0_i32, %c0_i32_0 : i32, i32
  }
  func.func @transform_7(%arg0: i32) -> (i32, i32) {
    %c0_i32 = arith.constant 0 : i32
    %c0_i32_0 = arith.constant 0 : i32
    %c0_i32_1 = arith.constant 0 : i32
    return %c0_i32, %c0_i32_0 : i32, i32
  }
  func.func @transform_8(%arg0: i32) -> (i32, i32) {
    %c0_i32 = arith.constant 0 : i32
    %c0_i32_0 = arith.constant 0 : i32
    %c0_i32_1 = arith.constant 0 : i32
    return %c0_i32, %c0_i32_0 : i32, i32
  }
  func.func @transform_9(%arg0: i32) -> (i32, i32) {
    %c0_i32 = arith.constant 0 : i32
    %c0_i32_0 = arith.constant 0 : i32
    %c0_i32_1 = arith.constant 0 : i32
    return %c0_i32, %c0_i32_0 : i32, i32
  }
  func.func @transform_10(%arg0: i32) -> (i32, i32) {
    %c0_i32 = arith.constant 0 : i32
    %c0_i32_0 = arith.constant 0 : i32
    %c0_i32_1 = arith.constant 0 : i32
    return %c0_i32, %c0_i32_0 : i32, i32
  }
  func.func @transform_11(%arg0: i32) -> (i32, i32) {
    %c0_i32 = arith.constant 0 : i32
    %c0_i32_0 = arith.constant 0 : i32
    %c0_i32_1 = arith.constant 0 : i32
    return %c0_i32, %c0_i32_0 : i32, i32
  }
  func.func @transform_12(%arg0: i32) -> (i32, i32) {
    %c0_i32 = arith.constant 0 : i32
    %c0_i32_0 = arith.constant 0 : i32
    %c0_i32_1 = arith.constant 0 : i32
    return %c0_i32, %c0_i32_0 : i32, i32
  }
  func.func @transform_13(%arg0: i32) -> (i32, i32, i32) {
    %c0_i32 = arith.constant 0 : i32
    %c0_i32_0 = arith.constant 0 : i32
    %c0_i32_1 = arith.constant 0 : i32
    return %arg0, %c0_i32, %c0_i32_0 : i32, i32, i32
  }
}

</mosaic_0001>

<llo_original>
// kernel: tpu_custom_call.1
$region0: #{tpu_custom_call.1}
  #allocation0 [shape = 'u32[]', space=smem, size = 0x4, offset = 0x4, fixed_abs, tag = 'smem constant byte address 0x4 - core index']
  #allocation1 [shape = 'u32[144,128]{1,0:T(1,128)}', space=vmem, size = 0x12000, scoped, tag = 'internal scratch']
  #allocation2 [shape = 'f32[2,8,128]{2,1,0:T(8,128)}', space=vmem, size = 0x2000, scoped, tag = 'scratch operand']
  %s0 = inlined_call_operand.hbm [shape: f32[4,8,128], index: 0, kind: input, shape index: {}]
  %s1 = inlined_call_operand.hbm [shape: f32[1,128], index: 1, kind: input, shape index: {}]
  %s2 = inlined_call_operand.hbm [shape: f32[1,128], index: 2, kind: input, shape index: {}]
  %s3 = inlined_call_operand.hbm [shape: f32[128,384], index: 3, kind: input, shape index: {}]
  %s4 = inlined_call_operand.hbm [shape: f32[1,384], index: 4, kind: input, shape index: {}]
  %s5 = inlined_call_operand.hbm [shape: f32[128,128], index: 5, kind: input, shape index: {}]
  %s6 = inlined_call_operand.hbm [shape: f32[1,128], index: 6, kind: input, shape index: {}]
  %s7 = inlined_call_operand.hbm [shape: f32[1,128], index: 7, kind: input, shape index: {}]
  %s8 = inlined_call_operand.hbm [shape: f32[1,128], index: 8, kind: input, shape index: {}]
  %s9 = inlined_call_operand.hbm [shape: f32[128,512], index: 9, kind: input, shape index: {}]
  %s10 = inlined_call_operand.hbm [shape: f32[1,512], index: 10, kind: input, shape index: {}]
  %s11 = inlined_call_operand.hbm [shape: f32[512,128], index: 11, kind: input, shape index: {}]
  %s12 = inlined_call_operand.hbm [shape: f32[1,128], index: 12, kind: input, shape index: {}]
  %s13 = inlined_call_operand.hbm [shape: f32[4,8,128], index: 13, kind: output, shape index: {}]
  %s14 = sld [smem:[#allocation0]]
  $region137: #{tpu_custom_call.1} parent=0
    _
  %s16 = ssub.s32 1, %s14
  %s17 = scalar_select 0, %s16, %s14
  $region1: #{tpu_custom_call.1} parent=0
    #allocation3 [shape = 'u8[16384]{0}', space=vmem, size = 0x4000, scoped, tag = 'input window, operand 0']
    #allocation4 [shape = 's32[2]{0}', space=sflag, size = 0x8, scoped, tag = 'scoped memory for tpu_custom_call.1']
    #allocation5 [shape = 's32[2]{0}', space=sflag, size = 0x8, scoped, tag = 'scoped memory for tpu_custom_call.1']
    #allocation6 [shape = 'u8[512]{0}', space=vmem, size = 0x400, scoped, tag = 'input window, operand 1, single buffered']
    #allocation7 [shape = 's32[1]{0}', space=sflag, size = 0x4, scoped, tag = 'scoped memory for tpu_custom_call.1']
    #allocation8 [shape = 'u8[512]{0}', space=vmem, size = 0x400, scoped, tag = 'input window, operand 2, single buffered']
    #allocation9 [shape = 'u8[196608]{0}', space=vmem, size = 0x30000, scoped, tag = 'input window, operand 3, single buffered']
    #allocation10 [shape = 's32[1]{0}', space=sflag, size = 0x4, scoped, tag = 'scoped memory for tpu_custom_call.1']
    #allocation11 [shape = 'u8[1536]{0}', space=vmem, size = 0x800, scoped, tag = 'input window, operand 4, single buffered']
    #allocation12 [shape = 'u8[65536]{0}', space=vmem, size = 0x10000, scoped, tag = 'input window, operand 5, single buffered']
    #allocation13 [shape = 's32[1]{0}', space=sflag, size = 0x4, scoped, tag = 'scoped memory for tpu_custom_call.1']
    #allocation14 [shape = 'u8[512]{0}', space=vmem, size = 0x400, scoped, tag = 'input window, operand 6, single buffered']
    #allocation15 [shape = 'u8[512]{0}', space=vmem, size = 0x400, scoped, tag = 'input window, operand 7, single buffered']
    #allocation16 [shape = 's32[1]{0}', space=sflag, size = 0x4, scoped, tag = 'scoped memory for tpu_custom_call.1']
    #allocation17 [shape = 'u8[512]{0}', space=vmem, size = 0x400, scoped, tag = 'input window, operand 8, single buffered']
    #allocation18 [shape = 'u8[262144]{0}', space=vmem, size = 0x40000, scoped, tag = 'input window, operand 9, single buffered']
    #allocation19 [shape = 's32[1]{0}', space=sflag, size = 0x4, scoped, tag = 'scoped memory for tpu_custom_call.1']
    #allocation20 [shape = 'u8[2048]{0}', space=vmem, size = 0x800, scoped, tag = 'input window, operand 10, single buffered']
    #allocation21 [shape = 'u8[262144]{0}', space=vmem, size = 0x40000, scoped, tag = 'input window, operand 11, single buffered']
    #allocation22 [shape = 's32[1]{0}', space=sflag, size = 0x4, scoped, tag = 'scoped memory for tpu_custom_call.1']
    #allocation23 [shape = 'u8[512]{0}', space=vmem, size = 0x400, scoped, tag = 'input window, operand 12, single buffered']
    #allocation24 [shape = 'u8[16384]{0}', space=vmem, size = 0x4000, scoped, tag = 'output window, operand 0']
    %18 = vsyncpa [#allocation4], 0
    %s19 = scalar_lea.sflag [#allocation4], 1
    %20 = vsyncpa %s19, 0
    %21 = vsyncpa [#allocation7], 0
    %22 = vsyncpa [#allocation10], 0
    %23 = vsyncpa [#allocation13], 0
    %24 = vsyncpa [#allocation16], 0
    %25 = vsyncpa [#allocation19], 0
    %26 = vsyncpa [#allocation22], 0
    %27 = vsyncpa [#allocation5], 0
    %s28 = scalar_lea.sflag [#allocation5], 1
    %29 = vsyncpa %s28, 0
    loop: start=0, step=1, limit=4
    $region2: #{tpu_custom_call.1} parent=1 // loop_pre_header
      _
    $region3: #{tpu_custom_call.1} parent=1 // loop_header
      %s31 = sphi 0, %s35
      %p32 = scmp.ge.s32.totalorder %s31, 4
      %s41 = sphi 0, %s43
      %s44 = sphi 0, %s41
      %s45 = sphi 0, %s44
      %s61 = sphi 0, %s45
      %s65 = sphi 0, %s65
      %s67 = sphi 0, %s65
      %s68 = sphi 0, %s67
      %s82 = sphi 0, %s68
      %s86 = sphi 0, %s86
      %s88 = sphi 0, %s86
      %s89 = sphi 0, %s88
      %s103 = sphi 0, %s89
      %s107 = sphi 0, %s107
      %s109 = sphi 0, %s107
      %s110 = sphi 0, %s109
      %s124 = sphi 0, %s110
      %s128 = sphi 0, %s128
      %s130 = sphi 0, %s128
      %s131 = sphi 0, %s130
      %s145 = sphi 0, %s131
      %s149 = sphi 0, %s149
      %s151 = sphi 0, %s149
      %s152 = sphi 0, %s151
      %s166 = sphi 0, %s152
      %s170 = sphi 0, %s170
      %s172 = sphi 0, %s170
      %s173 = sphi 0, %s172
      %s187 = sphi 0, %s173
      %s191 = sphi 0, %s191
      %s193 = sphi 0, %s191
      %s194 = sphi 0, %s193
      %s208 = sphi 0, %s194
      %s212 = sphi 0, %s212
      %s214 = sphi 0, %s212
      %s215 = sphi 0, %s214
      %s229 = sphi 0, %s215
      %s233 = sphi 0, %s233
      %s235 = sphi 0, %s233
      %s236 = sphi 0, %s235
      %s250 = sphi 0, %s236
      %s254 = sphi 0, %s254
      %s256 = sphi 0, %s254
      %s257 = sphi 0, %s256
      %s271 = sphi 0, %s257
      %s275 = sphi 0, %s275
      %s277 = sphi 0, %s275
      %s278 = sphi 0, %s277
      %s292 = sphi 0, %s278
      %s296 = sphi 0, %s296
      %s298 = sphi 0, %s296
      %s299 = sphi 0, %s298
      %s313 = sphi 0, %s299
      %s319 = sphi 0, %s321
      %s322 = sphi 0, %s319
      %s323 = sphi 0, %s322
      %s339 = sphi 0, %s323
    $region4: #{tpu_custom_call.1} parent=1 // loop_header_branch
      %34 = sbr.rel (%p32) target = $region8
    $region5: #{tpu_custom_call.1} parent=1 // loop_body
      %s36 = ssub.s32 %s31, 1
      %s37 = ssub.s32 %s31, 2
      %s38 = sadd.s32 %s31, 1
      %s39 = ssub.s32 %s31, %s38
      %p40 = scmp.eq.s32.totalorder %s39, 0
      %s42 = sadd.s32 %s41, 1
      %s43 = scalar_select %p40, %s41, %s42
      %p46 = pneg %p40
      %p47 = scmp.eq.s32.totalorder %s31, 1
      %p48 = por %p46, %p47
      %p49 = scmp.ne.s32.totalorder %s41, %s44
      %p50 = scmp.eq.s32.totalorder %s31, 0
      %p51 = por %p49, %p50
      %p52 = scmp.ne.s32.totalorder %s41, %s44
      %p53 = scmp.eq.s32.totalorder %s36, 1
      %p54 = por %p52, %p53
      %p55 = scmp.ne.s32.totalorder %s44, %s45
      %p56 = scmp.eq.s32.totalorder %s36, 0
      %p57 = por %p55, %p56
      %p58 = scmp.ne.s32.totalorder %s44, %s45
      %p59 = scmp.eq.s32.totalorder %s37, 1
      %p60 = por %p58, %p59
      %p62 = scmp.ne.s32.totalorder %s45, %s61
      %p63 = scmp.eq.s32.totalorder %s37, 0
      %p64 = por %p62, %p63
      %s66 = sadd.s32 %s65, 1
      %p69 = scmp.eq.s32.totalorder %s31, 1
      %p70 = scmp.ne.s32.totalorder %s65, %s67
      %p71 = scmp.eq.s32.totalorder %s31, 0
      %p72 = por %p70, %p71
      %p73 = scmp.ne.s32.totalorder %s65, %s67
      %p74 = scmp.eq.s32.totalorder %s36, 1
      %p75 = por %p73, %p74
      %p76 = scmp.ne.s32.totalorder %s67, %s68
      %p77 = scmp.eq.s32.totalorder %s36, 0
      %p78 = por %p76, %p77
      %p79 = scmp.ne.s32.totalorder %s67, %s68
      %p80 = scmp.eq.s32.totalorder %s37, 1
      %p81 = por %p79, %p80
      %p83 = scmp.ne.s32.totalorder %s68, %s82
      %p84 = scmp.eq.s32.totalorder %s37, 0
      %p85 = por %p83, %p84
      %s87 = sadd.s32 %s86, 1
      %p90 = scmp.eq.s32.totalorder %s31, 1
      %p91 = scmp.ne.s32.totalorder %s86, %s88
      %p92 = scmp.eq.s32.totalorder %s31, 0
      %p93 = por %p91, %p92
      %p94 = scmp.ne.s32.totalorder %s86, %s88
      %p95 = scmp.eq.s32.totalorder %s36, 1
      %p96 = por %p94, %p95
      %p97 = scmp.ne.s32.totalorder %s88, %s89
      %p98 = scmp.eq.s32.totalorder %s36, 0
      %p99 = por %p97, %p98
      %p100 = scmp.ne.s32.totalorder %s88, %s89
      %p101 = scmp.eq.s32.totalorder %s37, 1
      %p102 = por %p100, %p101
      %p104 = scmp.ne.s32.totalorder %s89, %s103
      %p105 = scmp.eq.s32.totalorder %s37, 0
      %p106 = por %p104, %p105
      %s108 = sadd.s32 %s107, 1
      %p111 = scmp.eq.s32.totalorder %s31, 1
      %p112 = scmp.ne.s32.totalorder %s107, %s109
      %p113 = scmp.eq.s32.totalorder %s31, 0
      %p114 = por %p112, %p113
      %p115 = scmp.ne.s32.totalorder %s107, %s109
      %p116 = scmp.eq.s32.totalorder %s36, 1
      %p117 = por %p115, %p116
      %p118 = scmp.ne.s32.totalorder %s109, %s110
      %p119 = scmp.eq.s32.totalorder %s36, 0
      %p120 = por %p118, %p119
      %p121 = scmp.ne.s32.totalorder %s109, %s110
      %p122 = scmp.eq.s32.totalorder %s37, 1
      %p123 = por %p121, %p122
      %p125 = scmp.ne.s32.totalorder %s110, %s124
      %p126 = scmp.eq.s32.totalorder %s37, 0
      %p127 = por %p125, %p126
      %s129 = sadd.s32 %s128, 1
      %p132 = scmp.eq.s32.totalorder %s31, 1
      %p133 = scmp.ne.s32.totalorder %s128, %s130
      %p134 = scmp.eq.s32.totalorder %s31, 0
      %p135 = por %p133, %p134
      %p136 = scmp.ne.s32.totalorder %s128, %s130
      %p137 = scmp.eq.s32.totalorder %s36, 1
      %p138 = por %p136, %p137
      %p139 = scmp.ne.s32.totalorder %s130, %s131
      %p140 = scmp.eq.s32.totalorder %s36, 0
      %p141 = por %p139, %p140
      %p142 = scmp.ne.s32.totalorder %s130, %s131
      %p143 = scmp.eq.s32.totalorder %s37, 1
      %p144 = por %p142, %p143
      %p146 = scmp.ne.s32.totalorder %s131, %s145
      %p147 = scmp.eq.s32.totalorder %s37, 0
      %p148 = por %p146, %p147
      %s150 = sadd.s32 %s149, 1
      %p153 = scmp.eq.s32.totalorder %s31, 1
      %p154 = scmp.ne.s32.totalorder %s149, %s151
      %p155 = scmp.eq.s32.totalorder %s31, 0
      %p156 = por %p154, %p155
      %p157 = scmp.ne.s32.totalorder %s149, %s151
      %p158 = scmp.eq.s32.totalorder %s36, 1
      %p159 = por %p157, %p158
      %p160 = scmp.ne.s32.totalorder %s151, %s152
      %p161 = scmp.eq.s32.totalorder %s36, 0
      %p162 = por %p160, %p161
      %p163 = scmp.ne.s32.totalorder %s151, %s152
      %p164 = scmp.eq.s32.totalorder %s37, 1
      %p165 = por %p163, %p164
      %p167 = scmp.ne.s32.totalorder %s152, %s166
      %p168 = scmp.eq.s32.totalorder %s37, 0
      %p169 = por %p167, %p168
      %s171 = sadd.s32 %s170, 1
      %p174 = scmp.eq.s32.totalorder %s31, 1
      %p175 = scmp.ne.s32.totalorder %s170, %s172
      %p176 = scmp.eq.s32.totalorder %s31, 0
      %p177 = por %p175, %p176
      %p178 = scmp.ne.s32.totalorder %s170, %s172
      %p179 = scmp.eq.s32.totalorder %s36, 1
      %p180 = por %p178, %p179
      %p181 = scmp.ne.s32.totalorder %s172, %s173
      %p182 = scmp.eq.s32.totalorder %s36, 0
      %p183 = por %p181, %p182
      %p184 = scmp.ne.s32.totalorder %s172, %s173
      %p185 = scmp.eq.s32.totalorder %s37, 1
      %p186 = por %p184, %p185
      %p188 = scmp.ne.s32.totalorder %s173, %s187
      %p189 = scmp.eq.s32.totalorder %s37, 0
      %p190 = por %p188, %p189
      %s192 = sadd.s32 %s191, 1
      %p195 = scmp.eq.s32.totalorder %s31, 1
      %p196 = scmp.ne.s32.totalorder %s191, %s193
      %p197 = scmp.eq.s32.totalorder %s31, 0
      %p198 = por %p196, %p197
      %p199 = scmp.ne.s32.totalorder %s191, %s193
      %p200 = scmp.eq.s32.totalorder %s36, 1
      %p201 = por %p199, %p200
      %p202 = scmp.ne.s32.totalorder %s193, %s194
      %p203 = scmp.eq.s32.totalorder %s36, 0
      %p204 = por %p202, %p203
      %p205 = scmp.ne.s32.totalorder %s193, %s194
      %p206 = scmp.eq.s32.totalorder %s37, 1
      %p207 = por %p205, %p206
      %p209 = scmp.ne.s32.totalorder %s194, %s208
      %p210 = scmp.eq.s32.totalorder %s37, 0
      %p211 = por %p209, %p210
      %s213 = sadd.s32 %s212, 1
      %p216 = scmp.eq.s32.totalorder %s31, 1
      %p217 = scmp.ne.s32.totalorder %s212, %s214
      %p218 = scmp.eq.s32.totalorder %s31, 0
      %p219 = por %p217, %p218
      %p220 = scmp.ne.s32.totalorder %s212, %s214
      %p221 = scmp.eq.s32.totalorder %s36, 1
      %p222 = por %p220, %p221
      %p223 = scmp.ne.s32.totalorder %s214, %s215
      %p224 = scmp.eq.s32.totalorder %s36, 0
      %p225 = por %p223, %p224
      %p226 = scmp.ne.s32.totalorder %s214, %s215
      %p227 = scmp.eq.s32.totalorder %s37, 1
      %p228 = por %p226, %p227
      %p230 = scmp.ne.s32.totalorder %s215, %s229
      %p231 = scmp.eq.s32.totalorder %s37, 0
      %p232 = por %p230, %p231
      %s234 = sadd.s32 %s233, 1
      %p237 = scmp.eq.s32.totalorder %s31, 1
      %p238 = scmp.ne.s32.totalorder %s233, %s235
      %p239 = scmp.eq.s32.totalorder %s31, 0
      %p240 = por %p238, %p239
      %p241 = scmp.ne.s32.totalorder %s233, %s235
      %p242 = scmp.eq.s32.totalorder %s36, 1
      %p243 = por %p241, %p242
      %p244 = scmp.ne.s32.totalorder %s235, %s236
      %p245 = scmp.eq.s32.totalorder %s36, 0
      %p246 = por %p244, %p245
      %p247 = scmp.ne.s32.totalorder %s235, %s236
      %p248 = scmp.eq.s32.totalorder %s37, 1
      %p249 = por %p247, %p248
      %p251 = scmp.ne.s32.totalorder %s236, %s250
      %p252 = scmp.eq.s32.totalorder %s37, 0
      %p253 = por %p251, %p252
      %s255 = sadd.s32 %s254, 1
      %p258 = scmp.eq.s32.totalorder %s31, 1
      %p259 = scmp.ne.s32.totalorder %s254, %s256
      %p260 = scmp.eq.s32.totalorder %s31, 0
      %p261 = por %p259, %p260
      %p262 = scmp.ne.s32.totalorder %s254, %s256
      %p263 = scmp.eq.s32.totalorder %s36, 1
      %p264 = por %p262, %p263
      %p265 = scmp.ne.s32.totalorder %s256, %s257
      %p266 = scmp.eq.s32.totalorder %s36, 0
      %p267 = por %p265, %p266
      %p268 = scmp.ne.s32.totalorder %s256, %s257
      %p269 = scmp.eq.s32.totalorder %s37, 1
      %p270 = por %p268, %p269
      %p272 = scmp.ne.s32.totalorder %s257, %s271
      %p273 = scmp.eq.s32.totalorder %s37, 0
      %p274 = por %p272, %p273
      %s276 = sadd.s32 %s275, 1
      %p279 = scmp.eq.s32.totalorder %s31, 1
      %p280 = scmp.ne.s32.totalorder %s275, %s277
      %p281 = scmp.eq.s32.totalorder %s31, 0
      %p282 = por %p280, %p281
      %p283 = scmp.ne.s32.totalorder %s275, %s277
      %p284 = scmp.eq.s32.totalorder %s36, 1
      %p285 = por %p283, %p284
      %p286 = scmp.ne.s32.totalorder %s277, %s278
      %p287 = scmp.eq.s32.totalorder %s36, 0
      %p288 = por %p286, %p287
      %p289 = scmp.ne.s32.totalorder %s277, %s278
      %p290 = scmp.eq.s32.totalorder %s37, 1
      %p291 = por %p289, %p290
      %p293 = scmp.ne.s32.totalorder %s278, %s292
      %p294 = scmp.eq.s32.totalorder %s37, 0
      %p295 = por %p293, %p294
      %s297 = sadd.s32 %s296, 1
      %p300 = scmp.eq.s32.totalorder %s31, 1
      %p301 = scmp.ne.s32.totalorder %s296, %s298
      %p302 = scmp.eq.s32.totalorder %s31, 0
      %p303 = por %p301, %p302
      %p304 = scmp.ne.s32.totalorder %s296, %s298
      %p305 = scmp.eq.s32.totalorder %s36, 1
      %p306 = por %p304, %p305
      %p307 = scmp.ne.s32.totalorder %s298, %s299
      %p308 = scmp.eq.s32.totalorder %s36, 0
      %p309 = por %p307, %p308
      %p310 = scmp.ne.s32.totalorder %s298, %s299
      %p311 = scmp.eq.s32.totalorder %s37, 1
      %p312 = por %p310, %p311
      %p314 = scmp.ne.s32.totalorder %s299, %s313
      %p315 = scmp.eq.s32.totalorder %s37, 0
      %p316 = por %p314, %p315
      %s317 = ssub.s32 %s31, %s38
      %p318 = scmp.eq.s32.totalorder %s317, 0
      %s320 = sadd.s32 %s319, 1
      %s321 = scalar_select %p318, %s319, %s320
      %p324 = pneg %p318
      %p325 = scmp.eq.s32.totalorder %s31, 1
      %p326 = por %p324, %p325
      %p327 = scmp.ne.s32.totalorder %s319, %s322
      %p328 = scmp.eq.s32.totalorder %s31, 0
      %p329 = por %p327, %p328
      %p330 = scmp.ne.s32.totalorder %s319, %s322
      %p331 = scmp.eq.s32.totalorder %s36, 1
      %p332 = por %p330, %p331
      %p333 = scmp.ne.s32.totalorder %s322, %s323
      %p334 = scmp.eq.s32.totalorder %s36, 0
      %p335 = por %p333, %p334
      %p336 = scmp.ne.s32.totalorder %s322, %s323
      %p337 = scmp.eq.s32.totalorder %s37, 1
      %p338 = por %p336, %p337
      %p340 = scmp.ne.s32.totalorder %s323, %s339
      %p341 = scmp.eq.s32.totalorder %s37, 0
      %p342 = por %p340, %p341
      %p343 = scmp.le.s32.totalorder 1, %s31
      %p344 = scmp.lt.s32.totalorder %s31, 3
      %p345 = pnand %p343, %p344
      %p346 = pneg %p345
      // Predicated region
      $region9: #{tpu_custom_call.1} parent=5 // pred_check
        _
      $region10: #{tpu_custom_call.1} parent=5 // pred_check_branch
        %348 = sbr.rel (%p345) target = $region12
      $region11: #{tpu_custom_call.1} parent=5 // pred_region
        %s349 = ssub.s32 %s31, 1
        // Predicated region
        $region13: #{tpu_custom_call.1} parent=11 // pred_check
          %p350 = pneg %p78
        $region14: #{tpu_custom_call.1} parent=11 // pred_check_branch
          %352 = sbr.rel (%p350) target = $region16
        $region15: #{tpu_custom_call.1} parent=11 // pred_region
          %s354 = ssub.s32 16, 16
          %355 = vsyncadd [#allocation7], %s354
          %s357 = sshll.u32 [#allocation6], 4
          %s358 = int_to_ptr.vmem [resolvable:$true] %s357
          %360 = dma.hbm_to_vmem [thread:$0]  %s1, 16, %s358, [#allocation7]
        $region16: #{tpu_custom_call.1} parent=11 // pred_fallthru
          _
        // Predicated region
        $region17: #{tpu_custom_call.1} parent=11 // pred_check
          %p361 = pneg %p99
        $region18: #{tpu_custom_call.1} parent=11 // pred_check_branch
          %363 = sbr.rel (%p361) target = $region20
        $region19: #{tpu_custom_call.1} parent=11 // pred_region
          %s365 = ssub.s32 16, 16
          %366 = vsyncadd [#allocation7], %s365
          %s368 = sshll.u32 [#allocation8], 4
          %s369 = int_to_ptr.vmem [resolvable:$true] %s368
          %371 = dma.hbm_to_vmem [thread:$0]  %s2, 16, %s369, [#allocation7]
        $region20: #{tpu_custom_call.1} parent=11 // pred_fallthru
          _
        // Predicated region
        $region21: #{tpu_custom_call.1} parent=11 // pred_check
          %p372 = pneg %p120
        $region22: #{tpu_custom_call.1} parent=11 // pred_check_branch
          %374 = sbr.rel (%p372) target = $region24
        $region23: #{tpu_custom_call.1} parent=11 // pred_region
          %s376 = ssub.s32 6144, 6144
          %377 = vsyncadd [#allocation10], %s376
          %s378 = sshll.u32 [#allocation9], 4
          %s379 = int_to_ptr.vmem [resolvable:$true] %s378
          %384 = dma.hbm_to_vmem [thread:$0]  %s3, 6144, %s379, [#allocation10], 384, 384, 24
        $region24: #{tpu_custom_call.1} parent=11 // pred_fallthru
          _
        // Predicated region
        $region25: #{tpu_custom_call.1} parent=11 // pred_check
          %p385 = pneg %p141
        $region26: #{tpu_custom_call.1} parent=11 // pred_check_branch
          %387 = sbr.rel (%p385) target = $region28
        $region27: #{tpu_custom_call.1} parent=11 // pred_region
          %s389 = ssub.s32 48, 48
          %390 = vsyncadd [#allocation10], %s389
          %s392 = sshll.u32 [#allocation11], 4
          %s393 = int_to_ptr.vmem [resolvable:$true] %s392
          %395 = dma.hbm_to_vmem [thread:$0]  %s4, 48, %s393, [#allocation10]
        $region28: #{tpu_custom_call.1} parent=11 // pred_fallthru
          _
        // Predicated region
        $region29: #{tpu_custom_call.1} parent=11 // pred_check
          %p396 = pneg %p162
        $region30: #{tpu_custom_call.1} parent=11 // pred_check_branch
          %398 = sbr.rel (%p396) target = $region32
        $region31: #{tpu_custom_call.1} parent=11 // pred_region
          %s400 = ssub.s32 2048, 2048
          %401 = vsyncadd [#allocation13], %s400
          %s402 = sshll.u32 [#allocation12], 4
          %s403 = int_to_ptr.vmem [resolvable:$true] %s402
          %408 = dma.hbm_to_vmem [thread:$0]  %s5, 2048, %s403, [#allocation13], 128, 128, 8
        $region32: #{tpu_custom_call.1} parent=11 // pred_fallthru
          _
        // Predicated region
        $region33: #{tpu_custom_call.1} parent=11 // pred_check
          %p409 = pneg %p183
        $region34: #{tpu_custom_call.1} parent=11 // pred_check_branch
          %411 = sbr.rel (%p409) target = $region36
        $region35: #{tpu_custom_call.1} parent=11 // pred_region
          %s413 = ssub.s32 16, 16
          %414 = vsyncadd [#allocation13], %s413
          %s416 = sshll.u32 [#allocation14], 4
          %s417 = int_to_ptr.vmem [resolvable:$true] %s416
          %419 = dma.hbm_to_vmem [thread:$0]  %s6, 16, %s417, [#allocation13]
        $region36: #{tpu_custom_call.1} parent=11 // pred_fallthru
          _
        // Predicated region
        $region37: #{tpu_custom_call.1} parent=11 // pred_check
          %p420 = pneg %p204
        $region38: #{tpu_custom_call.1} parent=11 // pred_check_branch
          %422 = sbr.rel (%p420) target = $region40
        $region39: #{tpu_custom_call.1} parent=11 // pred_region
          %s424 = ssub.s32 16, 16
          %425 = vsyncadd [#allocation16], %s424
          %s427 = sshll.u32 [#allocation15], 4
          %s428 = int_to_ptr.vmem [resolvable:$true] %s427
          %430 = dma.hbm_to_vmem [thread:$0]  %s7, 16, %s428, [#allocation16]
        $region40: #{tpu_custom_call.1} parent=11 // pred_fallthru
          _
        // Predicated region
        $region41: #{tpu_custom_call.1} parent=11 // pred_check
          %p431 = pneg %p225
        $region42: #{tpu_custom_call.1} parent=11 // pred_check_branch
          %433 = sbr.rel (%p431) target = $region44
        $region43: #{tpu_custom_call.1} parent=11 // pred_region
          %s435 = ssub.s32 16, 16
          %436 = vsyncadd [#allocation16], %s435
          %s438 = sshll.u32 [#allocation17], 4
          %s439 = int_to_ptr.vmem [resolvable:$true] %s438
          %441 = dma.hbm_to_vmem [thread:$0]  %s8, 16, %s439, [#allocation16]
        $region44: #{tpu_custom_call.1} parent=11 // pred_fallthru
          _
        // Predicated region
        $region45: #{tpu_custom_call.1} parent=11 // pred_check
          %p442 = pneg %p246
        $region46: #{tpu_custom_call.1} parent=11 // pred_check_branch
          %444 = sbr.rel (%p442) target = $region48
        $region47: #{tpu_custom_call.1} parent=11 // pred_region
          %s446 = ssub.s32 8192, 8192
          %447 = vsyncadd [#allocation19], %s446
          %s448 = sshll.u32 [#allocation18], 4
          %s449 = int_to_ptr.vmem [resolvable:$true] %s448
          %454 = dma.hbm_to_vmem [thread:$0]  %s9, 8192, %s449, [#allocation19], 512, 512, 32
        $region48: #{tpu_custom_call.1} parent=11 // pred_fallthru
          _
        // Predicated region
        $region49: #{tpu_custom_call.1} parent=11 // pred_check
          %p455 = pneg %p267
        $region50: #{tpu_custom_call.1} parent=11 // pred_check_branch
          %457 = sbr.rel (%p455) target = $region52
        $region51: #{tpu_custom_call.1} parent=11 // pred_region
          %s459 = ssub.s32 64, 64
          %460 = vsyncadd [#allocation19], %s459
          %s462 = sshll.u32 [#allocation20], 4
          %s463 = int_to_ptr.vmem [resolvable:$true] %s462
          %465 = dma.hbm_to_vmem [thread:$0]  %s10, 64, %s463, [#allocation19]
        $region52: #{tpu_custom_call.1} parent=11 // pred_fallthru
          _
        // Predicated region
        $region53: #{tpu_custom_call.1} parent=11 // pred_check
          %p466 = pneg %p288
        $region54: #{tpu_custom_call.1} parent=11 // pred_check_branch
          %468 = sbr.rel (%p466) target = $region56
        $region55: #{tpu_custom_call.1} parent=11 // pred_region
          %s470 = ssub.s32 8192, 8192
          %471 = vsyncadd [#allocation22], %s470
          %s472 = sshll.u32 [#allocation21], 4
          %s473 = int_to_ptr.vmem [resolvable:$true] %s472
          %478 = dma.hbm_to_vmem [thread:$0]  %s11, 8192, %s473, [#allocation22], 128, 128, 8
        $region56: #{tpu_custom_call.1} parent=11 // pred_fallthru
          _
        // Predicated region
        $region57: #{tpu_custom_call.1} parent=11 // pred_check
          %p479 = pneg %p309
        $region58: #{tpu_custom_call.1} parent=11 // pred_check_branch
          %481 = sbr.rel (%p479) target = $region60
        $region59: #{tpu_custom_call.1} parent=11 // pred_region
          %s483 = ssub.s32 16, 16
          %484 = vsyncadd [#allocation22], %s483
          %s486 = sshll.u32 [#allocation23], 4
          %s487 = int_to_ptr.vmem [resolvable:$true] %s486
          %489 = dma.hbm_to_vmem [thread:$0]  %s12, 16, %s487, [#allocation22]
        $region60: #{tpu_custom_call.1} parent=11 // pred_fallthru
          _
      $region12: #{tpu_custom_call.1} parent=5 // pred_fallthru
        _
      %p490 = scmp.lt.s32.totalorder %s31, 2
      // Predicated region
      $region61: #{tpu_custom_call.1} parent=5 // pred_check
        %p491 = pneg %p490
      $region62: #{tpu_custom_call.1} parent=5 // pred_check_branch
        %493 = sbr.rel (%p491) target = $region64
      $region63: #{tpu_custom_call.1} parent=5 // pred_region
        // Predicated region
        $region65: #{tpu_custom_call.1} parent=63 // pred_check
          %p494 = pneg %p51
        $region66: #{tpu_custom_call.1} parent=63 // pred_check_branch
          %496 = sbr.rel (%p494) target = $region68
        $region67: #{tpu_custom_call.1} parent=63 // pred_region
          %s497 = sand.u32 %s41, 1
          %s498 = scalar_lea.sflag [#allocation4], %s497
          %s499 = sand.u32 %s41, 1
          %s500 = smul.addr %s499, 16
          %s501 = scalar_lea.vmem [#allocation3], %s500
          %s502 = smul.u32 2, %s31
          %s504 = ssub.s32 256, 256
          %505 = vsyncadd %s498, %s504
          %s506 = smul.addr %s502, 128
          %s507 = scalar_lea.hbm %s0, %s506
          %s508 = sshll.u32 %s501, 4
          %s509 = int_to_ptr.vmem [resolvable:$true] %s508
          %514 = dma.hbm_to_vmem [thread:$0]  %s507, 256, %s509, %s498, 128, 128, 8
        $region68: #{tpu_custom_call.1} parent=63 // pred_fallthru
          _
      $region64: #{tpu_custom_call.1} parent=5 // pred_fallthru
        _
      %p515 = scmp.le.s32.totalorder 1, %s31
      %p516 = scmp.lt.s32.totalorder %s31, 3
      %p517 = pnand %p515, %p516
      %p518 = pneg %p517
      // Predicated region
      $region69: #{tpu_custom_call.1} parent=5 // pred_check
        _
      $region70: #{tpu_custom_call.1} parent=5 // pred_check_branch
        %520 = sbr.rel (%p517) target = $region72
      $region71: #{tpu_custom_call.1} parent=5 // pred_region
        %s521 = ssub.s32 %s31, 1
        %s522 = sand.u32 %s44, 1
        %s523 = scalar_lea.sflag [#allocation4], %s522
        %s524 = sand.u32 %s44, 1
        %s525 = smul.addr %s524, 16
        %s526 = scalar_lea.vmem [#allocation3], %s525
        // Predicated region
        $region73: #{tpu_custom_call.1} parent=71 // pred_check
          %p527 = pneg %p57
        $region74: #{tpu_custom_call.1} parent=71 // pred_check_branch
          %529 = sbr.rel (%p527) target = $region76
        $region75: #{tpu_custom_call.1} parent=71 // pred_region
          %530 = dma.done %s523, 256
        $region76: #{tpu_custom_call.1} parent=71 // pred_fallthru
          _
        // Predicated region
        $region77: #{tpu_custom_call.1} parent=71 // pred_check
          %p531 = pneg %p78
        $region78: #{tpu_custom_call.1} parent=71 // pred_check_branch
          %533 = sbr.rel (%p531) target = $region80
        $region79: #{tpu_custom_call.1} parent=71 // pred_region
          %534 = dma.done [#allocation7], 16
        $region80: #{tpu_custom_call.1} parent=71 // pred_fallthru
          _
        // Predicated region
        $region81: #{tpu_custom_call.1} parent=71 // pred_check
          %p535 = pneg %p99
        $region82: #{tpu_custom_call.1} parent=71 // pred_check_branch
          %537 = sbr.rel (%p535) target = $region84
        $region83: #{tpu_custom_call.1} parent=71 // pred_region
          %538 = dma.done [#allocation7], 16
        $region84: #{tpu_custom_call.1} parent=71 // pred_fallthru
          _
        // Predicated region
        $region85: #{tpu_custom_call.1} parent=71 // pred_check
          %p539 = pneg %p120
        $region86: #{tpu_custom_call.1} parent=71 // pred_check_branch
          %541 = sbr.rel (%p539) target = $region88
        $region87: #{tpu_custom_call.1} parent=71 // pred_region
          %542 = dma.done [#allocation10], 6144
        $region88: #{tpu_custom_call.1} parent=71 // pred_fallthru
          _
        // Predicated region
        $region89: #{tpu_custom_call.1} parent=71 // pred_check
          %p543 = pneg %p141
        $region90: #{tpu_custom_call.1} parent=71 // pred_check_branch
          %545 = sbr.rel (%p543) target = $region92
        $region91: #{tpu_custom_call.1} parent=71 // pred_region
          %546 = dma.done [#allocation10], 48
        $region92: #{tpu_custom_call.1} parent=71 // pred_fallthru
          _
        // Predicated region
        $region93: #{tpu_custom_call.1} parent=71 // pred_check
          %p547 = pneg %p162
        $region94: #{tpu_custom_call.1} parent=71 // pred_check_branch
          %549 = sbr.rel (%p547) target = $region96
        $region95: #{tpu_custom_call.1} parent=71 // pred_region
          %550 = dma.done [#allocation13], 2048
        $region96: #{tpu_custom_call.1} parent=71 // pred_fallthru
          _
        // Predicated region
        $region97: #{tpu_custom_call.1} parent=71 // pred_check
          %p551 = pneg %p183
        $region98: #{tpu_custom_call.1} parent=71 // pred_check_branch
          %553 = sbr.rel (%p551) target = $region100
        $region99: #{tpu_custom_call.1} parent=71 // pred_region
          %554 = dma.done [#allocation13], 16
        $region100: #{tpu_custom_call.1} parent=71 // pred_fallthru
          _
        // Predicated region
        $region101: #{tpu_custom_call.1} parent=71 // pred_check
          %p555 = pneg %p204
        $region102: #{tpu_custom_call.1} parent=71 // pred_check_branch
          %557 = sbr.rel (%p555) target = $region104
        $region103: #{tpu_custom_call.1} parent=71 // pred_region
          %558 = dma.done [#allocation16], 16
        $region104: #{tpu_custom_call.1} parent=71 // pred_fallthru
          _
        // Predicated region
        $region105: #{tpu_custom_call.1} parent=71 // pred_check
          %p559 = pneg %p225
        $region106: #{tpu_custom_call.1} parent=71 // pred_check_branch
          %561 = sbr.rel (%p559) target = $region108
        $region107: #{tpu_custom_call.1} parent=71 // pred_region
          %562 = dma.done [#allocation16], 16
        $region108: #{tpu_custom_call.1} parent=71 // pred_fallthru
          _
        // Predicated region
        $region109: #{tpu_custom_call.1} parent=71 // pred_check
          %p563 = pneg %p246
        $region110: #{tpu_custom_call.1} parent=71 // pred_check_branch
          %565 = sbr.rel (%p563) target = $region112
        $region111: #{tpu_custom_call.1} parent=71 // pred_region
          %566 = dma.done [#allocation19], 8192
        $region112: #{tpu_custom_call.1} parent=71 // pred_fallthru
          _
        // Predicated region
        $region113: #{tpu_custom_call.1} parent=71 // pred_check
          %p567 = pneg %p267
        $region114: #{tpu_custom_call.1} parent=71 // pred_check_branch
          %569 = sbr.rel (%p567) target = $region116
        $region115: #{tpu_custom_call.1} parent=71 // pred_region
          %570 = dma.done [#allocation19], 64
        $region116: #{tpu_custom_call.1} parent=71 // pred_fallthru
          _
        // Predicated region
        $region117: #{tpu_custom_call.1} parent=71 // pred_check
          %p571 = pneg %p288
        $region118: #{tpu_custom_call.1} parent=71 // pred_check_branch
          %573 = sbr.rel (%p571) target = $region120
        $region119: #{tpu_custom_call.1} parent=71 // pred_region
          %574 = dma.done [#allocation22], 8192
        $region120: #{tpu_custom_call.1} parent=71 // pred_fallthru
          _
        // Predicated region
        $region121: #{tpu_custom_call.1} parent=71 // pred_check
          %p575 = pneg %p309
        $region122: #{tpu_custom_call.1} parent=71 // pred_check_branch
          %577 = sbr.rel (%p575) target = $region124
        $region123: #{tpu_custom_call.1} parent=71 // pred_region
          %578 = dma.done [#allocation22], 16
        $region124: #{tpu_custom_call.1} parent=71 // pred_fallthru
          _
        %s579 = sand.u32 %s44, 1
        %s580 = scalar_lea.sflag [#allocation4], %s579
        %s581 = sand.u32 %s44, 1
        %s582 = smul.addr %s581, 16
        %s583 = scalar_lea.vmem [#allocation3], %s582
        %p584 = pneg %p57
        %p585 = pneg %p54
        %p586 = pneg %p78
        %p587 = pneg %p75
        %p588 = pneg %p99
        %p589 = pneg %p96
        %p590 = pneg %p120
        %p591 = pneg %p117
        %p592 = pneg %p141
        %p593 = pneg %p138
        %p594 = pneg %p162
        %p595 = pneg %p159
        %p596 = pneg %p183
        %p597 = pneg %p180
        %p598 = pneg %p204
        %p599 = pneg %p201
        %p600 = pneg %p225
        %p601 = pneg %p222
        %p602 = pneg %p246
        %p603 = pneg %p243
        %p604 = pneg %p267
        %p605 = pneg %p264
        %p606 = pneg %p288
        %p607 = pneg %p285
        %p608 = pneg %p309
        %p609 = pneg %p306
        %p610 = pneg %p335
        %p611 = pneg %p332
        %s612 = sand.u32 %s322, 1
        %s613 = scalar_lea.sflag [#allocation5], %s612
        %s614 = sand.u32 %s322, 1
        %s615 = smul.addr %s614, 16
        %s616 = scalar_lea.vmem [#allocation24], %s615
        %s617 = smul.u32 2, %s36
        %s618 = smul.u32 2, %s36
        %v619 = vld [vmem:[%s526] sm:$0xff]
        %v620 = vld [vmem:[%s526 + $0x8] sm:$0xff]
        %v621 = vld [vmem:[#allocation6] sm:$0x1]
        %v622 = vld [vmem:[#allocation8] sm:$0x1]
        %623 = vadd.xlane.f32.xlu0 %v619
        %v624 = vpop.xlane.xlu0 %623
        %625 = vadd.xlane.f32.xlu0 %v620
        %v626 = vpop.xlane.xlu0 %625
        %v627 = vrcp.pop 128.0
        %v628 = vmul.f32 %v624, %v627
        %v629 = vmul.f32 %v626, %v627
        %v630 = vsub.f32 %v619, %v628
        %v631 = vsub.f32 %v620, %v629
        %v632 = vmul.f32 %v630, %v630
        %v633 = vmul.f32 %v631, %v631
        %634 = vadd.xlane.f32.xlu0 %v632
        %v635 = vpop.xlane.xlu0 %634
        %636 = vadd.xlane.f32.xlu0 %v633
        %v637 = vpop.xlane.xlu0 %636
        %v638 = vmul.f32 %v635, %v627
        %v639 = vmul.f32 %v637, %v627
        %v640 = vadd.f32 %v638, 1e-05
        %v641 = vadd.f32 %v639, 1e-05
        %v642 = vrsqrt.pop %v640
        %v643 = vrsqrt.pop %v641
        %v644 = vmul.f32 %v630, %v642
        %v645 = vmul.f32 %v631, %v643
        %v647 = vlaneseq
        %v648 = vshrl.u32 %v647, 7
        %v649 = vsub.s32 0, %v648
        %v650 = vrot.slane %v621, %v649
        %v652 = vmul.f32 %v644, %v650
        %v653 = vmul.f32 %v645, %v650
        %v655 = vlaneseq
        %v656 = vshrl.u32 %v655, 7
        %v657 = vsub.s32 0, %v656
        %v658 = vrot.slane %v622, %v657
        %v660 = vadd.f32 %v652, %v658
        %v661 = vadd.f32 %v653, %v658
        %v662 = vld [vmem:[#allocation9] sm:$0xff]
        %v663 = vld [vmem:[#allocation9 + $0x8] sm:$0xff]
        %v664 = vld [vmem:[#allocation9 + $0x10] sm:$0xff]
        %v665 = vld [vmem:[#allocation9 + $0x18] sm:$0xff]
        %v666 = vld [vmem:[#allocation9 + $0x20] sm:$0xff]
        %v667 = vld [vmem:[#allocation9 + $0x28] sm:$0xff]
        %v668 = vld [vmem:[#allocation9 + $0x30] sm:$0xff]
        %v669 = vld [vmem:[#allocation9 + $0x38] sm:$0xff]
        %v670 = vld [vmem:[#allocation9 + $0x40] sm:$0xff]
        %v671 = vld [vmem:[#allocation9 + $0x48] sm:$0xff]
        %v672 = vld [vmem:[#allocation9 + $0x50] sm:$0xff]
        %v673 = vld [vmem:[#allocation9 + $0x58] sm:$0xff]
        %v674 = vld [vmem:[#allocation9 + $0x60] sm:$0xff]
        %v675 = vld [vmem:[#allocation9 + $0x68] sm:$0xff]
        %v676 = vld [vmem:[#allocation9 + $0x70] sm:$0xff]
        %v677 = vld [vmem:[#allocation9 + $0x78] sm:$0xff]
        %v678 = vld [vmem:[#allocation9 + $0x80] sm:$0xff]
        %v679 = vld [vmem:[#allocation9 + $0x88] sm:$0xff]
        %v680 = vld [vmem:[#allocation9 + $0x90] sm:$0xff]
        %v681 = vld [vmem:[#allocation9 + $0x98] sm:$0xff]
        %v682 = vld [vmem:[#allocation9 + $0xa0] sm:$0xff]
        %v683 = vld [vmem:[#allocation9 + $0xa8] sm:$0xff]
        %v684 = vld [vmem:[#allocation9 + $0xb0] sm:$0xff]
        %v685 = vld [vmem:[#allocation9 + $0xb8] sm:$0xff]
        %v686 = vld [vmem:[#allocation9 + $0xc0] sm:$0xff]
        %v687 = vld [vmem:[#allocation9 + $0xc8] sm:$0xff]
        %v688 = vld [vmem:[#allocation9 + $0xd0] sm:$0xff]
        %v689 = vld [vmem:[#allocation9 + $0xd8] sm:$0xff]
        %v690 = vld [vmem:[#allocation9 + $0xe0] sm:$0xff]
        %v691 = vld [vmem:[#allocation9 + $0xe8] sm:$0xff]
        %v692 = vld [vmem:[#allocation9 + $0xf0] sm:$0xff]
        %v693 = vld [vmem:[#allocation9 + $0xf8] sm:$0xff]
        %v694 = vld [vmem:[#allocation9 + $0x100] sm:$0xff]
        %v695 = vld [vmem:[#allocation9 + $0x108] sm:$0xff]
        %v696 = vld [vmem:[#allocation9 + $0x110] sm:$0xff]
        %v697 = vld [vmem:[#allocation9 + $0x118] sm:$0xff]
        %v698 = vld [vmem:[#allocation9 + $0x120] sm:$0xff]
        %v699 = vld [vmem:[#allocation9 + $0x128] sm:$0xff]
        %v700 = vld [vmem:[#allocation9 + $0x130] sm:$0xff]
        %v701 = vld [vmem:[#allocation9 + $0x138] sm:$0xff]
        %v702 = vld [vmem:[#allocation9 + $0x140] sm:$0xff]
        %v703 = vld [vmem:[#allocation9 + $0x148] sm:$0xff]
        %v704 = vld [vmem:[#allocation9 + $0x150] sm:$0xff]
        %v705 = vld [vmem:[#allocation9 + $0x158] sm:$0xff]
        %v706 = vld [vmem:[#allocation9 + $0x160] sm:$0xff]
        %v707 = vld [vmem:[#allocation9 + $0x168] sm:$0xff]
        %v708 = vld [vmem:[#allocation9 + $0x170] sm:$0xff]
        %v709 = vld [vmem:[#allocation9 + $0x178] sm:$0xff]
        %v710 = vld [vmem:[#allocation11] sm:$0x7]
        %v712 = vlaneseq
        %v713 = vshrl.u32 %v712, 7
        %v714 = vsub.s32 0, %v713
        %v715 = vrot.slane %v710, %v714
        %v716 = vlaneseq
        %v717 = vshrl.u32 %v716, 7
        %v718 = vsub.s32 1, %v717
        %v719 = vrot.slane %v710, %v718
        %v720 = vlaneseq
        %v721 = vshrl.u32 %v720, 7
        %v722 = vsub.s32 2, %v721
        %v723 = vrot.slane %v710, %v722
        %727 = vmatprep.subr.mxu0 %v663
        %728 = vmatpush1.msra.mxu0 %v662
        %729 = vmatprep.subr.mxu0 %v666
        %730 = vmatpush1.msra.mxu0 %v665
        %731 = vmatprep.subr.mxu0 %v669
        %732 = vmatpush1.msra.mxu0 %v668
        %733 = vmatprep.subr.mxu0 %v672
        %734 = vmatpush1.msra.mxu0 %v671
        %735 = vmatprep.subr.mxu0 %v675
        %736 = vmatpush1.msra.mxu0 %v674
        %737 = vmatprep.subr.mxu0 %v678
        %738 = vmatpush1.msra.mxu0 %v677
        %739 = vmatprep.subr.mxu0 %v681
        %740 = vmatpush1.msra.mxu0 %v680
        %741 = vmatprep.subr.mxu0 %v684
        %742 = vmatpush1.msra.mxu0 %v683
        %743 = vmatprep.subr.mxu0 %v687
        %744 = vmatpush1.msra.mxu0 %v686
        %745 = vmatprep.subr.mxu0 %v690
        %746 = vmatpush1.msra.mxu0 %v689
        %747 = vmatprep.subr.mxu0 %v693
        %748 = vmatpush1.msra.mxu0 %v692
        %749 = vmatprep.subr.mxu0 %v696
        %750 = vmatpush1.msra.mxu0 %v695
        %751 = vmatprep.subr.mxu0 %v699
        %752 = vmatpush1.msra.mxu0 %v698
        %753 = vmatprep.subr.mxu0 %v702
        %754 = vmatpush1.msra.mxu0 %v701
        %755 = vmatprep.subr.mxu0 %v705
        %756 = vmatpush1.msra.mxu0 %v704
        %757 = vmatprep.subr.mxu0 %v708
        %758 = vmatpush1.msra.mxu0 %v707
        %759 = vmatprep.subr.mxu0 0.0
        %760 = vmatpush1.msra.mxu0 0.0
        %761 = vmatprep.subr.mxu0 0.0
        %762 = vmatpush1.msra.mxu0 0.0
        %763 = vmatprep.subr.mxu0 0.0
        %764 = vmatpush1.msra.mxu0 0.0
        %765 = vmatprep.subr.mxu0 0.0
        %766 = vmatpush1.msra.mxu0 0.0
        %767 = vmatprep.subr.mxu0 0.0
        %768 = vmatpush1.msra.mxu0 0.0
        %769 = vmatprep.subr.mxu0 0.0
        %770 = vmatpush1.msra.mxu0 0.0
        %771 = vmatprep.subr.mxu0 0.0
        %772 = vmatpush1.msra.mxu0 0.0
        %773 = vmatprep.subr.mxu0 0.0
        %774 = vmatpush1.msra.mxu0 0.0
        %775 = vmatprep.subr.mxu0 0.0
        %776 = vmatpush1.msra.mxu0 0.0
        %777 = vmatprep.subr.mxu0 0.0
        %778 = vmatpush1.msra.mxu0 0.0
        %779 = vmatprep.subr.mxu0 0.0
        %780 = vmatpush1.msra.mxu0 0.0
        %781 = vmatprep.subr.mxu0 0.0
        %782 = vmatpush1.msra.mxu0 0.0
        %783 = vmatprep.subr.mxu0 0.0
        %784 = vmatpush1.msra.mxu0 0.0
        %785 = vmatprep.subr.mxu0 0.0
        %786 = vmatpush1.msra.mxu0 0.0
        %787 = vmatprep.subr.mxu0 0.0
        %788 = vmatpush1.msra.mxu0 0.0
        %789 = vmatprep.subr.mxu0 0.0
        %790 = vmatpush1.msra.mxu0 0.0
        %791 = vmatprep.mubr.f32.mxu0 0.0
        %792 = vmatmul.mubr.f32.gmra.mrb[0].mxu0 %v660
        %v793 = vpop.f32.mrb[0].mxu0
        %v794 = vadd.f32 %v715, %v793
        %v795 = vpop.f32.mrb[0].mxu0
        %v796 = vadd.f32 %v719, %v795
        %797 = vmatprep.mubr.f32.mxu0 0.0
        %798 = vmatmul.mubr.f32.gmra.mrb[0].mxu0 %v661
        %v799 = vpop.f32.mrb[0].mxu0
        %v800 = vadd.f32 %v715, %v799
        %v801 = vpop.f32.mrb[0].mxu0
        %v802 = vadd.f32 %v719, %v801
        %803 = vdwg.mxu0
        %804 = vmatprep.subr.mxu0 0.0
        %805 = vmatpush1.msra.mxu0 %v664
        %806 = vmatprep.subr.mxu0 0.0
        %807 = vmatpush1.msra.mxu0 %v667
        %808 = vmatprep.subr.mxu0 0.0
        %809 = vmatpush1.msra.mxu0 %v670
        %810 = vmatprep.subr.mxu0 0.0
        %811 = vmatpush1.msra.mxu0 %v673
        %812 = vmatprep.subr.mxu0 0.0
        %813 = vmatpush1.msra.mxu0 %v676
        %814 = vmatprep.subr.mxu0 0.0
        %815 = vmatpush1.msra.mxu0 %v679
        %816 = vmatprep.subr.mxu0 0.0
        %817 = vmatpush1.msra.mxu0 %v682
        %818 = vmatprep.subr.mxu0 0.0
        %819 = vmatpush1.msra.mxu0 %v685
        %820 = vmatprep.subr.mxu0 0.0
        %821 = vmatpush1.msra.mxu0 %v688
        %822 = vmatprep.subr.mxu0 0.0
        %823 = vmatpush1.msra.mxu0 %v691
        %824 = vmatprep.subr.mxu0 0.0
        %825 = vmatpush1.msra.mxu0 %v694
        %826 = vmatprep.subr.mxu0 0.0
        %827 = vmatpush1.msra.mxu0 %v697
        %828 = vmatprep.subr.mxu0 0.0
        %829 = vmatpush1.msra.mxu0 %v700
        %830 = vmatprep.subr.mxu0 0.0
        %831 = vmatpush1.msra.mxu0 %v703
        %832 = vmatprep.subr.mxu0 0.0
        %833 = vmatpush1.msra.mxu0 %v706
        %834 = vmatprep.subr.mxu0 0.0
        %835 = vmatpush1.msra.mxu0 %v709
        %836 = vmatprep.subr.mxu0 0.0
        %837 = vmatpush1.msra.mxu0 0.0
        %838 = vmatprep.subr.mxu0 0.0
        %839 = vmatpush1.msra.mxu0 0.0
        %840 = vmatprep.subr.mxu0 0.0
        %841 = vmatpush1.msra.mxu0 0.0
        %842 = vmatprep.subr.mxu0 0.0
        %843 = vmatpush1.msra.mxu0 0.0
        %844 = vmatprep.subr.mxu0 0.0
        %845 = vmatpush1.msra.mxu0 0.0
        %846 = vmatprep.subr.mxu0 0.0
        %847 = vmatpush1.msra.mxu0 0.0
        %848 = vmatprep.subr.mxu0 0.0
        %849 = vmatpush1.msra.mxu0 0.0
        %850 = vmatprep.subr.mxu0 0.0
        %851 = vmatpush1.msra.mxu0 0.0
        %852 = vmatprep.subr.mxu0 0.0
        %853 = vmatpush1.msra.mxu0 0.0
        %854 = vmatprep.subr.mxu0 0.0
        %855 = vmatpush1.msra.mxu0 0.0
        %856 = vmatprep.subr.mxu0 0.0
        %857 = vmatpush1.msra.mxu0 0.0
        %858 = vmatprep.subr.mxu0 0.0
        %859 = vmatpush1.msra.mxu0 0.0
        %860 = vmatprep.subr.mxu0 0.0
        %861 = vmatpush1.msra.mxu0 0.0
        %862 = vmatprep.subr.mxu0 0.0
        %863 = vmatpush1.msra.mxu0 0.0
        %864 = vmatprep.subr.mxu0 0.0
        %865 = vmatpush1.msra.mxu0 0.0
        %866 = vmatprep.subr.mxu0 0.0
        %867 = vmatpush1.msra.mxu0 0.0
        %868 = vmatprep.mubr.f32.mxu0 0.0
        %869 = vmatmul.mubr.f32.gmra.mrb[0].mxu0 %v660
        %v870 = vpop.f32.mrb[0].mxu0
        %v871 = vadd.f32 %v723, %v870
        %v872 = vpop.f32.mrb[0].mxu0
        %873 = vmatprep.mubr.f32.mxu0 0.0
        %874 = vmatmul.mubr.f32.gmra.mrb[0].mxu0 %v661
        %v875 = vpop.f32.mrb[0].mxu0
        %v876 = vadd.f32 %v723, %v875
        %v877 = vpop.f32.mrb[0].mxu0
        %878 = vdwg.mxu0
        %vm879 = vcmask 261120
        %v881 = vsel %vm879, %v794, 0
        %v884 = vsel %vm879, %v796, 0
        %886 = vmatprep.subr.mxu0 0.0
        %887 = vmatpush1.xpose.msra.mxu0 %v884
        %888 = vmatprep.subr.mxu0 0.0
        %889 = vmatpush1.xpose.msra.mxu0 0.0
        %890 = vmatprep.subr.mxu0 0.0
        %891 = vmatpush1.xpose.msra.mxu0 0.0
        %892 = vmatprep.subr.mxu0 0.0
        %893 = vmatpush1.xpose.msra.mxu0 0.0
        %894 = vmatprep.subr.mxu0 0.0
        %895 = vmatpush1.xpose.msra.mxu0 0.0
        %896 = vmatprep.subr.mxu0 0.0
        %897 = vmatpush1.xpose.msra.mxu0 0.0
        %898 = vmatprep.subr.mxu0 0.0
        %899 = vmatpush1.xpose.msra.mxu0 0.0
        %900 = vmatprep.subr.mxu0 0.0
        %901 = vmatpush1.xpose.msra.mxu0 0.0
        %902 = vmatprep.subr.mxu0 0.0
        %903 = vmatpush1.xpose.msra.mxu0 0.0
        %904 = vmatprep.subr.mxu0 0.0
        %905 = vmatpush1.xpose.msra.mxu0 0.0
        %906 = vmatprep.subr.mxu0 0.0
        %907 = vmatpush1.xpose.msra.mxu0 0.0
        %908 = vmatprep.subr.mxu0 0.0
        %909 = vmatpush1.xpose.msra.mxu0 0.0
        %910 = vmatprep.subr.mxu0 0.0
        %911 = vmatpush1.xpose.msra.mxu0 0.0
        %912 = vmatprep.subr.mxu0 0.0
        %913 = vmatpush1.xpose.msra.mxu0 0.0
        %914 = vmatprep.subr.mxu0 0.0
        %915 = vmatpush1.xpose.msra.mxu0 0.0
        %916 = vmatprep.subr.mxu0 0.0
        %917 = vmatpush1.xpose.msra.mxu0 0.0
        %918 = vmatprep.subr.mxu0 0.0
        %919 = vmatpush1.xpose.msra.mxu0 0.0
        %920 = vmatprep.subr.mxu0 0.0
        %921 = vmatpush1.xpose.msra.mxu0 0.0
        %922 = vmatprep.subr.mxu0 0.0
        %923 = vmatpush1.xpose.msra.mxu0 0.0
        %924 = vmatprep.subr.mxu0 0.0
        %925 = vmatpush1.xpose.msra.mxu0 0.0
        %926 = vmatprep.subr.mxu0 0.0
        %927 = vmatpush1.xpose.msra.mxu0 0.0
        %928 = vmatprep.subr.mxu0 0.0
        %929 = vmatpush1.xpose.msra.mxu0 0.0
        %930 = vmatprep.subr.mxu0 0.0
        %931 = vmatpush1.xpose.msra.mxu0 0.0
        %932 = vmatprep.subr.mxu0 0.0
        %933 = vmatpush1.xpose.msra.mxu0 0.0
        %934 = vmatprep.subr.mxu0 0.0
        %935 = vmatpush1.xpose.msra.mxu0 0.0
        %936 = vmatprep.subr.mxu0 0.0
        %937 = vmatpush1.xpose.msra.mxu0 0.0
        %938 = vmatprep.subr.mxu0 0.0
        %939 = vmatpush1.xpose.msra.mxu0 0.0
        %940 = vmatprep.subr.mxu0 0.0
        %941 = vmatpush1.xpose.msra.mxu0 0.0
        %942 = vmatprep.subr.mxu0 0.0
        %943 = vmatpush1.xpose.msra.mxu0 0.0
        %944 = vmatprep.subr.mxu0 0.0
        %945 = vmatpush1.xpose.msra.mxu0 0.0
        %946 = vmatprep.subr.mxu0 0.0
        %947 = vmatpush1.xpose.msra.mxu0 0.0
        %948 = vmatprep.subr.mxu0 0.0
        %949 = vmatpush1.xpose.msra.mxu0 0.0
        %950 = vmatprep.mubr.f32.mxu0 0.0
        %951 = vmatmul.mubr.f32.gmra.mrb[0].mxu0 %v881
        %v952 = vpop.f32.mrb[0].mxu0
        %v953 = vadd.f32 0.0, %v952
        %v954 = vpop.f32.mrb[0].mxu0
        %955 = vdwg.mxu0
        %v957 = vsel %vm879, %v800, 0
        %v960 = vsel %vm879, %v802, 0
        %962 = vmatprep.subr.mxu0 0.0
        %963 = vmatpush1.xpose.msra.mxu0 %v960
        %964 = vmatprep.subr.mxu0 0.0
        %965 = vmatpush1.xpose.msra.mxu0 0.0
        %966 = vmatprep.subr.mxu0 0.0
        %967 = vmatpush1.xpose.msra.mxu0 0.0
        %968 = vmatprep.subr.mxu0 0.0
        %969 = vmatpush1.xpose.msra.mxu0 0.0
        %970 = vmatprep.subr.mxu0 0.0
        %971 = vmatpush1.xpose.msra.mxu0 0.0
        %972 = vmatprep.subr.mxu0 0.0
        %973 = vmatpush1.xpose.msra.mxu0 0.0
        %974 = vmatprep.subr.mxu0 0.0
        %975 = vmatpush1.xpose.msra.mxu0 0.0
        %976 = vmatprep.subr.mxu0 0.0
        %977 = vmatpush1.xpose.msra.mxu0 0.0
        %978 = vmatprep.subr.mxu0 0.0
        %979 = vmatpush1.xpose.msra.mxu0 0.0
        %980 = vmatprep.subr.mxu0 0.0
        %981 = vmatpush1.xpose.msra.mxu0 0.0
        %982 = vmatprep.subr.mxu0 0.0
        %983 = vmatpush1.xpose.msra.mxu0 0.0
        %984 = vmatprep.subr.mxu0 0.0
        %985 = vmatpush1.xpose.msra.mxu0 0.0
        %986 = vmatprep.subr.mxu0 0.0
        %987 = vmatpush1.xpose.msra.mxu0 0.0
        %988 = vmatprep.subr.mxu0 0.0
        %989 = vmatpush1.xpose.msra.mxu0 0.0
        %990 = vmatprep.subr.mxu0 0.0
        %991 = vmatpush1.xpose.msra.mxu0 0.0
        %992 = vmatprep.subr.mxu0 0.0
        %993 = vmatpush1.xpose.msra.mxu0 0.0
        %994 = vmatprep.subr.mxu0 0.0
        %995 = vmatpush1.xpose.msra.mxu0 0.0
        %996 = vmatprep.subr.mxu0 0.0
        %997 = vmatpush1.xpose.msra.mxu0 0.0
        %998 = vmatprep.subr.mxu0 0.0
        %999 = vmatpush1.xpose.msra.mxu0 0.0
        %1000 = vmatprep.subr.mxu0 0.0
        %1001 = vmatpush1.xpose.msra.mxu0 0.0
        %1002 = vmatprep.subr.mxu0 0.0
        %1003 = vmatpush1.xpose.msra.mxu0 0.0
        %1004 = vmatprep.subr.mxu0 0.0
        %1005 = vmatpush1.xpose.msra.mxu0 0.0
        %1006 = vmatprep.subr.mxu0 0.0
        %1007 = vmatpush1.xpose.msra.mxu0 0.0
        %1008 = vmatprep.subr.mxu0 0.0
        %1009 = vmatpush1.xpose.msra.mxu0 0.0
        %1010 = vmatprep.subr.mxu0 0.0
        %1011 = vmatpush1.xpose.msra.mxu0 0.0
        %1012 = vmatprep.subr.mxu0 0.0
        %1013 = vmatpush1.xpose.msra.mxu0 0.0
        %1014 = vmatprep.subr.mxu0 0.0
        %1015 = vmatpush1.xpose.msra.mxu0 0.0
        %1016 = vmatprep.subr.mxu0 0.0
        %1017 = vmatpush1.xpose.msra.mxu0 0.0
        %1018 = vmatprep.subr.mxu0 0.0
        %1019 = vmatpush1.xpose.msra.mxu0 0.0
        %1020 = vmatprep.subr.mxu0 0.0
        %1021 = vmatpush1.xpose.msra.mxu0 0.0
        %1022 = vmatprep.subr.mxu0 0.0
        %1023 = vmatpush1.xpose.msra.mxu0 0.0
        %1024 = vmatprep.subr.mxu0 0.0
        %1025 = vmatpush1.xpose.msra.mxu0 0.0
        %1026 = vmatprep.mubr.f32.mxu0 0.0
        %1027 = vmatmul.mubr.f32.gmra.mrb[0].mxu0 %v957
        %v1028 = vpop.f32.mrb[0].mxu0
        %v1029 = vadd.f32 0.0, %v1028
        %v1030 = vpop.f32.mrb[0].mxu0
        %1031 = vdwg.mxu0
        %vm1032 = vcmask 64512
        %v1033 = vsel %vm1032, %v953, -inf
        %1034 = vmax.xlane.f32.xlu0 %v1033
        %v1035 = vpop.xlane.xlu0 %1034
        %v1036 = vsel %vm1032, %v1029, -inf
        %1037 = vmax.xlane.f32.xlu0 %v1036
        %v1038 = vpop.xlane.xlu0 %1037
        %v1039 = vsub.f32 %v953, %v1035
        %v1040 = vsub.f32 %v1029, %v1038
        %v1041 = vmul.f32 %v1039, 1.442695
        %v1042 = vpow.pop %v1041
        %v1043 = vmul.f32 %v1040, 1.442695
        %v1044 = vpow.pop %v1043
        %v1045 = vsel %vm1032, %v1042, 0.0
        %1046 = vadd.xlane.f32.xlu0 %v1045
        %v1047 = vpop.xlane.xlu0 %1046
        %v1048 = vsel %vm1032, %v1044, 0.0
        %1049 = vadd.xlane.f32.xlu0 %v1048
        %v1050 = vpop.xlane.xlu0 %1049
        %v1052 = vsel %vm1032, %v1042, 0
        %1054 = vmatprep.subr.mxu0 0.0
        %1055 = vmatpush1.msra.mxu0 %v871
        %1056 = vmatprep.subr.mxu0 0.0
        %1057 = vmatpush1.msra.mxu0 0.0
        %1058 = vmatprep.subr.mxu0 0.0
        %1059 = vmatpush1.msra.mxu0 0.0
        %1060 = vmatprep.subr.mxu0 0.0
        %1061 = vmatpush1.msra.mxu0 0.0
        %1062 = vmatprep.subr.mxu0 0.0
        %1063 = vmatpush1.msra.mxu0 0.0
        %1064 = vmatprep.subr.mxu0 0.0
        %1065 = vmatpush1.msra.mxu0 0.0
        %1066 = vmatprep.subr.mxu0 0.0
        %1067 = vmatpush1.msra.mxu0 0.0
        %1068 = vmatprep.subr.mxu0 0.0
        %1069 = vmatpush1.msra.mxu0 0.0
        %1070 = vmatprep.subr.mxu0 0.0
        %1071 = vmatpush1.msra.mxu0 0.0
        %1072 = vmatprep.subr.mxu0 0.0
        %1073 = vmatpush1.msra.mxu0 0.0
        %1074 = vmatprep.subr.mxu0 0.0
        %1075 = vmatpush1.msra.mxu0 0.0
        %1076 = vmatprep.subr.mxu0 0.0
        %1077 = vmatpush1.msra.mxu0 0.0
        %1078 = vmatprep.subr.mxu0 0.0
        %1079 = vmatpush1.msra.mxu0 0.0
        %1080 = vmatprep.subr.mxu0 0.0
        %1081 = vmatpush1.msra.mxu0 0.0
        %1082 = vmatprep.subr.mxu0 0.0
        %1083 = vmatpush1.msra.mxu0 0.0
        %1084 = vmatprep.subr.mxu0 0.0
        %1085 = vmatpush1.msra.mxu0 0.0
        %1086 = vmatprep.subr.mxu0 0.0
        %1087 = vmatpush1.msra.mxu0 0.0
        %1088 = vmatprep.subr.mxu0 0.0
        %1089 = vmatpush1.msra.mxu0 0.0
        %1090 = vmatprep.subr.mxu0 0.0
        %1091 = vmatpush1.msra.mxu0 0.0
        %1092 = vmatprep.subr.mxu0 0.0
        %1093 = vmatpush1.msra.mxu0 0.0
        %1094 = vmatprep.subr.mxu0 0.0
        %1095 = vmatpush1.msra.mxu0 0.0
        %1096 = vmatprep.subr.mxu0 0.0
        %1097 = vmatpush1.msra.mxu0 0.0
        %1098 = vmatprep.subr.mxu0 0.0
        %1099 = vmatpush1.msra.mxu0 0.0
        %1100 = vmatprep.subr.mxu0 0.0
        %1101 = vmatpush1.msra.mxu0 0.0
        %1102 = vmatprep.subr.mxu0 0.0
        %1103 = vmatpush1.msra.mxu0 0.0
        %1104 = vmatprep.subr.mxu0 0.0
        %1105 = vmatpush1.msra.mxu0 0.0
        %1106 = vmatprep.subr.mxu0 0.0
        %1107 = vmatpush1.msra.mxu0 0.0
        %1108 = vmatprep.subr.mxu0 0.0
        %1109 = vmatpush1.msra.mxu0 0.0
        %1110 = vmatprep.subr.mxu0 0.0
        %1111 = vmatpush1.msra.mxu0 0.0
        %1112 = vmatprep.subr.mxu0 0.0
        %1113 = vmatpush1.msra.mxu0 0.0
        %1114 = vmatprep.subr.mxu0 0.0
        %1115 = vmatpush1.msra.mxu0 0.0
        %1116 = vmatprep.subr.mxu0 0.0
        %1117 = vmatpush1.msra.mxu0 0.0
        %1118 = vmatprep.mubr.f32.mxu0 0.0
        %1119 = vmatmul.mubr.f32.gmra.mrb[0].mxu0 %v1052
        %v1120 = vpop.f32.mrb[0].mxu0
        %v1121 = vadd.f32 0.0, %v1120
        %v1122 = vpop.f32.mrb[0].mxu0
        %1123 = vdwg.mxu0
        %v1125 = vsel %vm1032, %v1044, 0
        %1127 = vmatprep.subr.mxu0 0.0
        %1128 = vmatpush1.msra.mxu0 %v876
        %1129 = vmatprep.subr.mxu0 0.0
        %1130 = vmatpush1.msra.mxu0 0.0
        %1131 = vmatprep.subr.mxu0 0.0
        %1132 = vmatpush1.msra.mxu0 0.0
        %1133 = vmatprep.subr.mxu0 0.0
        %1134 = vmatpush1.msra.mxu0 0.0
        %1135 = vmatprep.subr.mxu0 0.0
        %1136 = vmatpush1.msra.mxu0 0.0
        %1137 = vmatprep.subr.mxu0 0.0
        %1138 = vmatpush1.msra.mxu0 0.0
        %1139 = vmatprep.subr.mxu0 0.0
        %1140 = vmatpush1.msra.mxu0 0.0
        %1141 = vmatprep.subr.mxu0 0.0
        %1142 = vmatpush1.msra.mxu0 0.0
        %1143 = vmatprep.subr.mxu0 0.0
        %1144 = vmatpush1.msra.mxu0 0.0
        %1145 = vmatprep.subr.mxu0 0.0
        %1146 = vmatpush1.msra.mxu0 0.0
        %1147 = vmatprep.subr.mxu0 0.0
        %1148 = vmatpush1.msra.mxu0 0.0
        %1149 = vmatprep.subr.mxu0 0.0
        %1150 = vmatpush1.msra.mxu0 0.0
        %1151 = vmatprep.subr.mxu0 0.0
        %1152 = vmatpush1.msra.mxu0 0.0
        %1153 = vmatprep.subr.mxu0 0.0
        %1154 = vmatpush1.msra.mxu0 0.0
        %1155 = vmatprep.subr.mxu0 0.0
        %1156 = vmatpush1.msra.mxu0 0.0
        %1157 = vmatprep.subr.mxu0 0.0
        %1158 = vmatpush1.msra.mxu0 0.0
        %1159 = vmatprep.subr.mxu0 0.0
        %1160 = vmatpush1.msra.mxu0 0.0
        %1161 = vmatprep.subr.mxu0 0.0
        %1162 = vmatpush1.msra.mxu0 0.0
        %1163 = vmatprep.subr.mxu0 0.0
        %1164 = vmatpush1.msra.mxu0 0.0
        %1165 = vmatprep.subr.mxu0 0.0
        %1166 = vmatpush1.msra.mxu0 0.0
        %1167 = vmatprep.subr.mxu0 0.0
        %1168 = vmatpush1.msra.mxu0 0.0
        %1169 = vmatprep.subr.mxu0 0.0
        %1170 = vmatpush1.msra.mxu0 0.0
        %1171 = vmatprep.subr.mxu0 0.0
        %1172 = vmatpush1.msra.mxu0 0.0
        %1173 = vmatprep.subr.mxu0 0.0
        %1174 = vmatpush1.msra.mxu0 0.0
        %1175 = vmatprep.subr.mxu0 0.0
        %1176 = vmatpush1.msra.mxu0 0.0
        %1177 = vmatprep.subr.mxu0 0.0
        %1178 = vmatpush1.msra.mxu0 0.0
        %1179 = vmatprep.subr.mxu0 0.0
        %1180 = vmatpush1.msra.mxu0 0.0
        %1181 = vmatprep.subr.mxu0 0.0
        %1182 = vmatpush1.msra.mxu0 0.0
        %1183 = vmatprep.subr.mxu0 0.0
        %1184 = vmatpush1.msra.mxu0 0.0
        %1185 = vmatprep.subr.mxu0 0.0
        %1186 = vmatpush1.msra.mxu0 0.0
        %1187 = vmatprep.subr.mxu0 0.0
        %1188 = vmatpush1.msra.mxu0 0.0
        %1189 = vmatprep.subr.mxu0 0.0
        %1190 = vmatpush1.msra.mxu0 0.0
        %1191 = vmatprep.mubr.f32.mxu0 0.0
        %1192 = vmatmul.mubr.f32.gmra.mrb[0].mxu0 %v1125
        %v1193 = vpop.f32.mrb[0].mxu0
        %v1194 = vadd.f32 0.0, %v1193
        %v1195 = vpop.f32.mrb[0].mxu0
        %1196 = vdwg.mxu0
        %v1197 = vrcp.pop %v1047
        %v1198 = vrcp.pop %v1050
        %v1199 = vmul.f32 %v1121, %v1197
        %v1200 = vmul.f32 %v1194, %v1198
        %1201 = vst.msk [vmem:[#allocation2] sm:$0xff] %vm879, %v1199
        %1202 = vst.msk [vmem:[#allocation2 + $0x8] sm:$0xff] %vm879, %v1200
        %1203 = vrot.lane.b32.xlu0 %v794, 96
        %v1204 = vpop.permute.xlu0 %1203
        %1205 = vrot.lane.b32.xlu0 %v796, 96
        %v1206 = vpop.permute.xlu0 %1205
        %v1207 = vsel %vm879, %v1204, 0
        %v1209 = vsel %vm879, %v1206, 0
        %1211 = vmatprep.subr.mxu0 0.0
        %1212 = vmatpush1.xpose.msra.mxu0 %v1209
        %1213 = vmatprep.subr.mxu0 0.0
        %1214 = vmatpush1.xpose.msra.mxu0 0.0
        %1215 = vmatprep.subr.mxu0 0.0
        %1216 = vmatpush1.xpose.msra.mxu0 0.0
        %1217 = vmatprep.subr.mxu0 0.0
        %1218 = vmatpush1.xpose.msra.mxu0 0.0
        %1219 = vmatprep.subr.mxu0 0.0
        %1220 = vmatpush1.xpose.msra.mxu0 0.0
        %1221 = vmatprep.subr.mxu0 0.0
        %1222 = vmatpush1.xpose.msra.mxu0 0.0
        %1223 = vmatprep.subr.mxu0 0.0
        %1224 = vmatpush1.xpose.msra.mxu0 0.0
        %1225 = vmatprep.subr.mxu0 0.0
        %1226 = vmatpush1.xpose.msra.mxu0 0.0
        %1227 = vmatprep.subr.mxu0 0.0
        %1228 = vmatpush1.xpose.msra.mxu0 0.0
        %1229 = vmatprep.subr.mxu0 0.0
        %1230 = vmatpush1.xpose.msra.mxu0 0.0
        %1231 = vmatprep.subr.mxu0 0.0
        %1232 = vmatpush1.xpose.msra.mxu0 0.0
        %1233 = vmatprep.subr.mxu0 0.0
        %1234 = vmatpush1.xpose.msra.mxu0 0.0
        %1235 = vmatprep.subr.mxu0 0.0
        %1236 = vmatpush1.xpose.msra.mxu0 0.0
        %1237 = vmatprep.subr.mxu0 0.0
        %1238 = vmatpush1.xpose.msra.mxu0 0.0
        %1239 = vmatprep.subr.mxu0 0.0
        %1240 = vmatpush1.xpose.msra.mxu0 0.0
        %1241 = vmatprep.subr.mxu0 0.0
        %1242 = vmatpush1.xpose.msra.mxu0 0.0
        %1243 = vmatprep.subr.mxu0 0.0
        %1244 = vmatpush1.xpose.msra.mxu0 0.0
        %1245 = vmatprep.subr.mxu0 0.0
        %1246 = vmatpush1.xpose.msra.mxu0 0.0
        %1247 = vmatprep.subr.mxu0 0.0
        %1248 = vmatpush1.xpose.msra.mxu0 0.0
        %1249 = vmatprep.subr.mxu0 0.0
        %1250 = vmatpush1.xpose.msra.mxu0 0.0
        %1251 = vmatprep.subr.mxu0 0.0
        %1252 = vmatpush1.xpose.msra.mxu0 0.0
        %1253 = vmatprep.subr.mxu0 0.0
        %1254 = vmatpush1.xpose.msra.mxu0 0.0
        %1255 = vmatprep.subr.mxu0 0.0
        %1256 = vmatpush1.xpose.msra.mxu0 0.0
        %1257 = vmatprep.subr.mxu0 0.0
        %1258 = vmatpush1.xpose.msra.mxu0 0.0
        %1259 = vmatprep.subr.mxu0 0.0
        %1260 = vmatpush1.xpose.msra.mxu0 0.0
        %1261 = vmatprep.subr.mxu0 0.0
        %1262 = vmatpush1.xpose.msra.mxu0 0.0
        %1263 = vmatprep.subr.mxu0 0.0
        %1264 = vmatpush1.xpose.msra.mxu0 0.0
        %1265 = vmatprep.subr.mxu0 0.0
        %1266 = vmatpush1.xpose.msra.mxu0 0.0
        %1267 = vmatprep.subr.mxu0 0.0
        %1268 = vmatpush1.xpose.msra.mxu0 0.0
        %1269 = vmatprep.subr.mxu0 0.0
        %1270 = vmatpush1.xpose.msra.mxu0 0.0
        %1271 = vmatprep.subr.mxu0 0.0
        %1272 = vmatpush1.xpose.msra.mxu0 0.0
        %1273 = vmatprep.subr.mxu0 0.0
        %1274 = vmatpush1.xpose.msra.mxu0 0.0
        %1275 = vmatprep.mubr.f32.mxu0 0.0
        %1276 = vmatmul.mubr.f32.gmra.mrb[0].mxu0 %v1207
        %v1277 = vpop.f32.mrb[0].mxu0
        %v1278 = vadd.f32 0.0, %v1277
        %v1279 = vpop.f32.mrb[0].mxu0
        %1280 = vdwg.mxu0
        %1281 = vrot.lane.b32.xlu0 %v800, 96
        %v1282 = vpop.permute.xlu0 %1281
        %1283 = vrot.lane.b32.xlu0 %v802, 96
        %v1284 = vpop.permute.xlu0 %1283
        %v1285 = vsel %vm879, %v1282, 0
        %v1287 = vsel %vm879, %v1284, 0
        %1289 = vmatprep.subr.mxu0 0.0
        %1290 = vmatpush1.xpose.msra.mxu0 %v1287
        %1291 = vmatprep.subr.mxu0 0.0
        %1292 = vmatpush1.xpose.msra.mxu0 0.0
        %1293 = vmatprep.subr.mxu0 0.0
        %1294 = vmatpush1.xpose.msra.mxu0 0.0
        %1295 = vmatprep.subr.mxu0 0.0
        %1296 = vmatpush1.xpose.msra.mxu0 0.0
        %1297 = vmatprep.subr.mxu0 0.0
        %1298 = vmatpush1.xpose.msra.mxu0 0.0
        %1299 = vmatprep.subr.mxu0 0.0
        %1300 = vmatpush1.xpose.msra.mxu0 0.0
        %1301 = vmatprep.subr.mxu0 0.0
        %1302 = vmatpush1.xpose.msra.mxu0 0.0
        %1303 = vmatprep.subr.mxu0 0.0
        %1304 = vmatpush1.xpose.msra.mxu0 0.0
        %1305 = vmatprep.subr.mxu0 0.0
        %1306 = vmatpush1.xpose.msra.mxu0 0.0
        %1307 = vmatprep.subr.mxu0 0.0
        %1308 = vmatpush1.xpose.msra.mxu0 0.0
        %1309 = vmatprep.subr.mxu0 0.0
        %1310 = vmatpush1.xpose.msra.mxu0 0.0
        %1311 = vmatprep.subr.mxu0 0.0
        %1312 = vmatpush1.xpose.msra.mxu0 0.0
        %1313 = vmatprep.subr.mxu0 0.0
        %1314 = vmatpush1.xpose.msra.mxu0 0.0
        %1315 = vmatprep.subr.mxu0 0.0
        %1316 = vmatpush1.xpose.msra.mxu0 0.0
        %1317 = vmatprep.subr.mxu0 0.0
        %1318 = vmatpush1.xpose.msra.mxu0 0.0
        %1319 = vmatprep.subr.mxu0 0.0
        %1320 = vmatpush1.xpose.msra.mxu0 0.0
        %1321 = vmatprep.subr.mxu0 0.0
        %1322 = vmatpush1.xpose.msra.mxu0 0.0
        %1323 = vmatprep.subr.mxu0 0.0
        %1324 = vmatpush1.xpose.msra.mxu0 0.0
        %1325 = vmatprep.subr.mxu0 0.0
        %1326 = vmatpush1.xpose.msra.mxu0 0.0
        %1327 = vmatprep.subr.mxu0 0.0
        %1328 = vmatpush1.xpose.msra.mxu0 0.0
        %1329 = vmatprep.subr.mxu0 0.0
        %1330 = vmatpush1.xpose.msra.mxu0 0.0
        %1331 = vmatprep.subr.mxu0 0.0
        %1332 = vmatpush1.xpose.msra.mxu0 0.0
        %1333 = vmatprep.subr.mxu0 0.0
        %1334 = vmatpush1.xpose.msra.mxu0 0.0
        %1335 = vmatprep.subr.mxu0 0.0
        %1336 = vmatpush1.xpose.msra.mxu0 0.0
        %1337 = vmatprep.subr.mxu0 0.0
        %1338 = vmatpush1.xpose.msra.mxu0 0.0
        %1339 = vmatprep.subr.mxu0 0.0
        %1340 = vmatpush1.xpose.msra.mxu0 0.0
        %1341 = vmatprep.subr.mxu0 0.0
        %1342 = vmatpush1.xpose.msra.mxu0 0.0
        %1343 = vmatprep.subr.mxu0 0.0
        %1344 = vmatpush1.xpose.msra.mxu0 0.0
        %1345 = vmatprep.subr.mxu0 0.0
        %1346 = vmatpush1.xpose.msra.mxu0 0.0
        %1347 = vmatprep.subr.mxu0 0.0
        %1348 = vmatpush1.xpose.msra.mxu0 0.0
        %1349 = vmatprep.subr.mxu0 0.0
        %1350 = vmatpush1.xpose.msra.mxu0 0.0
        %1351 = vmatprep.subr.mxu0 0.0
        %1352 = vmatpush1.xpose.msra.mxu0 0.0
        %1353 = vmatprep.mubr.f32.mxu0 0.0
        %1354 = vmatmul.mubr.f32.gmra.mrb[0].mxu0 %v1285
        %v1355 = vpop.f32.mrb[0].mxu0
        %v1356 = vadd.f32 0.0, %v1355
        %v1357 = vpop.f32.mrb[0].mxu0
        %1358 = vdwg.mxu0
        %v1359 = vsel %vm1032, %v1278, -inf
        %1360 = vmax.xlane.f32.xlu0 %v1359
        %v1361 = vpop.xlane.xlu0 %1360
        %v1362 = vsel %vm1032, %v1356, -inf
        %1363 = vmax.xlane.f32.xlu0 %v1362
        %v1364 = vpop.xlane.xlu0 %1363
        %v1365 = vsub.f32 %v1278, %v1361
        %v1366 = vsub.f32 %v1356, %v1364
        %v1367 = vmul.f32 %v1365, 1.442695
        %v1368 = vpow.pop %v1367
        %v1369 = vmul.f32 %v1366, 1.442695
        %v1370 = vpow.pop %v1369
        %v1371 = vsel %vm1032, %v1368, 0.0
        %1372 = vadd.xlane.f32.xlu0 %v1371
        %v1373 = vpop.xlane.xlu0 %1372
        %v1374 = vsel %vm1032, %v1370, 0.0
        %1375 = vadd.xlane.f32.xlu0 %v1374
        %v1376 = vpop.xlane.xlu0 %1375
        %1378 = vrot.lane.b32.xlu0 %v871, 96
        %v1379 = vpop.permute.xlu0 %1378
        %v1382 = vsel %vm1032, %v1368, 0
        %1384 = vmatprep.subr.mxu0 0.0
        %1385 = vmatpush1.msra.mxu0 %v1379
        %1386 = vmatprep.subr.mxu0 0.0
        %1387 = vmatpush1.msra.mxu0 0.0
        %1388 = vmatprep.subr.mxu0 0.0
        %1389 = vmatpush1.msra.mxu0 0.0
        %1390 = vmatprep.subr.mxu0 0.0
        %1391 = vmatpush1.msra.mxu0 0.0
        %1392 = vmatprep.subr.mxu0 0.0
        %1393 = vmatpush1.msra.mxu0 0.0
        %1394 = vmatprep.subr.mxu0 0.0
        %1395 = vmatpush1.msra.mxu0 0.0
        %1396 = vmatprep.subr.mxu0 0.0
        %1397 = vmatpush1.msra.mxu0 0.0
        %1398 = vmatprep.subr.mxu0 0.0
        %1399 = vmatpush1.msra.mxu0 0.0
        %1400 = vmatprep.subr.mxu0 0.0
        %1401 = vmatpush1.msra.mxu0 0.0
        %1402 = vmatprep.subr.mxu0 0.0
        %1403 = vmatpush1.msra.mxu0 0.0
        %1404 = vmatprep.subr.mxu0 0.0
        %1405 = vmatpush1.msra.mxu0 0.0
        %1406 = vmatprep.subr.mxu0 0.0
        %1407 = vmatpush1.msra.mxu0 0.0
        %1408 = vmatprep.subr.mxu0 0.0
        %1409 = vmatpush1.msra.mxu0 0.0
        %1410 = vmatprep.subr.mxu0 0.0
        %1411 = vmatpush1.msra.mxu0 0.0
        %1412 = vmatprep.subr.mxu0 0.0
        %1413 = vmatpush1.msra.mxu0 0.0
        %1414 = vmatprep.subr.mxu0 0.0
        %1415 = vmatpush1.msra.mxu0 0.0
        %1416 = vmatprep.subr.mxu0 0.0
        %1417 = vmatpush1.msra.mxu0 0.0
        %1418 = vmatprep.subr.mxu0 0.0
        %1419 = vmatpush1.msra.mxu0 0.0
        %1420 = vmatprep.subr.mxu0 0.0
        %1421 = vmatpush1.msra.mxu0 0.0
        %1422 = vmatprep.subr.mxu0 0.0
        %1423 = vmatpush1.msra.mxu0 0.0
        %1424 = vmatprep.subr.mxu0 0.0
        %1425 = vmatpush1.msra.mxu0 0.0
        %1426 = vmatprep.subr.mxu0 0.0
        %1427 = vmatpush1.msra.mxu0 0.0
        %1428 = vmatprep.subr.mxu0 0.0
        %1429 = vmatpush1.msra.mxu0 0.0
        %1430 = vmatprep.subr.mxu0 0.0
        %1431 = vmatpush1.msra.mxu0 0.0
        %1432 = vmatprep.subr.mxu0 0.0
        %1433 = vmatpush1.msra.mxu0 0.0
        %1434 = vmatprep.subr.mxu0 0.0
        %1435 = vmatpush1.msra.mxu0 0.0
        %1436 = vmatprep.subr.mxu0 0.0
        %1437 = vmatpush1.msra.mxu0 0.0
        %1438 = vmatprep.subr.mxu0 0.0
        %1439 = vmatpush1.msra.mxu0 0.0
        %1440 = vmatprep.subr.mxu0 0.0
        %1441 = vmatpush1.msra.mxu0 0.0
        %1442 = vmatprep.subr.mxu0 0.0
        %1443 = vmatpush1.msra.mxu0 0.0
        %1444 = vmatprep.subr.mxu0 0.0
        %1445 = vmatpush1.msra.mxu0 0.0
        %1446 = vmatprep.subr.mxu0 0.0
        %1447 = vmatpush1.msra.mxu0 0.0
        %1448 = vmatprep.mubr.f32.mxu0 0.0
        %1449 = vmatmul.mubr.f32.gmra.mrb[0].mxu0 %v1382
        %v1450 = vpop.f32.mrb[0].mxu0
        %v1451 = vadd.f32 0.0, %v1450
        %v1452 = vpop.f32.mrb[0].mxu0
        %1453 = vdwg.mxu0
        %1455 = vrot.lane.b32.xlu0 %v876, 96
        %v1456 = vpop.permute.xlu0 %1455
        %v1459 = vsel %vm1032, %v1370, 0
        %1461 = vmatprep.subr.mxu0 0.0
        %1462 = vmatpush1.msra.mxu0 %v1456
        %1463 = vmatprep.subr.mxu0 0.0
        %1464 = vmatpush1.msra.mxu0 0.0
        %1465 = vmatprep.subr.mxu0 0.0
        %1466 = vmatpush1.msra.mxu0 0.0
        %1467 = vmatprep.subr.mxu0 0.0
        %1468 = vmatpush1.msra.mxu0 0.0
        %1469 = vmatprep.subr.mxu0 0.0
        %1470 = vmatpush1.msra.mxu0 0.0
        %1471 = vmatprep.subr.mxu0 0.0
        %1472 = vmatpush1.msra.mxu0 0.0
        %1473 = vmatprep.subr.mxu0 0.0
        %1474 = vmatpush1.msra.mxu0 0.0
        %1475 = vmatprep.subr.mxu0 0.0
        %1476 = vmatpush1.msra.mxu0 0.0
        %1477 = vmatprep.subr.mxu0 0.0
        %1478 = vmatpush1.msra.mxu0 0.0
        %1479 = vmatprep.subr.mxu0 0.0
        %1480 = vmatpush1.msra.mxu0 0.0
        %1481 = vmatprep.subr.mxu0 0.0
        %1482 = vmatpush1.msra.mxu0 0.0
        %1483 = vmatprep.subr.mxu0 0.0
        %1484 = vmatpush1.msra.mxu0 0.0
        %1485 = vmatprep.subr.mxu0 0.0
        %1486 = vmatpush1.msra.mxu0 0.0
        %1487 = vmatprep.subr.mxu0 0.0
        %1488 = vmatpush1.msra.mxu0 0.0
        %1489 = vmatprep.subr.mxu0 0.0
        %1490 = vmatpush1.msra.mxu0 0.0
        %1491 = vmatprep.subr.mxu0 0.0
        %1492 = vmatpush1.msra.mxu0 0.0
        %1493 = vmatprep.subr.mxu0 0.0
        %1494 = vmatpush1.msra.mxu0 0.0
        %1495 = vmatprep.subr.mxu0 0.0
        %1496 = vmatpush1.msra.mxu0 0.0
        %1497 = vmatprep.subr.mxu0 0.0
        %1498 = vmatpush1.msra.mxu0 0.0
        %1499 = vmatprep.subr.mxu0 0.0
        %1500 = vmatpush1.msra.mxu0 0.0
        %1501 = vmatprep.subr.mxu0 0.0
        %1502 = vmatpush1.msra.mxu0 0.0
        %1503 = vmatprep.subr.mxu0 0.0
        %1504 = vmatpush1.msra.mxu0 0.0
        %1505 = vmatprep.subr.mxu0 0.0
        %1506 = vmatpush1.msra.mxu0 0.0
        %1507 = vmatprep.subr.mxu0 0.0
        %1508 = vmatpush1.msra.mxu0 0.0
        %1509 = vmatprep.subr.mxu0 0.0
        %1510 = vmatpush1.msra.mxu0 0.0
        %1511 = vmatprep.subr.mxu0 0.0
        %1512 = vmatpush1.msra.mxu0 0.0
        %1513 = vmatprep.subr.mxu0 0.0
        %1514 = vmatpush1.msra.mxu0 0.0
        %1515 = vmatprep.subr.mxu0 0.0
        %1516 = vmatpush1.msra.mxu0 0.0
        %1517 = vmatprep.subr.mxu0 0.0
        %1518 = vmatpush1.msra.mxu0 0.0
        %1519 = vmatprep.subr.mxu0 0.0
        %1520 = vmatpush1.msra.mxu0 0.0
        %1521 = vmatprep.subr.mxu0 0.0
        %1522 = vmatpush1.msra.mxu0 0.0
        %1523 = vmatprep.subr.mxu0 0.0
        %1524 = vmatpush1.msra.mxu0 0.0
        %1525 = vmatprep.mubr.f32.mxu0 0.0
        %1526 = vmatmul.mubr.f32.gmra.mrb[0].mxu0 %v1459
        %v1527 = vpop.f32.mrb[0].mxu0
        %v1528 = vadd.f32 0.0, %v1527
        %v1529 = vpop.f32.mrb[0].mxu0
        %1530 = vdwg.mxu0
        %v1531 = vrcp.pop %v1373
        %v1532 = vrcp.pop %v1376
        %v1533 = vmul.f32 %v1451, %v1531
        %v1534 = vmul.f32 %v1528, %v1532
        %1537 = vrot.lane.b32.xlu0 %v1533, 32
        %v1538 = vpop.permute.xlu0 %1537
        %1539 = vrot.lane.b32.xlu0 %v1534, 32
        %v1540 = vpop.permute.xlu0 %1539
        %vm1543 = vcmask 523520
        %1544 = vst.msk [vmem:[#allocation2] sm:$0xff] %vm1543, %v1538
        %1545 = vst.msk [vmem:[#allocation2 + $0x8] sm:$0xff] %vm1543, %v1540
        %1546 = vrot.lane.b32.xlu0 %v794, 64
        %v1547 = vpop.permute.xlu0 %1546
        %1548 = vrot.lane.b32.xlu0 %v796, 64
        %v1549 = vpop.permute.xlu0 %1548
        %v1550 = vsel %vm879, %v1547, 0
        %v1552 = vsel %vm879, %v1549, 0
        %1554 = vmatprep.subr.mxu0 0.0
        %1555 = vmatpush1.xpose.msra.mxu0 %v1552
        %1556 = vmatprep.subr.mxu0 0.0
        %1557 = vmatpush1.xpose.msra.mxu0 0.0
        %1558 = vmatprep.subr.mxu0 0.0
        %1559 = vmatpush1.xpose.msra.mxu0 0.0
        %1560 = vmatprep.subr.mxu0 0.0
        %1561 = vmatpush1.xpose.msra.mxu0 0.0
        %1562 = vmatprep.subr.mxu0 0.0
        %1563 = vmatpush1.xpose.msra.mxu0 0.0
        %1564 = vmatprep.subr.mxu0 0.0
        %1565 = vmatpush1.xpose.msra.mxu0 0.0
        %1566 = vmatprep.subr.mxu0 0.0
        %1567 = vmatpush1.xpose.msra.mxu0 0.0
        %1568 = vmatprep.subr.mxu0 0.0
        %1569 = vmatpush1.xpose.msra.mxu0 0.0
        %1570 = vmatprep.subr.mxu0 0.0
        %1571 = vmatpush1.xpose.msra.mxu0 0.0
        %1572 = vmatprep.subr.mxu0 0.0
        %1573 = vmatpush1.xpose.msra.mxu0 0.0
        %1574 = vmatprep.subr.mxu0 0.0
        %1575 = vmatpush1.xpose.msra.mxu0 0.0
        %1576 = vmatprep.subr.mxu0 0.0
        %1577 = vmatpush1.xpose.msra.mxu0 0.0
        %1578 = vmatprep.subr.mxu0 0.0
        %1579 = vmatpush1.xpose.msra.mxu0 0.0
        %1580 = vmatprep.subr.mxu0 0.0
        %1581 = vmatpush1.xpose.msra.mxu0 0.0
        %1582 = vmatprep.subr.mxu0 0.0
        %1583 = vmatpush1.xpose.msra.mxu0 0.0
        %1584 = vmatprep.subr.mxu0 0.0
        %1585 = vmatpush1.xpose.msra.mxu0 0.0
        %1586 = vmatprep.subr.mxu0 0.0
        %1587 = vmatpush1.xpose.msra.mxu0 0.0
        %1588 = vmatprep.subr.mxu0 0.0
        %1589 = vmatpush1.xpose.msra.mxu0 0.0
        %1590 = vmatprep.subr.mxu0 0.0
        %1591 = vmatpush1.xpose.msra.mxu0 0.0
        %1592 = vmatprep.subr.mxu0 0.0
        %1593 = vmatpush1.xpose.msra.mxu0 0.0
        %1594 = vmatprep.subr.mxu0 0.0
        %1595 = vmatpush1.xpose.msra.mxu0 0.0
        %1596 = vmatprep.subr.mxu0 0.0
        %1597 = vmatpush1.xpose.msra.mxu0 0.0
        %1598 = vmatprep.subr.mxu0 0.0
        %1599 = vmatpush1.xpose.msra.mxu0 0.0
        %1600 = vmatprep.subr.mxu0 0.0
        %1601 = vmatpush1.xpose.msra.mxu0 0.0
        %1602 = vmatprep.subr.mxu0 0.0
        %1603 = vmatpush1.xpose.msra.mxu0 0.0
        %1604 = vmatprep.subr.mxu0 0.0
        %1605 = vmatpush1.xpose.msra.mxu0 0.0
        %1606 = vmatprep.subr.mxu0 0.0
        %1607 = vmatpush1.xpose.msra.mxu0 0.0
        %1608 = vmatprep.subr.mxu0 0.0
        %1609 = vmatpush1.xpose.msra.mxu0 0.0
        %1610 = vmatprep.subr.mxu0 0.0
        %1611 = vmatpush1.xpose.msra.mxu0 0.0
        %1612 = vmatprep.subr.mxu0 0.0
        %1613 = vmatpush1.xpose.msra.mxu0 0.0
        %1614 = vmatprep.subr.mxu0 0.0
        %1615 = vmatpush1.xpose.msra.mxu0 0.0
        %1616 = vmatprep.subr.mxu0 0.0
        %1617 = vmatpush1.xpose.msra.mxu0 0.0
        %1618 = vmatprep.mubr.f32.mxu0 0.0
        %1619 = vmatmul.mubr.f32.gmra.mrb[0].mxu0 %v1550
        %v1620 = vpop.f32.mrb[0].mxu0
        %v1621 = vadd.f32 0.0, %v1620
        %v1622 = vpop.f32.mrb[0].mxu0
        %1623 = vdwg.mxu0
        %1624 = vrot.lane.b32.xlu0 %v800, 64
        %v1625 = vpop.permute.xlu0 %1624
        %1626 = vrot.lane.b32.xlu0 %v802, 64
        %v1627 = vpop.permute.xlu0 %1626
        %v1628 = vsel %vm879, %v1625, 0
        %v1630 = vsel %vm879, %v1627, 0
        %1632 = vmatprep.subr.mxu0 0.0
        %1633 = vmatpush1.xpose.msra.mxu0 %v1630
        %1634 = vmatprep.subr.mxu0 0.0
        %1635 = vmatpush1.xpose.msra.mxu0 0.0
        %1636 = vmatprep.subr.mxu0 0.0
        %1637 = vmatpush1.xpose.msra.mxu0 0.0
        %1638 = vmatprep.subr.mxu0 0.0
        %1639 = vmatpush1.xpose.msra.mxu0 0.0
        %1640 = vmatprep.subr.mxu0 0.0
        %1641 = vmatpush1.xpose.msra.mxu0 0.0
        %1642 = vmatprep.subr.mxu0 0.0
        %1643 = vmatpush1.xpose.msra.mxu0 0.0
        %1644 = vmatprep.subr.mxu0 0.0
        %1645 = vmatpush1.xpose.msra.mxu0 0.0
        %1646 = vmatprep.subr.mxu0 0.0
        %1647 = vmatpush1.xpose.msra.mxu0 0.0
        %1648 = vmatprep.subr.mxu0 0.0
        %1649 = vmatpush1.xpose.msra.mxu0 0.0
        %1650 = vmatprep.subr.mxu0 0.0
        %1651 = vmatpush1.xpose.msra.mxu0 0.0
        %1652 = vmatprep.subr.mxu0 0.0
        %1653 = vmatpush1.xpose.msra.mxu0 0.0
        %1654 = vmatprep.subr.mxu0 0.0
        %1655 = vmatpush1.xpose.msra.mxu0 0.0
        %1656 = vmatprep.subr.mxu0 0.0
        %1657 = vmatpush1.xpose.msra.mxu0 0.0
        %1658 = vmatprep.subr.mxu0 0.0
        %1659 = vmatpush1.xpose.msra.mxu0 0.0
        %1660 = vmatprep.subr.mxu0 0.0
        %1661 = vmatpush1.xpose.msra.mxu0 0.0
        %1662 = vmatprep.subr.mxu0 0.0
        %1663 = vmatpush1.xpose.msra.mxu0 0.0
        %1664 = vmatprep.subr.mxu0 0.0
        %1665 = vmatpush1.xpose.msra.mxu0 0.0
        %1666 = vmatprep.subr.mxu0 0.0
        %1667 = vmatpush1.xpose.msra.mxu0 0.0
        %1668 = vmatprep.subr.mxu0 0.0
        %1669 = vmatpush1.xpose.msra.mxu0 0.0
        %1670 = vmatprep.subr.mxu0 0.0
        %1671 = vmatpush1.xpose.msra.mxu0 0.0
        %1672 = vmatprep.subr.mxu0 0.0
        %1673 = vmatpush1.xpose.msra.mxu0 0.0
        %1674 = vmatprep.subr.mxu0 0.0
        %1675 = vmatpush1.xpose.msra.mxu0 0.0
        %1676 = vmatprep.subr.mxu0 0.0
        %1677 = vmatpush1.xpose.msra.mxu0 0.0
        %1678 = vmatprep.subr.mxu0 0.0
        %1679 = vmatpush1.xpose.msra.mxu0 0.0
        %1680 = vmatprep.subr.mxu0 0.0
        %1681 = vmatpush1.xpose.msra.mxu0 0.0
        %1682 = vmatprep.subr.mxu0 0.0
        %1683 = vmatpush1.xpose.msra.mxu0 0.0
        %1684 = vmatprep.subr.mxu0 0.0
        %1685 = vmatpush1.xpose.msra.mxu0 0.0
        %1686 = vmatprep.subr.mxu0 0.0
        %1687 = vmatpush1.xpose.msra.mxu0 0.0
        %1688 = vmatprep.subr.mxu0 0.0
        %1689 = vmatpush1.xpose.msra.mxu0 0.0
        %1690 = vmatprep.subr.mxu0 0.0
        %1691 = vmatpush1.xpose.msra.mxu0 0.0
        %1692 = vmatprep.subr.mxu0 0.0
        %1693 = vmatpush1.xpose.msra.mxu0 0.0
        %1694 = vmatprep.subr.mxu0 0.0
        %1695 = vmatpush1.xpose.msra.mxu0 0.0
        %1696 = vmatprep.mubr.f32.mxu0 0.0
        %1697 = vmatmul.mubr.f32.gmra.mrb[0].mxu0 %v1628
        %v1698 = vpop.f32.mrb[0].mxu0
        %v1699 = vadd.f32 0.0, %v1698
        %v1700 = vpop.f32.mrb[0].mxu0
        %1701 = vdwg.mxu0
        %v1702 = vsel %vm1032, %v1621, -inf
        %1703 = vmax.xlane.f32.xlu0 %v1702
        %v1704 = vpop.xlane.xlu0 %1703
        %v1705 = vsel %vm1032, %v1699, -inf
        %1706 = vmax.xlane.f32.xlu0 %v1705
        %v1707 = vpop.xlane.xlu0 %1706
        %v1708 = vsub.f32 %v1621, %v1704
        %v1709 = vsub.f32 %v1699, %v1707
        %v1710 = vmul.f32 %v1708, 1.442695
        %v1711 = vpow.pop %v1710
        %v1712 = vmul.f32 %v1709, 1.442695
        %v1713 = vpow.pop %v1712
        %v1714 = vsel %vm1032, %v1711, 0.0
        %1715 = vadd.xlane.f32.xlu0 %v1714
        %v1716 = vpop.xlane.xlu0 %1715
        %v1717 = vsel %vm1032, %v1713, 0.0
        %1718 = vadd.xlane.f32.xlu0 %v1717
        %v1719 = vpop.xlane.xlu0 %1718
        %1720 = vrot.lane.b32.xlu0 %v871, 64
        %v1721 = vpop.permute.xlu0 %1720
        %v1724 = vsel %vm1032, %v1711, 0
        %1726 = vmatprep.subr.mxu0 0.0
        %1727 = vmatpush1.msra.mxu0 %v1721
        %1728 = vmatprep.subr.mxu0 0.0
        %1729 = vmatpush1.msra.mxu0 0.0
        %1730 = vmatprep.subr.mxu0 0.0
        %1731 = vmatpush1.msra.mxu0 0.0
        %1732 = vmatprep.subr.mxu0 0.0
        %1733 = vmatpush1.msra.mxu0 0.0
        %1734 = vmatprep.subr.mxu0 0.0
        %1735 = vmatpush1.msra.mxu0 0.0
        %1736 = vmatprep.subr.mxu0 0.0
        %1737 = vmatpush1.msra.mxu0 0.0
        %1738 = vmatprep.subr.mxu0 0.0
        %1739 = vmatpush1.msra.mxu0 0.0
        %1740 = vmatprep.subr.mxu0 0.0
        %1741 = vmatpush1.msra.mxu0 0.0
        %1742 = vmatprep.subr.mxu0 0.0
        %1743 = vmatpush1.msra.mxu0 0.0
        %1744 = vmatprep.subr.mxu0 0.0
        %1745 = vmatpush1.msra.mxu0 0.0
        %1746 = vmatprep.subr.mxu0 0.0
        %1747 = vmatpush1.msra.mxu0 0.0
        %1748 = vmatprep.subr.mxu0 0.0
        %1749 = vmatpush1.msra.mxu0 0.0
        %1750 = vmatprep.subr.mxu0 0.0
        %1751 = vmatpush1.msra.mxu0 0.0
        %1752 = vmatprep.subr.mxu0 0.0
        %1753 = vmatpush1.msra.mxu0 0.0
        %1754 = vmatprep.subr.mxu0 0.0
        %1755 = vmatpush1.msra.mxu0 0.0
        %1756 = vmatprep.subr.mxu0 0.0
        %1757 = vmatpush1.msra.mxu0 0.0
        %1758 = vmatprep.subr.mxu0 0.0
        %1759 = vmatpush1.msra.mxu0 0.0
        %1760 = vmatprep.subr.mxu0 0.0
        %1761 = vmatpush1.msra.mxu0 0.0
        %1762 = vmatprep.subr.mxu0 0.0
        %1763 = vmatpush1.msra.mxu0 0.0
        %1764 = vmatprep.subr.mxu0 0.0
        %1765 = vmatpush1.msra.mxu0 0.0
        %1766 = vmatprep.subr.mxu0 0.0
        %1767 = vmatpush1.msra.mxu0 0.0
        %1768 = vmatprep.subr.mxu0 0.0
        %1769 = vmatpush1.msra.mxu0 0.0
        %1770 = vmatprep.subr.mxu0 0.0
        %1771 = vmatpush1.msra.mxu0 0.0
        %1772 = vmatprep.subr.mxu0 0.0
        %1773 = vmatpush1.msra.mxu0 0.0
        %1774 = vmatprep.subr.mxu0 0.0
        %1775 = vmatpush1.msra.mxu0 0.0
        %1776 = vmatprep.subr.mxu0 0.0
        %1777 = vmatpush1.msra.mxu0 0.0
        %1778 = vmatprep.subr.mxu0 0.0
        %1779 = vmatpush1.msra.mxu0 0.0
        %1780 = vmatprep.subr.mxu0 0.0
        %1781 = vmatpush1.msra.mxu0 0.0
        %1782 = vmatprep.subr.mxu0 0.0
        %1783 = vmatpush1.msra.mxu0 0.0
        %1784 = vmatprep.subr.mxu0 0.0
        %1785 = vmatpush1.msra.mxu0 0.0
        %1786 = vmatprep.subr.mxu0 0.0
        %1787 = vmatpush1.msra.mxu0 0.0
        %1788 = vmatprep.subr.mxu0 0.0
        %1789 = vmatpush1.msra.mxu0 0.0
        %1790 = vmatprep.mubr.f32.mxu0 0.0
        %1791 = vmatmul.mubr.f32.gmra.mrb[0].mxu0 %v1724
        %v1792 = vpop.f32.mrb[0].mxu0
        %v1793 = vadd.f32 0.0, %v1792
        %v1794 = vpop.f32.mrb[0].mxu0
        %1795 = vdwg.mxu0
        %1796 = vrot.lane.b32.xlu0 %v876, 64
        %v1797 = vpop.permute.xlu0 %1796
        %v1800 = vsel %vm1032, %v1713, 0
        %1802 = vmatprep.subr.mxu0 0.0
        %1803 = vmatpush1.msra.mxu0 %v1797
        %1804 = vmatprep.subr.mxu0 0.0
        %1805 = vmatpush1.msra.mxu0 0.0
        %1806 = vmatprep.subr.mxu0 0.0
        %1807 = vmatpush1.msra.mxu0 0.0
        %1808 = vmatprep.subr.mxu0 0.0
        %1809 = vmatpush1.msra.mxu0 0.0
        %1810 = vmatprep.subr.mxu0 0.0
        %1811 = vmatpush1.msra.mxu0 0.0
        %1812 = vmatprep.subr.mxu0 0.0
        %1813 = vmatpush1.msra.mxu0 0.0
        %1814 = vmatprep.subr.mxu0 0.0
        %1815 = vmatpush1.msra.mxu0 0.0
        %1816 = vmatprep.subr.mxu0 0.0
        %1817 = vmatpush1.msra.mxu0 0.0
        %1818 = vmatprep.subr.mxu0 0.0
        %1819 = vmatpush1.msra.mxu0 0.0
        %1820 = vmatprep.subr.mxu0 0.0
        %1821 = vmatpush1.msra.mxu0 0.0
        %1822 = vmatprep.subr.mxu0 0.0
        %1823 = vmatpush1.msra.mxu0 0.0
        %1824 = vmatprep.subr.mxu0 0.0
        %1825 = vmatpush1.msra.mxu0 0.0
        %1826 = vmatprep.subr.mxu0 0.0
        %1827 = vmatpush1.msra.mxu0 0.0
        %1828 = vmatprep.subr.mxu0 0.0
        %1829 = vmatpush1.msra.mxu0 0.0
        %1830 = vmatprep.subr.mxu0 0.0
        %1831 = vmatpush1.msra.mxu0 0.0
        %1832 = vmatprep.subr.mxu0 0.0
        %1833 = vmatpush1.msra.mxu0 0.0
        %1834 = vmatprep.subr.mxu0 0.0
        %1835 = vmatpush1.msra.mxu0 0.0
        %1836 = vmatprep.subr.mxu0 0.0
        %1837 = vmatpush1.msra.mxu0 0.0
        %1838 = vmatprep.subr.mxu0 0.0
        %1839 = vmatpush1.msra.mxu0 0.0
        %1840 = vmatprep.subr.mxu0 0.0
        %1841 = vmatpush1.msra.mxu0 0.0
        %1842 = vmatprep.subr.mxu0 0.0
        %1843 = vmatpush1.msra.mxu0 0.0
        %1844 = vmatprep.subr.mxu0 0.0
        %1845 = vmatpush1.msra.mxu0 0.0
        %1846 = vmatprep.subr.mxu0 0.0
        %1847 = vmatpush1.msra.mxu0 0.0
        %1848 = vmatprep.subr.mxu0 0.0
        %1849 = vmatpush1.msra.mxu0 0.0
        %1850 = vmatprep.subr.mxu0 0.0
        %1851 = vmatpush1.msra.mxu0 0.0
        %1852 = vmatprep.subr.mxu0 0.0
        %1853 = vmatpush1.msra.mxu0 0.0
        %1854 = vmatprep.subr.mxu0 0.0
        %1855 = vmatpush1.msra.mxu0 0.0
        %1856 = vmatprep.subr.mxu0 0.0
        %1857 = vmatpush1.msra.mxu0 0.0
        %1858 = vmatprep.subr.mxu0 0.0
        %1859 = vmatpush1.msra.mxu0 0.0
        %1860 = vmatprep.subr.mxu0 0.0
        %1861 = vmatpush1.msra.mxu0 0.0
        %1862 = vmatprep.subr.mxu0 0.0
        %1863 = vmatpush1.msra.mxu0 0.0
        %1864 = vmatprep.subr.mxu0 0.0
        %1865 = vmatpush1.msra.mxu0 0.0
        %1866 = vmatprep.mubr.f32.mxu0 0.0
        %1867 = vmatmul.mubr.f32.gmra.mrb[0].mxu0 %v1800
        %v1868 = vpop.f32.mrb[0].mxu0
        %v1869 = vadd.f32 0.0, %v1868
        %v1870 = vpop.f32.mrb[0].mxu0
        %1871 = vdwg.mxu0
        %v1872 = vrcp.pop %v1716
        %v1873 = vrcp.pop %v1719
        %v1874 = vmul.f32 %v1793, %v1872
        %v1875 = vmul.f32 %v1869, %v1873
        %1878 = vrot.lane.b32.xlu0 %v1874, 64
        %v1879 = vpop.permute.xlu0 %1878
        %1880 = vrot.lane.b32.xlu0 %v1875, 64
        %v1881 = vpop.permute.xlu0 %1880
        %vm1884 = vcmask 785920
        %1885 = vst.msk [vmem:[#allocation2] sm:$0xff] %vm1884, %v1879
        %1886 = vst.msk [vmem:[#allocation2 + $0x8] sm:$0xff] %vm1884, %v1881
        %1887 = vrot.lane.b32.xlu0 %v794, 32
        %v1888 = vpop.permute.xlu0 %1887
        %1889 = vrot.lane.b32.xlu0 %v796, 32
        %v1890 = vpop.permute.xlu0 %1889
        %v1891 = vsel %vm879, %v1888, 0
        %v1893 = vsel %vm879, %v1890, 0
        %1895 = vmatprep.subr.mxu0 0.0
        %1896 = vmatpush1.xpose.msra.mxu0 %v1893
        %1897 = vmatprep.subr.mxu0 0.0
        %1898 = vmatpush1.xpose.msra.mxu0 0.0
        %1899 = vmatprep.subr.mxu0 0.0
        %1900 = vmatpush1.xpose.msra.mxu0 0.0
        %1901 = vmatprep.subr.mxu0 0.0
        %1902 = vmatpush1.xpose.msra.mxu0 0.0
        %1903 = vmatprep.subr.mxu0 0.0
        %1904 = vmatpush1.xpose.msra.mxu0 0.0
        %1905 = vmatprep.subr.mxu0 0.0
        %1906 = vmatpush1.xpose.msra.mxu0 0.0
        %1907 = vmatprep.subr.mxu0 0.0
        %1908 = vmatpush1.xpose.msra.mxu0 0.0
        %1909 = vmatprep.subr.mxu0 0.0
        %1910 = vmatpush1.xpose.msra.mxu0 0.0
        %1911 = vmatprep.subr.mxu0 0.0
        %1912 = vmatpush1.xpose.msra.mxu0 0.0
        %1913 = vmatprep.subr.mxu0 0.0
        %1914 = vmatpush1.xpose.msra.mxu0 0.0
        %1915 = vmatprep.subr.mxu0 0.0
        %1916 = vmatpush1.xpose.msra.mxu0 0.0
        %1917 = vmatprep.subr.mxu0 0.0
        %1918 = vmatpush1.xpose.msra.mxu0 0.0
        %1919 = vmatprep.subr.mxu0 0.0
        %1920 = vmatpush1.xpose.msra.mxu0 0.0
        %1921 = vmatprep.subr.mxu0 0.0
        %1922 = vmatpush1.xpose.msra.mxu0 0.0
        %1923 = vmatprep.subr.mxu0 0.0
        %1924 = vmatpush1.xpose.msra.mxu0 0.0
        %1925 = vmatprep.subr.mxu0 0.0
        %1926 = vmatpush1.xpose.msra.mxu0 0.0
        %1927 = vmatprep.subr.mxu0 0.0
        %1928 = vmatpush1.xpose.msra.mxu0 0.0
        %1929 = vmatprep.subr.mxu0 0.0
        %1930 = vmatpush1.xpose.msra.mxu0 0.0
        %1931 = vmatprep.subr.mxu0 0.0
        %1932 = vmatpush1.xpose.msra.mxu0 0.0
        %1933 = vmatprep.subr.mxu0 0.0
        %1934 = vmatpush1.xpose.msra.mxu0 0.0
        %1935 = vmatprep.subr.mxu0 0.0
        %1936 = vmatpush1.xpose.msra.mxu0 0.0
        %1937 = vmatprep.subr.mxu0 0.0
        %1938 = vmatpush1.xpose.msra.mxu0 0.0
        %1939 = vmatprep.subr.mxu0 0.0
        %1940 = vmatpush1.xpose.msra.mxu0 0.0
        %1941 = vmatprep.subr.mxu0 0.0
        %1942 = vmatpush1.xpose.msra.mxu0 0.0
        %1943 = vmatprep.subr.mxu0 0.0
        %1944 = vmatpush1.xpose.msra.mxu0 0.0
        %1945 = vmatprep.subr.mxu0 0.0
        %1946 = vmatpush1.xpose.msra.mxu0 0.0
        %1947 = vmatprep.subr.mxu0 0.0
        %1948 = vmatpush1.xpose.msra.mxu0 0.0
        %1949 = vmatprep.subr.mxu0 0.0
        %1950 = vmatpush1.xpose.msra.mxu0 0.0
        %1951 = vmatprep.subr.mxu0 0.0
        %1952 = vmatpush1.xpose.msra.mxu0 0.0
        %1953 = vmatprep.subr.mxu0 0.0
        %1954 = vmatpush1.xpose.msra.mxu0 0.0
        %1955 = vmatprep.subr.mxu0 0.0
        %1956 = vmatpush1.xpose.msra.mxu0 0.0
        %1957 = vmatprep.subr.mxu0 0.0
        %1958 = vmatpush1.xpose.msra.mxu0 0.0
        %1959 = vmatprep.mubr.f32.mxu0 0.0
        %1960 = vmatmul.mubr.f32.gmra.mrb[0].mxu0 %v1891
        %v1961 = vpop.f32.mrb[0].mxu0
        %v1962 = vadd.f32 0.0, %v1961
        %v1963 = vpop.f32.mrb[0].mxu0
        %1964 = vdwg.mxu0
        %1965 = vrot.lane.b32.xlu0 %v800, 32
        %v1966 = vpop.permute.xlu0 %1965
        %1967 = vrot.lane.b32.xlu0 %v802, 32
        %v1968 = vpop.permute.xlu0 %1967
        %v1969 = vsel %vm879, %v1966, 0
        %v1971 = vsel %vm879, %v1968, 0
        %1973 = vmatprep.subr.mxu0 0.0
        %1974 = vmatpush1.xpose.msra.mxu0 %v1971
        %1975 = vmatprep.subr.mxu0 0.0
        %1976 = vmatpush1.xpose.msra.mxu0 0.0
        %1977 = vmatprep.subr.mxu0 0.0
        %1978 = vmatpush1.xpose.msra.mxu0 0.0
        %1979 = vmatprep.subr.mxu0 0.0
        %1980 = vmatpush1.xpose.msra.mxu0 0.0
        %1981 = vmatprep.subr.mxu0 0.0
        %1982 = vmatpush1.xpose.msra.mxu0 0.0
        %1983 = vmatprep.subr.mxu0 0.0
        %1984 = vmatpush1.xpose.msra.mxu0 0.0
        %1985 = vmatprep.subr.mxu0 0.0
        %1986 = vmatpush1.xpose.msra.mxu0 0.0
        %1987 = vmatprep.subr.mxu0 0.0
        %1988 = vmatpush1.xpose.msra.mxu0 0.0
        %1989 = vmatprep.subr.mxu0 0.0
        %1990 = vmatpush1.xpose.msra.mxu0 0.0
        %1991 = vmatprep.subr.mxu0 0.0
        %1992 = vmatpush1.xpose.msra.mxu0 0.0
        %1993 = vmatprep.subr.mxu0 0.0
        %1994 = vmatpush1.xpose.msra.mxu0 0.0
        %1995 = vmatprep.subr.mxu0 0.0
        %1996 = vmatpush1.xpose.msra.mxu0 0.0
        %1997 = vmatprep.subr.mxu0 0.0
        %1998 = vmatpush1.xpose.msra.mxu0 0.0
        %1999 = vmatprep.subr.mxu0 0.0
        %2000 = vmatpush1.xpose.msra.mxu0 0.0
        %2001 = vmatprep.subr.mxu0 0.0
        %2002 = vmatpush1.xpose.msra.mxu0 0.0
        %2003 = vmatprep.subr.mxu0 0.0
        %2004 = vmatpush1.xpose.msra.mxu0 0.0
        %2005 = vmatprep.subr.mxu0 0.0
        %2006 = vmatpush1.xpose.msra.mxu0 0.0
        %2007 = vmatprep.subr.mxu0 0.0
        %2008 = vmatpush1.xpose.msra.mxu0 0.0
        %2009 = vmatprep.subr.mxu0 0.0
        %2010 = vmatpush1.xpose.msra.mxu0 0.0
        %2011 = vmatprep.subr.mxu0 0.0
        %2012 = vmatpush1.xpose.msra.mxu0 0.0
        %2013 = vmatprep.subr.mxu0 0.0
        %2014 = vmatpush1.xpose.msra.mxu0 0.0
        %2015 = vmatprep.subr.mxu0 0.0
        %2016 = vmatpush1.xpose.msra.mxu0 0.0
        %2017 = vmatprep.subr.mxu0 0.0
        %2018 = vmatpush1.xpose.msra.mxu0 0.0
        %2019 = vmatprep.subr.mxu0 0.0
        %2020 = vmatpush1.xpose.msra.mxu0 0.0
        %2021 = vmatprep.subr.mxu0 0.0
        %2022 = vmatpush1.xpose.msra.mxu0 0.0
        %2023 = vmatprep.subr.mxu0 0.0
        %2024 = vmatpush1.xpose.msra.mxu0 0.0
        %2025 = vmatprep.subr.mxu0 0.0
        %2026 = vmatpush1.xpose.msra.mxu0 0.0
        %2027 = vmatprep.subr.mxu0 0.0
        %2028 = vmatpush1.xpose.msra.mxu0 0.0
        %2029 = vmatprep.subr.mxu0 0.0
        %2030 = vmatpush1.xpose.msra.mxu0 0.0
        %2031 = vmatprep.subr.mxu0 0.0
        %2032 = vmatpush1.xpose.msra.mxu0 0.0
        %2033 = vmatprep.subr.mxu0 0.0
        %2034 = vmatpush1.xpose.msra.mxu0 0.0
        %2035 = vmatprep.subr.mxu0 0.0
        %2036 = vmatpush1.xpose.msra.mxu0 0.0
        %2037 = vmatprep.mubr.f32.mxu0 0.0
        %2038 = vmatmul.mubr.f32.gmra.mrb[0].mxu0 %v1969
        %v2039 = vpop.f32.mrb[0].mxu0
        %v2040 = vadd.f32 0.0, %v2039
        %v2041 = vpop.f32.mrb[0].mxu0
        %2042 = vdwg.mxu0
        %v2043 = vsel %vm1032, %v1962, -inf
        %2044 = vmax.xlane.f32.xlu0 %v2043
        %v2045 = vpop.xlane.xlu0 %2044
        %v2046 = vsel %vm1032, %v2040, -inf
        %2047 = vmax.xlane.f32.xlu0 %v2046
        %v2048 = vpop.xlane.xlu0 %2047
        %v2049 = vsub.f32 %v1962, %v2045
        %v2050 = vsub.f32 %v2040, %v2048
        %v2051 = vmul.f32 %v2049, 1.442695
        %v2052 = vpow.pop %v2051
        %v2053 = vmul.f32 %v2050, 1.442695
        %v2054 = vpow.pop %v2053
        %v2055 = vsel %vm1032, %v2052, 0.0
        %2056 = vadd.xlane.f32.xlu0 %v2055
        %v2057 = vpop.xlane.xlu0 %2056
        %v2058 = vsel %vm1032, %v2054, 0.0
        %2059 = vadd.xlane.f32.xlu0 %v2058
        %v2060 = vpop.xlane.xlu0 %2059
        %2061 = vrot.lane.b32.xlu0 %v871, 32
        %v2062 = vpop.permute.xlu0 %2061
        %v2065 = vsel %vm1032, %v2052, 0
        %2067 = vmatprep.subr.mxu0 0.0
        %2068 = vmatpush1.msra.mxu0 %v2062
        %2069 = vmatprep.subr.mxu0 0.0
        %2070 = vmatpush1.msra.mxu0 0.0
        %2071 = vmatprep.subr.mxu0 0.0
        %2072 = vmatpush1.msra.mxu0 0.0
        %2073 = vmatprep.subr.mxu0 0.0
        %2074 = vmatpush1.msra.mxu0 0.0
        %2075 = vmatprep.subr.mxu0 0.0
        %2076 = vmatpush1.msra.mxu0 0.0
        %2077 = vmatprep.subr.mxu0 0.0
        %2078 = vmatpush1.msra.mxu0 0.0
        %2079 = vmatprep.subr.mxu0 0.0
        %2080 = vmatpush1.msra.mxu0 0.0
        %2081 = vmatprep.subr.mxu0 0.0
        %2082 = vmatpush1.msra.mxu0 0.0
        %2083 = vmatprep.subr.mxu0 0.0
        %2084 = vmatpush1.msra.mxu0 0.0
        %2085 = vmatprep.subr.mxu0 0.0
        %2086 = vmatpush1.msra.mxu0 0.0
        %2087 = vmatprep.subr.mxu0 0.0
        %2088 = vmatpush1.msra.mxu0 0.0
        %2089 = vmatprep.subr.mxu0 0.0
        %2090 = vmatpush1.msra.mxu0 0.0
        %2091 = vmatprep.subr.mxu0 0.0
        %2092 = vmatpush1.msra.mxu0 0.0
        %2093 = vmatprep.subr.mxu0 0.0
        %2094 = vmatpush1.msra.mxu0 0.0
        %2095 = vmatprep.subr.mxu0 0.0
        %2096 = vmatpush1.msra.mxu0 0.0
        %2097 = vmatprep.subr.mxu0 0.0
        %2098 = vmatpush1.msra.mxu0 0.0
        %2099 = vmatprep.subr.mxu0 0.0
        %2100 = vmatpush1.msra.mxu0 0.0
        %2101 = vmatprep.subr.mxu0 0.0
        %2102 = vmatpush1.msra.mxu0 0.0
        %2103 = vmatprep.subr.mxu0 0.0
        %2104 = vmatpush1.msra.mxu0 0.0
        %2105 = vmatprep.subr.mxu0 0.0
        %2106 = vmatpush1.msra.mxu0 0.0
        %2107 = vmatprep.subr.mxu0 0.0
        %2108 = vmatpush1.msra.mxu0 0.0
        %2109 = vmatprep.subr.mxu0 0.0
        %2110 = vmatpush1.msra.mxu0 0.0
        %2111 = vmatprep.subr.mxu0 0.0
        %2112 = vmatpush1.msra.mxu0 0.0
        %2113 = vmatprep.subr.mxu0 0.0
        %2114 = vmatpush1.msra.mxu0 0.0
        %2115 = vmatprep.subr.mxu0 0.0
        %2116 = vmatpush1.msra.mxu0 0.0
        %2117 = vmatprep.subr.mxu0 0.0
        %2118 = vmatpush1.msra.mxu0 0.0
        %2119 = vmatprep.subr.mxu0 0.0
        %2120 = vmatpush1.msra.mxu0 0.0
        %2121 = vmatprep.subr.mxu0 0.0
        %2122 = vmatpush1.msra.mxu0 0.0
        %2123 = vmatprep.subr.mxu0 0.0
        %2124 = vmatpush1.msra.mxu0 0.0
        %2125 = vmatprep.subr.mxu0 0.0
        %2126 = vmatpush1.msra.mxu0 0.0
        %2127 = vmatprep.subr.mxu0 0.0
        %2128 = vmatpush1.msra.mxu0 0.0
        %2129 = vmatprep.subr.mxu0 0.0
        %2130 = vmatpush1.msra.mxu0 0.0
        %2131 = vmatprep.mubr.f32.mxu0 0.0
        %2132 = vmatmul.mubr.f32.gmra.mrb[0].mxu0 %v2065
        %v2133 = vpop.f32.mrb[0].mxu0
        %v2134 = vadd.f32 0.0, %v2133
        %v2135 = vpop.f32.mrb[0].mxu0
        %2136 = vdwg.mxu0
        %2137 = vrot.lane.b32.xlu0 %v876, 32
        %v2138 = vpop.permute.xlu0 %2137
        %v2141 = vsel %vm1032, %v2054, 0
        %2143 = vmatprep.subr.mxu0 0.0
        %2144 = vmatpush1.msra.mxu0 %v2138
        %2145 = vmatprep.subr.mxu0 0.0
        %2146 = vmatpush1.msra.mxu0 0.0
        %2147 = vmatprep.subr.mxu0 0.0
        %2148 = vmatpush1.msra.mxu0 0.0
        %2149 = vmatprep.subr.mxu0 0.0
        %2150 = vmatpush1.msra.mxu0 0.0
        %2151 = vmatprep.subr.mxu0 0.0
        %2152 = vmatpush1.msra.mxu0 0.0
        %2153 = vmatprep.subr.mxu0 0.0
        %2154 = vmatpush1.msra.mxu0 0.0
        %2155 = vmatprep.subr.mxu0 0.0
        %2156 = vmatpush1.msra.mxu0 0.0
        %2157 = vmatprep.subr.mxu0 0.0
        %2158 = vmatpush1.msra.mxu0 0.0
        %2159 = vmatprep.subr.mxu0 0.0
        %2160 = vmatpush1.msra.mxu0 0.0
        %2161 = vmatprep.subr.mxu0 0.0
        %2162 = vmatpush1.msra.mxu0 0.0
        %2163 = vmatprep.subr.mxu0 0.0
        %2164 = vmatpush1.msra.mxu0 0.0
        %2165 = vmatprep.subr.mxu0 0.0
        %2166 = vmatpush1.msra.mxu0 0.0
        %2167 = vmatprep.subr.mxu0 0.0
        %2168 = vmatpush1.msra.mxu0 0.0
        %2169 = vmatprep.subr.mxu0 0.0
        %2170 = vmatpush1.msra.mxu0 0.0
        %2171 = vmatprep.subr.mxu0 0.0
        %2172 = vmatpush1.msra.mxu0 0.0
        %2173 = vmatprep.subr.mxu0 0.0
        %2174 = vmatpush1.msra.mxu0 0.0
        %2175 = vmatprep.subr.mxu0 0.0
        %2176 = vmatpush1.msra.mxu0 0.0
        %2177 = vmatprep.subr.mxu0 0.0
        %2178 = vmatpush1.msra.mxu0 0.0
        %2179 = vmatprep.subr.mxu0 0.0
        %2180 = vmatpush1.msra.mxu0 0.0
        %2181 = vmatprep.subr.mxu0 0.0
        %2182 = vmatpush1.msra.mxu0 0.0
        %2183 = vmatprep.subr.mxu0 0.0
        %2184 = vmatpush1.msra.mxu0 0.0
        %2185 = vmatprep.subr.mxu0 0.0
        %2186 = vmatpush1.msra.mxu0 0.0
        %2187 = vmatprep.subr.mxu0 0.0
        %2188 = vmatpush1.msra.mxu0 0.0
        %2189 = vmatprep.subr.mxu0 0.0
        %2190 = vmatpush1.msra.mxu0 0.0
        %2191 = vmatprep.subr.mxu0 0.0
        %2192 = vmatpush1.msra.mxu0 0.0
        %2193 = vmatprep.subr.mxu0 0.0
        %2194 = vmatpush1.msra.mxu0 0.0
        %2195 = vmatprep.subr.mxu0 0.0
        %2196 = vmatpush1.msra.mxu0 0.0
        %2197 = vmatprep.subr.mxu0 0.0
        %2198 = vmatpush1.msra.mxu0 0.0
        %2199 = vmatprep.subr.mxu0 0.0
        %2200 = vmatpush1.msra.mxu0 0.0
        %2201 = vmatprep.subr.mxu0 0.0
        %2202 = vmatpush1.msra.mxu0 0.0
        %2203 = vmatprep.subr.mxu0 0.0
        %2204 = vmatpush1.msra.mxu0 0.0
        %2205 = vmatprep.subr.mxu0 0.0
        %2206 = vmatpush1.msra.mxu0 0.0
        %2207 = vmatprep.mubr.f32.mxu0 0.0
        %2208 = vmatmul.mubr.f32.gmra.mrb[0].mxu0 %v2141
        %v2209 = vpop.f32.mrb[0].mxu0
        %v2210 = vadd.f32 0.0, %v2209
        %v2211 = vpop.f32.mrb[0].mxu0
        %2212 = vdwg.mxu0
        %v2213 = vrcp.pop %v2057
        %v2214 = vrcp.pop %v2060
        %v2215 = vmul.f32 %v2134, %v2213
        %v2216 = vmul.f32 %v2210, %v2214
        %2219 = vrot.lane.b32.xlu0 %v2215, 96
        %v2220 = vpop.permute.xlu0 %2219
        %2221 = vrot.lane.b32.xlu0 %v2216, 96
        %v2222 = vpop.permute.xlu0 %2221
        %vm2225 = vcmask 1048320
        %2226 = vst.msk [vmem:[#allocation2] sm:$0xff] %vm2225, %v2220
        %2227 = vst.msk [vmem:[#allocation2 + $0x8] sm:$0xff] %vm2225, %v2222
        %v2228 = vld [vmem:[#allocation2] sm:$0xff]
        %v2229 = vld [vmem:[#allocation2 + $0x8] sm:$0xff]
        %v2230 = vld [vmem:[#allocation12] sm:$0xff]
        %v2231 = vld [vmem:[#allocation12 + $0x8] sm:$0xff]
        %v2232 = vld [vmem:[#allocation12 + $0x10] sm:$0xff]
        %v2233 = vld [vmem:[#allocation12 + $0x18] sm:$0xff]
        %v2234 = vld [vmem:[#allocation12 + $0x20] sm:$0xff]
        %v2235 = vld [vmem:[#allocation12 + $0x28] sm:$0xff]
        %v2236 = vld [vmem:[#allocation12 + $0x30] sm:$0xff]
        %v2237 = vld [vmem:[#allocation12 + $0x38] sm:$0xff]
        %v2238 = vld [vmem:[#allocation12 + $0x40] sm:$0xff]
        %v2239 = vld [vmem:[#allocation12 + $0x48] sm:$0xff]
        %v2240 = vld [vmem:[#allocation12 + $0x50] sm:$0xff]
        %v2241 = vld [vmem:[#allocation12 + $0x58] sm:$0xff]
        %v2242 = vld [vmem:[#allocation12 + $0x60] sm:$0xff]
        %v2243 = vld [vmem:[#allocation12 + $0x68] sm:$0xff]
        %v2244 = vld [vmem:[#allocation12 + $0x70] sm:$0xff]
        %v2245 = vld [vmem:[#allocation12 + $0x78] sm:$0xff]
        %v2246 = vld [vmem:[#allocation14] sm:$0x1]
        %v2248 = vlaneseq
        %v2249 = vshrl.u32 %v2248, 7
        %v2250 = vsub.s32 0, %v2249
        %v2251 = vrot.slane %v2246, %v2250
        %2253 = vmatprep.subr.mxu0 0.0
        %2254 = vmatpush1.msra.mxu0 %v2230
        %2255 = vmatprep.subr.mxu0 0.0
        %2256 = vmatpush1.msra.mxu0 %v2231
        %2257 = vmatprep.subr.mxu0 0.0
        %2258 = vmatpush1.msra.mxu0 %v2232
        %2259 = vmatprep.subr.mxu0 0.0
        %2260 = vmatpush1.msra.mxu0 %v2233
        %2261 = vmatprep.subr.mxu0 0.0
        %2262 = vmatpush1.msra.mxu0 %v2234
        %2263 = vmatprep.subr.mxu0 0.0
        %2264 = vmatpush1.msra.mxu0 %v2235
        %2265 = vmatprep.subr.mxu0 0.0
        %2266 = vmatpush1.msra.mxu0 %v2236
        %2267 = vmatprep.subr.mxu0 0.0
        %2268 = vmatpush1.msra.mxu0 %v2237
        %2269 = vmatprep.subr.mxu0 0.0
        %2270 = vmatpush1.msra.mxu0 %v2238
        %2271 = vmatprep.subr.mxu0 0.0
        %2272 = vmatpush1.msra.mxu0 %v2239
        %2273 = vmatprep.subr.mxu0 0.0
        %2274 = vmatpush1.msra.mxu0 %v2240
        %2275 = vmatprep.subr.mxu0 0.0
        %2276 = vmatpush1.msra.mxu0 %v2241
        %2277 = vmatprep.subr.mxu0 0.0
        %2278 = vmatpush1.msra.mxu0 %v2242
        %2279 = vmatprep.subr.mxu0 0.0
        %2280 = vmatpush1.msra.mxu0 %v2243
        %2281 = vmatprep.subr.mxu0 0.0
        %2282 = vmatpush1.msra.mxu0 %v2244
        %2283 = vmatprep.subr.mxu0 0.0
        %2284 = vmatpush1.msra.mxu0 %v2245
        %2285 = vmatprep.subr.mxu0 0.0
        %2286 = vmatpush1.msra.mxu0 0.0
        %2287 = vmatprep.subr.mxu0 0.0
        %2288 = vmatpush1.msra.mxu0 0.0
        %2289 = vmatprep.subr.mxu0 0.0
        %2290 = vmatpush1.msra.mxu0 0.0
        %2291 = vmatprep.subr.mxu0 0.0
        %2292 = vmatpush1.msra.mxu0 0.0
        %2293 = vmatprep.subr.mxu0 0.0
        %2294 = vmatpush1.msra.mxu0 0.0
        %2295 = vmatprep.subr.mxu0 0.0
        %2296 = vmatpush1.msra.mxu0 0.0
        %2297 = vmatprep.subr.mxu0 0.0
        %2298 = vmatpush1.msra.mxu0 0.0
        %2299 = vmatprep.subr.mxu0 0.0
        %2300 = vmatpush1.msra.mxu0 0.0
        %2301 = vmatprep.subr.mxu0 0.0
        %2302 = vmatpush1.msra.mxu0 0.0
        %2303 = vmatprep.subr.mxu0 0.0
        %2304 = vmatpush1.msra.mxu0 0.0
        %2305 = vmatprep.subr.mxu0 0.0
        %2306 = vmatpush1.msra.mxu0 0.0
        %2307 = vmatprep.subr.mxu0 0.0
        %2308 = vmatpush1.msra.mxu0 0.0
        %2309 = vmatprep.subr.mxu0 0.0
        %2310 = vmatpush1.msra.mxu0 0.0
        %2311 = vmatprep.subr.mxu0 0.0
        %2312 = vmatpush1.msra.mxu0 0.0
        %2313 = vmatprep.subr.mxu0 0.0
        %2314 = vmatpush1.msra.mxu0 0.0
        %2315 = vmatprep.subr.mxu0 0.0
        %2316 = vmatpush1.msra.mxu0 0.0
        %2317 = vmatprep.mubr.f32.mxu0 0.0
        %2318 = vmatmul.mubr.f32.gmra.mrb[0].mxu0 %v2228
        %v2319 = vpop.f32.mrb[0].mxu0
        %v2320 = vadd.f32 %v2251, %v2319
        %v2321 = vpop.f32.mrb[0].mxu0
        %2322 = vmatprep.mubr.f32.mxu0 0.0
        %2323 = vmatmul.mubr.f32.gmra.mrb[0].mxu0 %v2229
        %v2324 = vpop.f32.mrb[0].mxu0
        %v2325 = vadd.f32 %v2251, %v2324
        %v2326 = vpop.f32.mrb[0].mxu0
        %2327 = vdwg.mxu0
        %v2328 = vadd.f32 %v619, %v2320
        %v2329 = vadd.f32 %v620, %v2325
        %v2330 = vld [vmem:[#allocation15] sm:$0x1]
        %v2331 = vld [vmem:[#allocation17] sm:$0x1]
        %2332 = vadd.xlane.f32.xlu0 %v2328
        %v2333 = vpop.xlane.xlu0 %2332
        %2334 = vadd.xlane.f32.xlu0 %v2329
        %v2335 = vpop.xlane.xlu0 %2334
        %v2336 = vmul.f32 %v2333, %v627
        %v2337 = vmul.f32 %v2335, %v627
        %v2338 = vsub.f32 %v2328, %v2336
        %v2339 = vsub.f32 %v2329, %v2337
        %v2340 = vmul.f32 %v2338, %v2338
        %v2341 = vmul.f32 %v2339, %v2339
        %2342 = vadd.xlane.f32.xlu0 %v2340
        %v2343 = vpop.xlane.xlu0 %2342
        %2344 = vadd.xlane.f32.xlu0 %v2341
        %v2345 = vpop.xlane.xlu0 %2344
        %v2346 = vmul.f32 %v2343, %v627
        %v2347 = vmul.f32 %v2345, %v627
        %v2348 = vadd.f32 %v2346, 1e-05
        %v2349 = vadd.f32 %v2347, 1e-05
        %v2350 = vrsqrt.pop %v2348
        %v2351 = vrsqrt.pop %v2349
        %v2352 = vmul.f32 %v2338, %v2350
        %v2353 = vmul.f32 %v2339, %v2351
        %v2355 = vlaneseq
        %v2356 = vshrl.u32 %v2355, 7
        %v2357 = vsub.s32 0, %v2356
        %v2358 = vrot.slane %v2330, %v2357
        %v2360 = vmul.f32 %v2352, %v2358
        %v2361 = vmul.f32 %v2353, %v2358
        %v2363 = vlaneseq
        %v2364 = vshrl.u32 %v2363, 7
        %v2365 = vsub.s32 0, %v2364
        %v2366 = vrot.slane %v2331, %v2365
        %v2368 = vadd.f32 %v2360, %v2366
        %v2369 = vadd.f32 %v2361, %v2366
        %v2370 = vld [vmem:[#allocation20] sm:$0xf]
        %v2371 = vld [vmem:[#allocation18] sm:$0xff]
        %v2372 = vld [vmem:[#allocation18 + $0x8] sm:$0xff]
        %v2373 = vld [vmem:[#allocation18 + $0x10] sm:$0xff]
        %v2374 = vld [vmem:[#allocation18 + $0x18] sm:$0xff]
        %v2375 = vld [vmem:[#allocation18 + $0x20] sm:$0xff]
        %v2376 = vld [vmem:[#allocation18 + $0x28] sm:$0xff]
        %v2377 = vld [vmem:[#allocation18 + $0x30] sm:$0xff]
        %v2378 = vld [vmem:[#allocation18 + $0x38] sm:$0xff]
        %v2379 = vld [vmem:[#allocation18 + $0x40] sm:$0xff]
        %v2380 = vld [vmem:[#allocation18 + $0x48] sm:$0xff]
        %v2381 = vld [vmem:[#allocation18 + $0x50] sm:$0xff]
        %v2382 = vld [vmem:[#allocation18 + $0x58] sm:$0xff]
        %v2383 = vld [vmem:[#allocation18 + $0x60] sm:$0xff]
        %v2384 = vld [vmem:[#allocation18 + $0x68] sm:$0xff]
        %v2385 = vld [vmem:[#allocation18 + $0x70] sm:$0xff]
        %v2386 = vld [vmem:[#allocation18 + $0x78] sm:$0xff]
        %v2387 = vld [vmem:[#allocation18 + $0x80] sm:$0xff]
        %v2388 = vld [vmem:[#allocation18 + $0x88] sm:$0xff]
        %v2389 = vld [vmem:[#allocation18 + $0x90] sm:$0xff]
        %v2390 = vld [vmem:[#allocation18 + $0x98] sm:$0xff]
        %v2391 = vld [vmem:[#allocation18 + $0xa0] sm:$0xff]
        %v2392 = vld [vmem:[#allocation18 + $0xa8] sm:$0xff]
        %v2393 = vld [vmem:[#allocation18 + $0xb0] sm:$0xff]
        %v2394 = vld [vmem:[#allocation18 + $0xb8] sm:$0xff]
        %v2395 = vld [vmem:[#allocation18 + $0xc0] sm:$0xff]
        %v2396 = vld [vmem:[#allocation18 + $0xc8] sm:$0xff]
        %v2397 = vld [vmem:[#allocation18 + $0xd0] sm:$0xff]
        %v2398 = vld [vmem:[#allocation18 + $0xd8] sm:$0xff]
        %v2399 = vld [vmem:[#allocation18 + $0xe0] sm:$0xff]
        %v2400 = vld [vmem:[#allocation18 + $0xe8] sm:$0xff]
        %v2401 = vld [vmem:[#allocation18 + $0xf0] sm:$0xff]
        %v2402 = vld [vmem:[#allocation18 + $0xf8] sm:$0xff]
        %v2403 = vld [vmem:[#allocation18 + $0x100] sm:$0xff]
        %v2404 = vld [vmem:[#allocation18 + $0x108] sm:$0xff]
        %v2405 = vld [vmem:[#allocation18 + $0x110] sm:$0xff]
        %v2406 = vld [vmem:[#allocation18 + $0x118] sm:$0xff]
        %v2407 = vld [vmem:[#allocation18 + $0x120] sm:$0xff]
        %v2408 = vld [vmem:[#allocation18 + $0x128] sm:$0xff]
        %v2409 = vld [vmem:[#allocation18 + $0x130] sm:$0xff]
        %v2410 = vld [vmem:[#allocation18 + $0x138] sm:$0xff]
        %v2411 = vld [vmem:[#allocation18 + $0x140] sm:$0xff]
        %v2412 = vld [vmem:[#allocation18 + $0x148] sm:$0xff]
        %v2413 = vld [vmem:[#allocation18 + $0x150] sm:$0xff]
        %v2414 = vld [vmem:[#allocation18 + $0x158] sm:$0xff]
        %v2415 = vld [vmem:[#allocation18 + $0x160] sm:$0xff]
        %v2416 = vld [vmem:[#allocation18 + $0x168] sm:$0xff]
        %v2417 = vld [vmem:[#allocation18 + $0x170] sm:$0xff]
        %v2418 = vld [vmem:[#allocation18 + $0x178] sm:$0xff]
        %v2419 = vld [vmem:[#allocation18 + $0x180] sm:$0xff]
        %v2420 = vld [vmem:[#allocation18 + $0x188] sm:$0xff]
        %v2421 = vld [vmem:[#allocation18 + $0x190] sm:$0xff]
        %v2422 = vld [vmem:[#allocation18 + $0x198] sm:$0xff]
        %v2423 = vld [vmem:[#allocation18 + $0x1a0] sm:$0xff]
        %v2424 = vld [vmem:[#allocation18 + $0x1a8] sm:$0xff]
        %v2425 = vld [vmem:[#allocation18 + $0x1b0] sm:$0xff]
        %v2426 = vld [vmem:[#allocation18 + $0x1b8] sm:$0xff]
        %v2427 = vld [vmem:[#allocation18 + $0x1c0] sm:$0xff]
        %v2428 = vld [vmem:[#allocation18 + $0x1c8] sm:$0xff]
        %v2429 = vld [vmem:[#allocation18 + $0x1d0] sm:$0xff]
        %v2430 = vld [vmem:[#allocation18 + $0x1d8] sm:$0xff]
        %v2431 = vld [vmem:[#allocation18 + $0x1e0] sm:$0xff]
        %v2432 = vld [vmem:[#allocation18 + $0x1e8] sm:$0xff]
        %v2433 = vld [vmem:[#allocation18 + $0x1f0] sm:$0xff]
        %v2434 = vld [vmem:[#allocation18 + $0x1f8] sm:$0xff]
        %v2436 = vlaneseq
        %v2437 = vshrl.u32 %v2436, 7
        %v2438 = vsub.s32 0, %v2437
        %v2439 = vrot.slane %v2370, %v2438
        %v2440 = vlaneseq
        %v2441 = vshrl.u32 %v2440, 7
        %v2442 = vsub.s32 1, %v2441
        %v2443 = vrot.slane %v2370, %v2442
        %v2444 = vlaneseq
        %v2445 = vshrl.u32 %v2444, 7
        %v2446 = vsub.s32 2, %v2445
        %v2447 = vrot.slane %v2370, %v2446
        %v2448 = vlaneseq
        %v2449 = vshrl.u32 %v2448, 7
        %v2450 = vsub.s32 3, %v2449
        %v2451 = vrot.slane %v2370, %v2450
        %2456 = vmatprep.subr.mxu0 %v2372
        %2457 = vmatpush1.msra.mxu0 %v2371
        %2458 = vmatprep.subr.mxu0 %v2376
        %2459 = vmatpush1.msra.mxu0 %v2375
        %2460 = vmatprep.subr.mxu0 %v2380
        %2461 = vmatpush1.msra.mxu0 %v2379
        %2462 = vmatprep.subr.mxu0 %v2384
        %2463 = vmatpush1.msra.mxu0 %v2383
        %2464 = vmatprep.subr.mxu0 %v2388
        %2465 = vmatpush1.msra.mxu0 %v2387
        %2466 = vmatprep.subr.mxu0 %v2392
        %2467 = vmatpush1.msra.mxu0 %v2391
        %2468 = vmatprep.subr.mxu0 %v2396
        %2469 = vmatpush1.msra.mxu0 %v2395
        %2470 = vmatprep.subr.mxu0 %v2400
        %2471 = vmatpush1.msra.mxu0 %v2399
        %2472 = vmatprep.subr.mxu0 %v2404
        %2473 = vmatpush1.msra.mxu0 %v2403
        %2474 = vmatprep.subr.mxu0 %v2408
        %2475 = vmatpush1.msra.mxu0 %v2407
        %2476 = vmatprep.subr.mxu0 %v2412
        %2477 = vmatpush1.msra.mxu0 %v2411
        %2478 = vmatprep.subr.mxu0 %v2416
        %2479 = vmatpush1.msra.mxu0 %v2415
        %2480 = vmatprep.subr.mxu0 %v2420
        %2481 = vmatpush1.msra.mxu0 %v2419
        %2482 = vmatprep.subr.mxu0 %v2424
        %2483 = vmatpush1.msra.mxu0 %v2423
        %2484 = vmatprep.subr.mxu0 %v2428
        %2485 = vmatpush1.msra.mxu0 %v2427
        %2486 = vmatprep.subr.mxu0 %v2432
        %2487 = vmatpush1.msra.mxu0 %v2431
        %2488 = vmatprep.subr.mxu0 0.0
        %2489 = vmatpush1.msra.mxu0 0.0
        %2490 = vmatprep.subr.mxu0 0.0
        %2491 = vmatpush1.msra.mxu0 0.0
        %2492 = vmatprep.subr.mxu0 0.0
        %2493 = vmatpush1.msra.mxu0 0.0
        %2494 = vmatprep.subr.mxu0 0.0
        %2495 = vmatpush1.msra.mxu0 0.0
        %2496 = vmatprep.subr.mxu0 0.0
        %2497 = vmatpush1.msra.mxu0 0.0
        %2498 = vmatprep.subr.mxu0 0.0
        %2499 = vmatpush1.msra.mxu0 0.0
        %2500 = vmatprep.subr.mxu0 0.0
        %2501 = vmatpush1.msra.mxu0 0.0
        %2502 = vmatprep.subr.mxu0 0.0
        %2503 = vmatpush1.msra.mxu0 0.0
        %2504 = vmatprep.subr.mxu0 0.0
        %2505 = vmatpush1.msra.mxu0 0.0
        %2506 = vmatprep.subr.mxu0 0.0
        %2507 = vmatpush1.msra.mxu0 0.0
        %2508 = vmatprep.subr.mxu0 0.0
        %2509 = vmatpush1.msra.mxu0 0.0
        %2510 = vmatprep.subr.mxu0 0.0
        %2511 = vmatpush1.msra.mxu0 0.0
        %2512 = vmatprep.subr.mxu0 0.0
        %2513 = vmatpush1.msra.mxu0 0.0
        %2514 = vmatprep.subr.mxu0 0.0
        %2515 = vmatpush1.msra.mxu0 0.0
        %2516 = vmatprep.subr.mxu0 0.0
        %2517 = vmatpush1.msra.mxu0 0.0
        %2518 = vmatprep.subr.mxu0 0.0
        %2519 = vmatpush1.msra.mxu0 0.0
        %2520 = vmatprep.mubr.f32.mxu0 0.0
        %2521 = vmatmul.mubr.f32.gmra.mrb[0].mxu0 %v2368
        %v2522 = vpop.f32.mrb[0].mxu0
        %v2523 = vadd.f32 %v2439, %v2522
        %v2524 = vpop.f32.mrb[0].mxu0
        %v2525 = vadd.f32 %v2443, %v2524
        %2526 = vmatprep.mubr.f32.mxu0 0.0
        %2527 = vmatmul.mubr.f32.gmra.mrb[0].mxu0 %v2369
        %v2528 = vpop.f32.mrb[0].mxu0
        %v2529 = vadd.f32 %v2439, %v2528
        %v2530 = vpop.f32.mrb[0].mxu0
        %v2531 = vadd.f32 %v2443, %v2530
        %2532 = vdwg.mxu0
        %2533 = vmatprep.subr.mxu0 %v2374
        %2534 = vmatpush1.msra.mxu0 %v2373
        %2535 = vmatprep.subr.mxu0 %v2378
        %2536 = vmatpush1.msra.mxu0 %v2377
        %2537 = vmatprep.subr.mxu0 %v2382
        %2538 = vmatpush1.msra.mxu0 %v2381
        %2539 = vmatprep.subr.mxu0 %v2386
        %2540 = vmatpush1.msra.mxu0 %v2385
        %2541 = vmatprep.subr.mxu0 %v2390
        %2542 = vmatpush1.msra.mxu0 %v2389
        %2543 = vmatprep.subr.mxu0 %v2394
        %2544 = vmatpush1.msra.mxu0 %v2393
        %2545 = vmatprep.subr.mxu0 %v2398
        %2546 = vmatpush1.msra.mxu0 %v2397
        %2547 = vmatprep.subr.mxu0 %v2402
        %2548 = vmatpush1.msra.mxu0 %v2401
        %2549 = vmatprep.subr.mxu0 %v2406
        %2550 = vmatpush1.msra.mxu0 %v2405
        %2551 = vmatprep.subr.mxu0 %v2410
        %2552 = vmatpush1.msra.mxu0 %v2409
        %2553 = vmatprep.subr.mxu0 %v2414
        %2554 = vmatpush1.msra.mxu0 %v2413
        %2555 = vmatprep.subr.mxu0 %v2418
        %2556 = vmatpush1.msra.mxu0 %v2417
        %2557 = vmatprep.subr.mxu0 %v2422
        %2558 = vmatpush1.msra.mxu0 %v2421
        %2559 = vmatprep.subr.mxu0 %v2426
        %2560 = vmatpush1.msra.mxu0 %v2425
        %2561 = vmatprep.subr.mxu0 %v2430
        %2562 = vmatpush1.msra.mxu0 %v2429
        %2563 = vmatprep.subr.mxu0 %v2434
        %2564 = vmatpush1.msra.mxu0 %v2433
        %2565 = vmatprep.subr.mxu0 0.0
        %2566 = vmatpush1.msra.mxu0 0.0
        %2567 = vmatprep.subr.mxu0 0.0
        %2568 = vmatpush1.msra.mxu0 0.0
        %2569 = vmatprep.subr.mxu0 0.0
        %2570 = vmatpush1.msra.mxu0 0.0
        %2571 = vmatprep.subr.mxu0 0.0
        %2572 = vmatpush1.msra.mxu0 0.0
        %2573 = vmatprep.subr.mxu0 0.0
        %2574 = vmatpush1.msra.mxu0 0.0
        %2575 = vmatprep.subr.mxu0 0.0
        %2576 = vmatpush1.msra.mxu0 0.0
        %2577 = vmatprep.subr.mxu0 0.0
        %2578 = vmatpush1.msra.mxu0 0.0
        %2579 = vmatprep.subr.mxu0 0.0
        %2580 = vmatpush1.msra.mxu0 0.0
        %2581 = vmatprep.subr.mxu0 0.0
        %2582 = vmatpush1.msra.mxu0 0.0
        %2583 = vmatprep.subr.mxu0 0.0
        %2584 = vmatpush1.msra.mxu0 0.0
        %2585 = vmatprep.subr.mxu0 0.0
        %2586 = vmatpush1.msra.mxu0 0.0
        %2587 = vmatprep.subr.mxu0 0.0
        %2588 = vmatpush1.msra.mxu0 0.0
        %2589 = vmatprep.subr.mxu0 0.0
        %2590 = vmatpush1.msra.mxu0 0.0
        %2591 = vmatprep.subr.mxu0 0.0
        %2592 = vmatpush1.msra.mxu0 0.0
        %2593 = vmatprep.subr.mxu0 0.0
        %2594 = vmatpush1.msra.mxu0 0.0
        %2595 = vmatprep.subr.mxu0 0.0
        %2596 = vmatpush1.msra.mxu0 0.0
        %2597 = vmatprep.mubr.f32.mxu0 0.0
        %2598 = vmatmul.mubr.f32.gmra.mrb[0].mxu0 %v2368
        %v2599 = vpop.f32.mrb[0].mxu0
        %v2600 = vadd.f32 %v2447, %v2599
        %v2601 = vpop.f32.mrb[0].mxu0
        %v2602 = vadd.f32 %v2451, %v2601
        %2603 = vmatprep.mubr.f32.mxu0 0.0
        %2604 = vmatmul.mubr.f32.gmra.mrb[0].mxu0 %v2369
        %v2605 = vpop.f32.mrb[0].mxu0
        %v2606 = vadd.f32 %v2447, %v2605
        %v2607 = vpop.f32.mrb[0].mxu0
        %v2608 = vadd.f32 %v2451, %v2607
        %2609 = vdwg.mxu0
        %v2610 = vmul.f32 %v2523, 1.702
        %v2611 = vmul.f32 %v2525, 1.702
        %v2612 = vmul.f32 %v2600, 1.702
        %v2613 = vmul.f32 %v2602, 1.702
        %v2614 = vmul.f32 %v2529, 1.702
        %v2615 = vmul.f32 %v2531, 1.702
        %v2616 = vmul.f32 %v2606, 1.702
        %v2617 = vmul.f32 %v2608, 1.702
        %v2618 = vxor.u32 %v2610, 2147483648
        %v2619 = vxor.u32 %v2611, 2147483648
        %v2620 = vxor.u32 %v2612, 2147483648
        %v2621 = vxor.u32 %v2613, 2147483648
        %v2622 = vxor.u32 %v2614, 2147483648
        %v2623 = vxor.u32 %v2615, 2147483648
        %v2624 = vxor.u32 %v2616, 2147483648
        %v2625 = vxor.u32 %v2617, 2147483648
        %v2626 = vmul.f32 %v2618, 1.442695
        %v2627 = vpow.pop %v2626
        %v2628 = vmul.f32 %v2619, 1.442695
        %v2629 = vpow.pop %v2628
        %v2630 = vmul.f32 %v2620, 1.442695
        %v2631 = vpow.pop %v2630
        %v2632 = vmul.f32 %v2621, 1.442695
        %v2633 = vpow.pop %v2632
        %v2634 = vmul.f32 %v2622, 1.442695
        %v2635 = vpow.pop %v2634
        %v2636 = vmul.f32 %v2623, 1.442695
        %v2637 = vpow.pop %v2636
        %v2638 = vmul.f32 %v2624, 1.442695
        %v2639 = vpow.pop %v2638
        %v2640 = vmul.f32 %v2625, 1.442695
        %v2641 = vpow.pop %v2640
        %v2642 = vadd.f32 %v2627, 1.0
        %v2643 = vadd.f32 %v2629, 1.0
        %v2644 = vadd.f32 %v2631, 1.0
        %v2645 = vadd.f32 %v2633, 1.0
        %v2646 = vadd.f32 %v2635, 1.0
        %v2647 = vadd.f32 %v2637, 1.0
        %v2648 = vadd.f32 %v2639, 1.0
        %v2649 = vadd.f32 %v2641, 1.0
        %v2650 = vrcp.pop %v2642
        %v2651 = vmul.f32 1.0, %v2650
        %v2652 = vrcp.pop %v2643
        %v2653 = vmul.f32 1.0, %v2652
        %v2654 = vrcp.pop %v2644
        %v2655 = vmul.f32 1.0, %v2654
        %v2656 = vrcp.pop %v2645
        %v2657 = vmul.f32 1.0, %v2656
        %v2658 = vrcp.pop %v2646
        %v2659 = vmul.f32 1.0, %v2658
        %v2660 = vrcp.pop %v2647
        %v2661 = vmul.f32 1.0, %v2660
        %v2662 = vrcp.pop %v2648
        %v2663 = vmul.f32 1.0, %v2662
        %v2664 = vrcp.pop %v2649
        %v2665 = vmul.f32 1.0, %v2664
        %v2666 = vmul.f32 %v2523, %v2651
        %v2667 = vmul.f32 %v2525, %v2653
        %v2668 = vmul.f32 %v2600, %v2655
        %v2669 = vmul.f32 %v2602, %v2657
        %v2670 = vmul.f32 %v2529, %v2659
        %v2671 = vmul.f32 %v2531, %v2661
        %v2672 = vmul.f32 %v2606, %v2663
        %v2673 = vmul.f32 %v2608, %v2665
        %v2674 = vld [vmem:[#allocation21] sm:$0xff]
        %v2675 = vld [vmem:[#allocation21 + $0x8] sm:$0xff]
        %v2676 = vld [vmem:[#allocation21 + $0x10] sm:$0xff]
        %v2677 = vld [vmem:[#allocation21 + $0x18] sm:$0xff]
        %v2678 = vld [vmem:[#allocation21 + $0x20] sm:$0xff]
        %v2679 = vld [vmem:[#allocation21 + $0x28] sm:$0xff]
        %v2680 = vld [vmem:[#allocation21 + $0x30] sm:$0xff]
        %v2681 = vld [vmem:[#allocation21 + $0x38] sm:$0xff]
        %v2682 = vld [vmem:[#allocation21 + $0x40] sm:$0xff]
        %v2683 = vld [vmem:[#allocation21 + $0x48] sm:$0xff]
        %v2684 = vld [vmem:[#allocation21 + $0x50] sm:$0xff]
        %v2685 = vld [vmem:[#allocation21 + $0x58] sm:$0xff]
        %v2686 = vld [vmem:[#allocation21 + $0x60] sm:$0xff]
        %v2687 = vld [vmem:[#allocation21 + $0x68] sm:$0xff]
        %v2688 = vld [vmem:[#allocation21 + $0x70] sm:$0xff]
        %v2689 = vld [vmem:[#allocation21 + $0x78] sm:$0xff]
        %v2690 = vld [vmem:[#allocation21 + $0x80] sm:$0xff]
        %v2691 = vld [vmem:[#allocation21 + $0x88] sm:$0xff]
        %v2692 = vld [vmem:[#allocation21 + $0x90] sm:$0xff]
        %v2693 = vld [vmem:[#allocation21 + $0x98] sm:$0xff]
        %v2694 = vld [vmem:[#allocation21 + $0xa0] sm:$0xff]
        %v2695 = vld [vmem:[#allocation21 + $0xa8] sm:$0xff]
        %v2696 = vld [vmem:[#allocation21 + $0xb0] sm:$0xff]
        %v2697 = vld [vmem:[#allocation21 + $0xb8] sm:$0xff]
        %v2698 = vld [vmem:[#allocation21 + $0xc0] sm:$0xff]
        %v2699 = vld [vmem:[#allocation21 + $0xc8] sm:$0xff]
        %v2700 = vld [vmem:[#allocation21 + $0xd0] sm:$0xff]
        %v2701 = vld [vmem:[#allocation21 + $0xd8] sm:$0xff]
        %v2702 = vld [vmem:[#allocation21 + $0xe0] sm:$0xff]
        %v2703 = vld [vmem:[#allocation21 + $0xe8] sm:$0xff]
        %v2704 = vld [vmem:[#allocation21 + $0xf0] sm:$0xff]
        %v2705 = vld [vmem:[#allocation21 + $0xf8] sm:$0xff]
        %v2706 = vld [vmem:[#allocation21 + $0x100] sm:$0xff]
        %v2707 = vld [vmem:[#allocation21 + $0x108] sm:$0xff]
        %v2708 = vld [vmem:[#allocation21 + $0x110] sm:$0xff]
        %v2709 = vld [vmem:[#allocation21 + $0x118] sm:$0xff]
        %v2710 = vld [vmem:[#allocation21 + $0x120] sm:$0xff]
        %v2711 = vld [vmem:[#allocation21 + $0x128] sm:$0xff]
        %v2712 = vld [vmem:[#allocation21 + $0x130] sm:$0xff]
        %v2713 = vld [vmem:[#allocation21 + $0x138] sm:$0xff]
        %v2714 = vld [vmem:[#allocation21 + $0x140] sm:$0xff]
        %v2715 = vld [vmem:[#allocation21 + $0x148] sm:$0xff]
        %v2716 = vld [vmem:[#allocation21 + $0x150] sm:$0xff]
        %v2717 = vld [vmem:[#allocation21 + $0x158] sm:$0xff]
        %v2718 = vld [vmem:[#allocation21 + $0x160] sm:$0xff]
        %v2719 = vld [vmem:[#allocation21 + $0x168] sm:$0xff]
        %v2720 = vld [vmem:[#allocation21 + $0x170] sm:$0xff]
        %v2721 = vld [vmem:[#allocation21 + $0x178] sm:$0xff]
        %v2722 = vld [vmem:[#allocation21 + $0x180] sm:$0xff]
        %v2723 = vld [vmem:[#allocation21 + $0x188] sm:$0xff]
        %v2724 = vld [vmem:[#allocation21 + $0x190] sm:$0xff]
        %v2725 = vld [vmem:[#allocation21 + $0x198] sm:$0xff]
        %v2726 = vld [vmem:[#allocation21 + $0x1a0] sm:$0xff]
        %v2727 = vld [vmem:[#allocation21 + $0x1a8] sm:$0xff]
        %v2728 = vld [vmem:[#allocation21 + $0x1b0] sm:$0xff]
        %v2729 = vld [vmem:[#allocation21 + $0x1b8] sm:$0xff]
        %v2730 = vld [vmem:[#allocation21 + $0x1c0] sm:$0xff]
        %v2731 = vld [vmem:[#allocation21 + $0x1c8] sm:$0xff]
        %v2732 = vld [vmem:[#allocation21 + $0x1d0] sm:$0xff]
        %v2733 = vld [vmem:[#allocation21 + $0x1d8] sm:$0xff]
        %v2734 = vld [vmem:[#allocation21 + $0x1e0] sm:$0xff]
        %v2735 = vld [vmem:[#allocation21 + $0x1e8] sm:$0xff]
        %v2736 = vld [vmem:[#allocation21 + $0x1f0] sm:$0xff]
        %v2737 = vld [vmem:[#allocation21 + $0x1f8] sm:$0xff]
        %v2738 = vld [vmem:[#allocation23] sm:$0x1]
        %v2740 = vlaneseq
        %v2741 = vshrl.u32 %v2740, 7
        %v2742 = vsub.s32 0, %v2741
        %v2743 = vrot.slane %v2738, %v2742
        %2745 = vmatprep.subr.mxu0 0.0
        %2746 = vmatpush1.msra.mxu0 %v2674
        %2747 = vmatprep.subr.mxu0 0.0
        %2748 = vmatpush1.msra.mxu0 %v2675
        %2749 = vmatprep.subr.mxu0 0.0
        %2750 = vmatpush1.msra.mxu0 %v2676
        %2751 = vmatprep.subr.mxu0 0.0
        %2752 = vmatpush1.msra.mxu0 %v2677
        %2753 = vmatprep.subr.mxu0 0.0
        %2754 = vmatpush1.msra.mxu0 %v2678
        %2755 = vmatprep.subr.mxu0 0.0
        %2756 = vmatpush1.msra.mxu0 %v2679
        %2757 = vmatprep.subr.mxu0 0.0
        %2758 = vmatpush1.msra.mxu0 %v2680
        %2759 = vmatprep.subr.mxu0 0.0
        %2760 = vmatpush1.msra.mxu0 %v2681
        %2761 = vmatprep.subr.mxu0 0.0
        %2762 = vmatpush1.msra.mxu0 %v2682
        %2763 = vmatprep.subr.mxu0 0.0
        %2764 = vmatpush1.msra.mxu0 %v2683
        %2765 = vmatprep.subr.mxu0 0.0
        %2766 = vmatpush1.msra.mxu0 %v2684
        %2767 = vmatprep.subr.mxu0 0.0
        %2768 = vmatpush1.msra.mxu0 %v2685
        %2769 = vmatprep.subr.mxu0 0.0
        %2770 = vmatpush1.msra.mxu0 %v2686
        %2771 = vmatprep.subr.mxu0 0.0
        %2772 = vmatpush1.msra.mxu0 %v2687
        %2773 = vmatprep.subr.mxu0 0.0
        %2774 = vmatpush1.msra.mxu0 %v2688
        %2775 = vmatprep.subr.mxu0 0.0
        %2776 = vmatpush1.msra.mxu0 %v2689
        %2777 = vmatprep.subr.mxu0 0.0
        %2778 = vmatpush1.msra.mxu0 %v2690
        %2779 = vmatprep.subr.mxu0 0.0
        %2780 = vmatpush1.msra.mxu0 %v2691
        %2781 = vmatprep.subr.mxu0 0.0
        %2782 = vmatpush1.msra.mxu0 %v2692
        %2783 = vmatprep.subr.mxu0 0.0
        %2784 = vmatpush1.msra.mxu0 %v2693
        %2785 = vmatprep.subr.mxu0 0.0
        %2786 = vmatpush1.msra.mxu0 %v2694
        %2787 = vmatprep.subr.mxu0 0.0
        %2788 = vmatpush1.msra.mxu0 %v2695
        %2789 = vmatprep.subr.mxu0 0.0
        %2790 = vmatpush1.msra.mxu0 %v2696
        %2791 = vmatprep.subr.mxu0 0.0
        %2792 = vmatpush1.msra.mxu0 %v2697
        %2793 = vmatprep.subr.mxu0 0.0
        %2794 = vmatpush1.msra.mxu0 %v2698
        %2795 = vmatprep.subr.mxu0 0.0
        %2796 = vmatpush1.msra.mxu0 %v2699
        %2797 = vmatprep.subr.mxu0 0.0
        %2798 = vmatpush1.msra.mxu0 %v2700
        %2799 = vmatprep.subr.mxu0 0.0
        %2800 = vmatpush1.msra.mxu0 %v2701
        %2801 = vmatprep.subr.mxu0 0.0
        %2802 = vmatpush1.msra.mxu0 %v2702
        %2803 = vmatprep.subr.mxu0 0.0
        %2804 = vmatpush1.msra.mxu0 %v2703
        %2805 = vmatprep.subr.mxu0 0.0
        %2806 = vmatpush1.msra.mxu0 %v2704
        %2807 = vmatprep.subr.mxu0 0.0
        %2808 = vmatpush1.msra.mxu0 %v2705
        %2809 = vmatprep.mubr.f32.mxu0 %v2667
        %2810 = vmatmul.mubr.f32.gmra.mrb[0].mxu0 %v2666
        %v2811 = vpop.f32.mrb[0].mxu0
        %v2812 = vadd.f32 %v2743, %v2811
        %v2813 = vpop.f32.mrb[0].mxu0
        %2814 = vmatprep.mubr.f32.mxu0 %v2671
        %2815 = vmatmul.mubr.f32.gmra.mrb[0].mxu0 %v2670
        %v2816 = vpop.f32.mrb[0].mxu0
        %v2817 = vadd.f32 %v2743, %v2816
        %v2818 = vpop.f32.mrb[0].mxu0
        %2819 = vdwg.mxu0
        %2820 = vmatprep.subr.mxu0 0.0
        %2821 = vmatpush1.msra.mxu0 %v2706
        %2822 = vmatprep.subr.mxu0 0.0
        %2823 = vmatpush1.msra.mxu0 %v2707
        %2824 = vmatprep.subr.mxu0 0.0
        %2825 = vmatpush1.msra.mxu0 %v2708
        %2826 = vmatprep.subr.mxu0 0.0
        %2827 = vmatpush1.msra.mxu0 %v2709
        %2828 = vmatprep.subr.mxu0 0.0
        %2829 = vmatpush1.msra.mxu0 %v2710
        %2830 = vmatprep.subr.mxu0 0.0
        %2831 = vmatpush1.msra.mxu0 %v2711
        %2832 = vmatprep.subr.mxu0 0.0
        %2833 = vmatpush1.msra.mxu0 %v2712
        %2834 = vmatprep.subr.mxu0 0.0
        %2835 = vmatpush1.msra.mxu0 %v2713
        %2836 = vmatprep.subr.mxu0 0.0
        %2837 = vmatpush1.msra.mxu0 %v2714
        %2838 = vmatprep.subr.mxu0 0.0
        %2839 = vmatpush1.msra.mxu0 %v2715
        %2840 = vmatprep.subr.mxu0 0.0
        %2841 = vmatpush1.msra.mxu0 %v2716
        %2842 = vmatprep.subr.mxu0 0.0
        %2843 = vmatpush1.msra.mxu0 %v2717
        %2844 = vmatprep.subr.mxu0 0.0
        %2845 = vmatpush1.msra.mxu0 %v2718
        %2846 = vmatprep.subr.mxu0 0.0
        %2847 = vmatpush1.msra.mxu0 %v2719
        %2848 = vmatprep.subr.mxu0 0.0
        %2849 = vmatpush1.msra.mxu0 %v2720
        %2850 = vmatprep.subr.mxu0 0.0
        %2851 = vmatpush1.msra.mxu0 %v2721
        %2852 = vmatprep.subr.mxu0 0.0
        %2853 = vmatpush1.msra.mxu0 %v2722
        %2854 = vmatprep.subr.mxu0 0.0
        %2855 = vmatpush1.msra.mxu0 %v2723
        %2856 = vmatprep.subr.mxu0 0.0
        %2857 = vmatpush1.msra.mxu0 %v2724
        %2858 = vmatprep.subr.mxu0 0.0
        %2859 = vmatpush1.msra.mxu0 %v2725
        %2860 = vmatprep.subr.mxu0 0.0
        %2861 = vmatpush1.msra.mxu0 %v2726
        %2862 = vmatprep.subr.mxu0 0.0
        %2863 = vmatpush1.msra.mxu0 %v2727
        %2864 = vmatprep.subr.mxu0 0.0
        %2865 = vmatpush1.msra.mxu0 %v2728
        %2866 = vmatprep.subr.mxu0 0.0
        %2867 = vmatpush1.msra.mxu0 %v2729
        %2868 = vmatprep.subr.mxu0 0.0
        %2869 = vmatpush1.msra.mxu0 %v2730
        %2870 = vmatprep.subr.mxu0 0.0
        %2871 = vmatpush1.msra.mxu0 %v2731
        %2872 = vmatprep.subr.mxu0 0.0
        %2873 = vmatpush1.msra.mxu0 %v2732
        %2874 = vmatprep.subr.mxu0 0.0
        %2875 = vmatpush1.msra.mxu0 %v2733
        %2876 = vmatprep.subr.mxu0 0.0
        %2877 = vmatpush1.msra.mxu0 %v2734
        %2878 = vmatprep.subr.mxu0 0.0
        %2879 = vmatpush1.msra.mxu0 %v2735
        %2880 = vmatprep.subr.mxu0 0.0
        %2881 = vmatpush1.msra.mxu0 %v2736
        %2882 = vmatprep.subr.mxu0 0.0
        %2883 = vmatpush1.msra.mxu0 %v2737
        %2884 = vmatprep.mubr.f32.mxu0 %v2669
        %2885 = vmatmul.mubr.f32.gmra.mrb[0].mxu0 %v2668
        %v2886 = vpop.f32.mrb[0].mxu0
        %v2887 = vadd.f32 %v2812, %v2886
        %v2888 = vpop.f32.mrb[0].mxu0
        %2889 = vmatprep.mubr.f32.mxu0 %v2673
        %2890 = vmatmul.mubr.f32.gmra.mrb[0].mxu0 %v2672
        %v2891 = vpop.f32.mrb[0].mxu0
        %v2892 = vadd.f32 %v2817, %v2891
        %v2893 = vpop.f32.mrb[0].mxu0
        %2894 = vdwg.mxu0
        %v2895 = vadd.f32 %v2328, %v2887
        %v2896 = vadd.f32 %v2329, %v2892
        %2897 = vst [vmem:[%s616] sm:$0xff] %v2895
        %2898 = vst [vmem:[%s616 + $0x8] sm:$0xff] %v2896
        %s2899 = sand.u32 %s322, 1
        %s2900 = scalar_lea.sflag [#allocation5], %s2899
        %s2901 = sand.u32 %s322, 1
        %s2902 = smul.addr %s2901, 16
        %s2903 = scalar_lea.vmem [#allocation24], %s2902
        // Predicated region
        $region125: #{tpu_custom_call.1} parent=71 // pred_check
          %p2904 = pneg %p332
        $region126: #{tpu_custom_call.1} parent=71 // pred_check_branch
          %2906 = sbr.rel (%p2904) target = $region128
        $region127: #{tpu_custom_call.1} parent=71 // pred_region
          %s2907 = smul.u32 2, %s36
          %s2909 = ssub.s32 256, 256
          %2910 = vsyncadd %s2900, %s2909
          %s2911 = smul.addr %s2907, 128
          %s2912 = scalar_lea.hbm %s13, %s2911
          %s2913 = sshll.u32 %s2903, 4
          %s2914 = int_to_ptr.vmem [resolvable:$true] %s2913
          %2919 = dma.vmem_to_hbm [thread:$0]  %s2914, 256, %s2912, %s2900, 128, 128, 8
        $region128: #{tpu_custom_call.1} parent=71 // pred_fallthru
          _
      $region72: #{tpu_custom_call.1} parent=5 // pred_fallthru
        _
      %p2920 = scmp.le.s32.totalorder 2, %s31
      // Predicated region
      $region129: #{tpu_custom_call.1} parent=5 // pred_check
        %p2921 = pneg %p2920
      $region130: #{tpu_custom_call.1} parent=5 // pred_check_branch
        %2923 = sbr.rel (%p2921) target = $region132
      $region131: #{tpu_custom_call.1} parent=5 // pred_region
        %s2924 = ssub.s32 %s31, 2
        // Predicated region
        $region133: #{tpu_custom_call.1} parent=131 // pred_check
          %p2925 = pneg %p338
        $region134: #{tpu_custom_call.1} parent=131 // pred_check_branch
          %2927 = sbr.rel (%p2925) target = $region136
        $region135: #{tpu_custom_call.1} parent=131 // pred_region
          %s2928 = sand.u32 %s323, 1
          %s2929 = scalar_lea.sflag [#allocation5], %s2928
          %s2930 = sand.u32 %s323, 1
          %s2931 = smul.addr %s2930, 16
          %s2932 = scalar_lea.vmem [#allocation24], %s2931
          %2933 = dma.done %s2929, 256
        $region136: #{tpu_custom_call.1} parent=131 // pred_fallthru
          _
      $region132: #{tpu_custom_call.1} parent=5 // pred_fallthru
        _
    $region6: #{tpu_custom_call.1} parent=1 // loop_footer
      %s35 = sadd.s32 1, %s31
    $region7: #{tpu_custom_call.1} parent=1 // loop_footer_branch
      %30 = sbr.rel target = $region3
    $region8: #{tpu_custom_call.1} parent=1 // loop_exit
      _
    %2934 = vsyncpa [#allocation4], 1
    %s2935 = scalar_lea.sflag [#allocation4], 1
    %2936 = vsyncpa %s2935, 1
    %2937 = vsyncpa [#allocation7], 1
    %2938 = vsyncpa [#allocation10], 1
    %2939 = vsyncpa [#allocation13], 1
    %2940 = vsyncpa [#allocation16], 1
    %2941 = vsyncpa [#allocation19], 1
    %2942 = vsyncpa [#allocation22], 1
    %2943 = vsyncpa [#allocation5], 1
    %s2944 = scalar_lea.sflag [#allocation5], 1
    %2945 = vsyncpa %s2944, 1

</llo_original>
